<compile_context>
chip_gen: v7x
topology: tpu7x:2x2x1
jax: 0.10.0
libtpu: 0.0.40
codegen_flags: <defaults>
</compile_context>

<pallas_src>
import functools

import jax
import jax.numpy as jnp
from jax.experimental import pallas as pl
from jax.experimental.pallas import tpu as pltpu


# ----------------------------- in-kernel helpers -----------------------------

def _layernorm(x, g, b, eps=1e-5):
    # PyTorch nn.LayerNorm: biased variance over the last dim (f32 math).
    mu = jnp.mean(x, axis=-1, keepdims=True)
    var = jnp.mean(jnp.square(x - mu), axis=-1, keepdims=True)
    return (x - mu) * jax.lax.rsqrt(var + eps) * g + b


def _gelu(x):
    # TODO(synk): PyTorch nn.GELU() defaults to the exact erf form; erf has no
    # guaranteed Mosaic lowering, so the tanh approximation is used (~1e-3 dev).
    c = 0.7978845608028654  # sqrt(2/pi)
    return 0.5 * x * (1.0 + jnp.tanh(c * (x + 0.044715 * x * x * x)))


# --------------------------------- fused kernel -------------------------------

def vit_kernel(patches_ref, w_patch_ref, emb_add_ref,
               ln1g_ref, ln1b_ref, wqkv_ref, wo_ref, bo_ref,
               ln2g_ref, ln2b_ref, w1_ref, b1_ref, w2_ref, b2_ref,
               hg_ref, hb_ref, wh_ref, bh_ref,
               logits_ref, x_scratch,
               *, heads, n_real, pool):
    d = pl.program_id(1)
    d_last = pl.num_programs(1) - 1
    n_pad, dim = x_scratch.shape
    bf16 = jnp.bfloat16
    mask_value = float(jnp.finfo(jnp.float32).min)

    # ---- patch embedding + cls token + positional embedding (first layer) ----
    @pl.when(d == 0)
    def _():
        # patches row 0 and pad rows are zero; emb_add carries cls+pos / pos+bias.
        pe = jnp.dot(patches_ref[0], w_patch_ref[...],
                     preferred_element_type=jnp.float32)      # (n_pad, dim) f32
        x_scratch[...] = pe + emb_add_ref[...]

    x = x_scratch[...]                                          # (n_pad, dim) f32

    # ---- Residual(PreNorm(Attention)) ----
    h1 = _layernorm(x, ln1g_ref[0], ln1b_ref[0]).astype(bf16)   # (n_pad, dim)
    h1b = jnp.broadcast_to(h1[None], (3 * heads, n_pad, dim))
    qkv = jnp.einsum('hnd,hde->hne', h1b, wqkv_ref[0],
                     preferred_element_type=jnp.float32)        # (3h, n, dh)
    q = qkv[:heads].astype(bf16)            # attention scale pre-folded into wq
    k = qkv[heads:2 * heads].astype(bf16)
    v = qkv[2 * heads:].astype(bf16)

    dots = jnp.einsum('hne,hme->hnm', q, k,
                      preferred_element_type=jnp.float32)       # (h, n, n)
    key_mask = jax.lax.broadcasted_iota(jnp.int32, (n_pad, n_pad), 1) < n_real
    dots = jnp.where(key_mask[None], dots, mask_value)
    dots = dots - jnp.max(dots, axis=-1, keepdims=True)
    e = jnp.exp(dots)
    attn = e * pl.reciprocal(jnp.sum(e, axis=-1, keepdims=True), approx=True)

    ctx = jnp.einsum('hnm,hme->hne', attn.astype(bf16), v,
                     preferred_element_type=jnp.float32)        # (h, n, dh)
    per_head = jnp.einsum('hne,hed->hnd', ctx.astype(bf16), wo_ref[0],
                          preferred_element_type=jnp.float32)   # (h, n, dim)
    x = x + jnp.sum(per_head, axis=0) + bo_ref[0]

    # ---- Residual(PreNorm(FeedForward)) ----
    h2 = _layernorm(x, ln2g_ref[0], ln2b_ref[0]).astype(bf16)
    ff = jnp.dot(h2, w1_ref[0], preferred_element_type=jnp.float32) + b1_ref[0]
    ff = _gelu(ff).astype(bf16)
    ff = jnp.dot(ff, w2_ref[0], preferred_element_type=jnp.float32) + b2_ref[0]
    x = x + ff

    x_scratch[...] = x

    # ---- classification head (last layer only) ----
    @pl.when(d == d_last)
    def _():
        if pool == "mean":
            pooled = jnp.sum(x[:n_real, :], axis=0, keepdims=True) * (1.0 / n_real)
        else:
            pooled = x[0:1, :]                                   # cls token
        hh = _layernorm(pooled, hg_ref[...], hb_ref[...]).astype(bf16)
        lg = jnp.dot(hh, wh_ref[...],
                     preferred_element_type=jnp.float32) + bh_ref[...]  # (1, 128)
        logits_ref[...] = lg[None]


# --------------------------------- wrapper ------------------------------------

def _const_spec(shape):
    nd = len(shape)
    return pl.BlockSpec(tuple(shape), lambda i, d: (0,) * nd)


def _layer_spec(shape):
    nd = len(shape)
    return pl.BlockSpec((1,) + tuple(shape[1:]),
                        lambda i, d: (d,) + (0,) * (nd - 1))


def vit_forward(img, params, *, patch_size, num_classes, pool="cls"):
    b, c, H, W = img.shape
    p = patch_size
    hh, ww = H // p, W // p
    num_patches = hh * ww
    patch_dim = c * p * p
    dim = params["w_patch"].shape[1]
    depth = params["wqkv"].shape[0]
    heads = params["w_out"].shape[1]
    dim_head = params["w_out"].shape[2]
    mlp_dim = params["w1"].shape[2]
    nc_pad = params["w_head"].shape[1]
    n_real = num_patches + 1
    n_pad = ((n_real + 7) // 8) * 8

    # rearrange 'b c (h p1) (w p2) -> b (h w) (p1 p2 c)'
    x = img.reshape(b, c, hh, p, ww, p).transpose(0, 2, 4, 3, 5, 1)
    x = x.reshape(b, num_patches, patch_dim)
    # row 0 reserved for the cls token; trailing rows pad the sequence to 8k.
    patches = jnp.pad(x, ((0, 0), (1, n_pad - n_real), (0, 0))).astype(jnp.bfloat16)

    # cls token + positional embedding + patch-embed bias, pre-combined & padded.
    row0 = params["cls_token"][0] + params["pos_embedding"][0, :1]
    rows = params["pos_embedding"][0, 1:n_real] + params["b_patch"]
    emb_add = jnp.concatenate(
        [row0, rows, jnp.zeros((n_pad - n_real, dim), jnp.float32)], axis=0)

    kernel = functools.partial(vit_kernel, heads=heads, n_real=n_real, pool=pool)

    in_specs = [
        pl.BlockSpec((1, n_pad, patch_dim), lambda i, d: (i, 0, 0)),  # patches
        _const_spec((patch_dim, dim)),                                # w_patch
        _const_spec((n_pad, dim)),                                    # emb_add
        _layer_spec((depth, 1, dim)),                                 # ln1 gamma
        _layer_spec((depth, 1, dim)),                                 # ln1 beta
        _layer_spec((depth, 3 * heads, dim, dim_head)),               # wqkv
        _layer_spec((depth, heads, dim_head, dim)),                   # w_out
        _layer_spec((depth, 1, dim)),                                 # b_out
        _layer_spec((depth, 1, dim)),                                 # ln2 gamma
        _layer_spec((depth, 1, dim)),                                 # ln2 beta
        _layer_spec((depth, dim, mlp_dim)),                           # w1
        _layer_spec((depth, 1, mlp_dim)),                             # b1
        _layer_spec((depth, mlp_dim, dim)),                           # w2
        _layer_spec((depth, 1, dim)),                                 # b2
        _const_spec((1, dim)),                                        # head gamma
        _const_spec((1, dim)),                                        # head beta
        _const_spec((dim, nc_pad)),                                   # w_head
        _const_spec((1, nc_pad)),                                     # b_head
    ]

    out = pl.pallas_call(
        kernel,
        out_shape=jax.ShapeDtypeStruct((b, 1, nc_pad), jnp.float32),
        grid=(b, depth),
        in_specs=in_specs,
        out_specs=pl.BlockSpec((1, 1, nc_pad), lambda i, d: (i, 0, 0)),
        scratch_shapes=[pltpu.VMEM((n_pad, dim), jnp.float32)],
        compiler_params=pltpu.CompilerParams(
            dimension_semantics=("parallel", "arbitrary")),
    )(patches, params["w_patch"], emb_add,
      params["ln1_g"], params["ln1_b"], params["wqkv"], params["w_out"],
      params["b_out"], params["ln2_g"], params["ln2_b"],
      params["w1"], params["b1"], params["w2"], params["b2"],
      params["head_gamma"], params["head_beta"],
      params["w_head"], params["b_head"])

    return out[:, 0, :num_classes]


# ------------------------------ parameter setup -------------------------------

def init_vit_params(key, *, image_size, patch_size, num_classes, dim, depth,
                    heads, dim_head, mlp_dim, channels):
    num_patches = (image_size // patch_size) ** 2
    patch_dim = channels * patch_size ** 2
    scale = float(dim_head) ** -0.5
    nc_pad = ((num_classes + 127) // 128) * 128
    keys = jax.random.split(key, 4 + depth * 4)
    f32, bf16 = jnp.float32, jnp.bfloat16

    def nrm(k, shape, s=0.02):
        return (s * jax.random.normal(k, shape)).astype(f32)

    wqkv, wo, w1, w2 = [], [], [], []
    kidx = 4
    for _ in range(depth):
        w = nrm(keys[kidx + 0], (3, heads, dim, dim_head))
        w = w.at[0].multiply(scale)              # fold attention scale into Q
        wqkv.append(w.reshape(3 * heads, dim, dim_head))
        wo.append(nrm(keys[kidx + 1], (heads, dim_head, dim)))
        w1.append(nrm(keys[kidx + 2], (dim, mlp_dim)))
        w2.append(nrm(keys[kidx + 3], (mlp_dim, dim)))
        kidx += 4

    return {
        "pos_embedding": jax.random.normal(keys[0], (1, num_patches + 1, dim), f32),
        "cls_token": jax.random.normal(keys[1], (1, 1, dim), f32),
        "w_patch": nrm(keys[2], (patch_dim, dim)).astype(bf16),
        "b_patch": jnp.zeros((1, dim), f32),
        "ln1_g": jnp.ones((depth, 1, dim), f32),
        "ln1_b": jnp.zeros((depth, 1, dim), f32),
        "wqkv": jnp.stack(wqkv).astype(bf16),    # (depth, 3*heads, dim, dh)
        "w_out": jnp.stack(wo).astype(bf16),     # (depth, heads, dh, dim)
        "b_out": jnp.zeros((depth, 1, dim), f32),
        "ln2_g": jnp.ones((depth, 1, dim), f32),
        "ln2_b": jnp.zeros((depth, 1, dim), f32),
        "w1": jnp.stack(w1).astype(bf16),
        "b1": jnp.zeros((depth, 1, mlp_dim), f32),
        "w2": jnp.stack(w2).astype(bf16),
        "b2": jnp.zeros((depth, 1, dim), f32),
        "head_gamma": jnp.ones((1, dim), f32),
        "head_beta": jnp.zeros((1, dim), f32),
        "w_head": jnp.pad(nrm(keys[3], (dim, num_classes)),
                          ((0, 0), (0, nc_pad - num_classes))).astype(bf16),
        "b_head": jnp.zeros((1, nc_pad), f32),
    }


# ----------------------------------- main --------------------------------------

if __name__ == "__main__":
    image_size = 16
    patch_size = 4          # num_patches = 16 > MIN_NUM_PATCHES (6)
    channels = 4
    num_classes = 10
    dim = 32
    depth = 2
    heads = 4
    dim_head = 8
    mlp_dim = 64
    batch = 2

    key = jax.random.PRNGKey(0)
    k_img, k_par = jax.random.split(key)
    img = jax.random.normal(k_img, (batch, channels, image_size, image_size),
                            dtype=jnp.float32)
    params = init_vit_params(k_par, image_size=image_size, patch_size=patch_size,
                             num_classes=num_classes, dim=dim, depth=depth,
                             heads=heads, dim_head=dim_head, mlp_dim=mlp_dim,
                             channels=channels)

    fwd = jax.jit(functools.partial(vit_forward, patch_size=patch_size,
                                    num_classes=num_classes, pool="cls"))
    logits = fwd(img, params)
    jax.block_until_ready(logits)
    assert logits.shape == (batch, num_classes)
    print("KERNEL_OK")
</pallas_src>

<mosaic_0001>
module attributes {stable_mosaic.version = 11 : i64} {
  func.func @vit_kernel(%arg0: i32, %arg1: i32, %arg2: memref<1x24x64xbf16, #tpu.memory_space<vmem>>, %arg3: memref<64x32xbf16, #tpu.memory_space<vmem>>, %arg4: memref<24x32xf32, #tpu.memory_space<vmem>>, %arg5: memref<1x1x32xf32, #tpu.memory_space<vmem>>, %arg6: memref<1x1x32xf32, #tpu.memory_space<vmem>>, %arg7: memref<1x12x32x8xbf16, #tpu.memory_space<vmem>>, %arg8: memref<1x4x8x32xbf16, #tpu.memory_space<vmem>>, %arg9: memref<1x1x32xf32, #tpu.memory_space<vmem>>, %arg10: memref<1x1x32xf32, #tpu.memory_space<vmem>>, %arg11: memref<1x1x32xf32, #tpu.memory_space<vmem>>, %arg12: memref<1x32x64xbf16, #tpu.memory_space<vmem>>, %arg13: memref<1x1x64xf32, #tpu.memory_space<vmem>>, %arg14: memref<1x64x32xbf16, #tpu.memory_space<vmem>>, %arg15: memref<1x1x32xf32, #tpu.memory_space<vmem>>, %arg16: memref<1x32xf32, #tpu.memory_space<vmem>>, %arg17: memref<1x32xf32, #tpu.memory_space<vmem>>, %arg18: memref<32x128xbf16, #tpu.memory_space<vmem>>, %arg19: memref<1x128xf32, #tpu.memory_space<vmem>>, %arg20: memref<1x1x128xf32, #tpu.memory_space<vmem>>, %arg21: memref<24x32xf32, #tpu.memory_space<vmem>>) attributes {dimension_semantics = [#tpu.dimension_semantics<parallel>, #tpu.dimension_semantics<arbitrary>], iteration_bounds = array<i64: 2, 2>, scalar_prefetch = 0 : i64, scratch_operands = 1 : i64, tpu.core_type = #tpu.core_type<tc>, window_params = [{transform_indices = @transform_0, window_bounds = array<i64: 1, 24, 64>}, {pipeline_mode = #tpu.pipeline_mode<synchronous>, transform_indices = @transform_1, window_bounds = array<i64: 64, 32>}, {pipeline_mode = #tpu.pipeline_mode<synchronous>, transform_indices = @transform_2, window_bounds = array<i64: 24, 32>}, {transform_indices = @transform_3, window_bounds = array<i64: 1, 1, 32>}, {transform_indices = @transform_4, window_bounds = array<i64: 1, 1, 32>}, {transform_indices = @transform_5, window_bounds = array<i64: 1, 12, 32, 8>}, {transform_indices = @transform_6, window_bounds = array<i64: 1, 4, 8, 32>}, {transform_indices = @transform_7, window_bounds = array<i64: 1, 1, 32>}, {transform_indices = @transform_8, window_bounds = array<i64: 1, 1, 32>}, {transform_indices = @transform_9, window_bounds = array<i64: 1, 1, 32>}, {transform_indices = @transform_10, window_bounds = array<i64: 1, 32, 64>}, {transform_indices = @transform_11, window_bounds = array<i64: 1, 1, 64>}, {transform_indices = @transform_12, window_bounds = array<i64: 1, 64, 32>}, {transform_indices = @transform_13, window_bounds = array<i64: 1, 1, 32>}, {pipeline_mode = #tpu.pipeline_mode<synchronous>, transform_indices = @transform_14, window_bounds = array<i64: 1, 32>}, {pipeline_mode = #tpu.pipeline_mode<synchronous>, transform_indices = @transform_15, window_bounds = array<i64: 1, 32>}, {pipeline_mode = #tpu.pipeline_mode<synchronous>, transform_indices = @transform_16, window_bounds = array<i64: 32, 128>}, {pipeline_mode = #tpu.pipeline_mode<synchronous>, transform_indices = @transform_17, window_bounds = array<i64: 1, 128>}, {transform_indices = @transform_18, window_bounds = array<i64: 1, 1, 128>}]} {
    %c0_i32 = arith.constant 0 : i32
    %0 = arith.cmpi eq, %arg1, %c0_i32 : i32
    %1 = arith.extui %0 : i1 to i32
    %c0_i32_0 = arith.constant 0 : i32
    %2 = arith.cmpi ne, %1, %c0_i32_0 : i32
    scf.if %2 {
      %c0_63 = arith.constant 0 : index
      %c0_64 = arith.constant 0 : index
      %c0_65 = arith.constant 0 : index
      %134 = vector.load %arg2[%c0_63, %c0_64, %c0_65] : memref<1x24x64xbf16, #tpu.memory_space<vmem>>, vector<1x24x64xbf16>
      %135 = vector.shape_cast %134 : vector<1x24x64xbf16> to vector<24x64xbf16>
      %c0_66 = arith.constant 0 : index
      %c0_67 = arith.constant 0 : index
      %136 = vector.load %arg3[%c0_66, %c0_67] : memref<64x32xbf16, #tpu.memory_space<vmem>>, vector<64x32xbf16>
      %cst_68 = arith.constant dense<0.000000e+00> : vector<24x32xf32>
      %137 = tpu.matmul %135, %136, %cst_68 {dimension_numbers = #tpu.dot_dimension_numbers<[1], [0], [0], [1], [0, 0, 1, 1], [], []>} : vector<24x64xbf16>, vector<64x32xbf16>, vector<24x32xf32> -> vector<24x32xf32>
      %c0_69 = arith.constant 0 : index
      %c0_70 = arith.constant 0 : index
      %138 = vector.load %arg4[%c0_69, %c0_70] : memref<24x32xf32, #tpu.memory_space<vmem>>, vector<24x32xf32>
      %139 = arith.addf %137, %138 : vector<24x32xf32>
      %c0_71 = arith.constant 0 : index
      %c0_72 = arith.constant 0 : index
      %140 = vector.load %arg21[%c0_71, %c0_72] : memref<24x32xf32, #tpu.memory_space<vmem>>, vector<24x32xf32>
      tpu.vector_store %arg21[%c0_71, %c0_72], %139 {strides = array<i32>} : memref<24x32xf32, #tpu.memory_space<vmem>>, vector<24x32xf32>,
    } else {
    }
    %c0 = arith.constant 0 : index
    %c0_1 = arith.constant 0 : index
    %3 = vector.load %arg21[%c0, %c0_1] : memref<24x32xf32, #tpu.memory_space<vmem>>, vector<24x32xf32>
    %c0_2 = arith.constant 0 : index
    %c0_3 = arith.constant 0 : index
    %c0_4 = arith.constant 0 : index
    %4 = vector.load %arg5[%c0_2, %c0_3, %c0_4] : memref<1x1x32xf32, #tpu.memory_space<vmem>>, vector<1x1x32xf32>
    %5 = vector.shape_cast %4 : vector<1x1x32xf32> to vector<1x32xf32>
    %c0_5 = arith.constant 0 : index
    %c0_6 = arith.constant 0 : index
    %c0_7 = arith.constant 0 : index
    %6 = vector.load %arg6[%c0_5, %c0_6, %c0_7] : memref<1x1x32xf32, #tpu.memory_space<vmem>>, vector<1x1x32xf32>
    %7 = vector.shape_cast %6 : vector<1x1x32xf32> to vector<1x32xf32>
    %cst = arith.constant dense<0.000000e+00> : vector<24xf32>
    %8 = vector.multi_reduction <add>, %3, %cst [1] : vector<24x32xf32> to vector<24xf32>
    %9 = vector.shape_cast %8 : vector<24xf32> to vector<24x1xf32>
    %cst_8 = arith.constant 3.200000e+01 : f32
    %10 = vector.broadcast %cst_8 : f32 to vector<24x1xf32>
    %11 = arith.divf %9, %10 : vector<24x1xf32>
    %12 = vector.broadcast %11 : vector<24x1xf32> to vector<24x32xf32>
    %13 = arith.subf %3, %12 : vector<24x32xf32>
    %14 = arith.mulf %13, %13 : vector<24x32xf32>
    %cst_9 = arith.constant dense<0.000000e+00> : vector<24xf32>
    %15 = vector.multi_reduction <add>, %14, %cst_9 [1] : vector<24x32xf32> to vector<24xf32>
    %16 = vector.shape_cast %15 : vector<24xf32> to vector<24x1xf32>
    %cst_10 = arith.constant 3.200000e+01 : f32
    %17 = vector.broadcast %cst_10 : f32 to vector<24x1xf32>
    %18 = arith.divf %16, %17 : vector<24x1xf32>
    %19 = vector.broadcast %11 : vector<24x1xf32> to vector<24x32xf32>
    %20 = arith.subf %3, %19 : vector<24x32xf32>
    %cst_11 = arith.constant 9.99999974E-6 : f32
    %21 = vector.broadcast %cst_11 : f32 to vector<24x1xf32>
    %22 = arith.addf %18, %21 : vector<24x1xf32>
    %23 = math.rsqrt %22 : vector<24x1xf32>
    %24 = vector.broadcast %23 : vector<24x1xf32> to vector<24x32xf32>
    %25 = arith.mulf %20, %24 : vector<24x32xf32>
    %26 = vector.broadcast %5 : vector<1x32xf32> to vector<24x32xf32>
    %27 = arith.mulf %25, %26 : vector<24x32xf32>
    %28 = vector.broadcast %7 : vector<1x32xf32> to vector<24x32xf32>
    %29 = arith.addf %27, %28 : vector<24x32xf32>
    %30 = arith.truncf %29 : vector<24x32xf32> to vector<24x32xbf16>
    %31 = vector.shape_cast %30 : vector<24x32xbf16> to vector<1x24x32xbf16>
    %32 = vector.shape_cast %31 : vector<1x24x32xbf16> to vector<1x24x32xbf16>
    %33 = vector.broadcast %32 : vector<1x24x32xbf16> to vector<12x24x32xbf16>
    %c0_12 = arith.constant 0 : index
    %c0_13 = arith.constant 0 : index
    %c0_14 = arith.constant 0 : index
    %c0_15 = arith.constant 0 : index
    %34 = vector.load %arg7[%c0_12, %c0_13, %c0_14, %c0_15] : memref<1x12x32x8xbf16, #tpu.memory_space<vmem>>, vector<1x12x32x8xbf16>
    %35 = vector.shape_cast %34 : vector<1x12x32x8xbf16> to vector<12x32x8xbf16>
    "tpu.trace_start"() <{level = 10 : i32, message = "hnd,hde->hne"}> : () -> ()
    %cst_16 = arith.constant dense<0.000000e+00> : vector<12x24x8xf32>
    %36 = tpu.matmul %33, %35, %cst_16 {dimension_numbers = #tpu.dot_dimension_numbers<[2], [1], [1], [2], [0, 0, 0, 1, 1, 2], [0], [0]>} : vector<12x24x32xbf16>, vector<12x32x8xbf16>, vector<12x24x8xf32> -> vector<12x24x8xf32>
    "tpu.trace_stop"() : () -> ()
    %37 = vector.extract_strided_slice %36 {offsets = [0, 0, 0], sizes = [4, 24, 8], strides = [1, 1, 1]} : vector<12x24x8xf32> to vector<4x24x8xf32>
    %38 = arith.truncf %37 : vector<4x24x8xf32> to vector<4x24x8xbf16>
    %39 = vector.extract_strided_slice %36 {offsets = [4, 0, 0], sizes = [4, 24, 8], strides = [1, 1, 1]} : vector<12x24x8xf32> to vector<4x24x8xf32>
    %40 = arith.truncf %39 : vector<4x24x8xf32> to vector<4x24x8xbf16>
    %41 = vector.extract_strided_slice %36 {offsets = [8, 0, 0], sizes = [4, 24, 8], strides = [1, 1, 1]} : vector<12x24x8xf32> to vector<4x24x8xf32>
    %42 = arith.truncf %41 : vector<4x24x8xf32> to vector<4x24x8xbf16>
    "tpu.trace_start"() <{level = 10 : i32, message = "hne,hme->hnm"}> : () -> ()
    %cst_17 = arith.constant dense<0.000000e+00> : vector<4x24x24xf32>
    %43 = tpu.matmul %38, %40, %cst_17 {dimension_numbers = #tpu.dot_dimension_numbers<[2], [2], [1], [1], [0, 0, 0, 1, 1, 1], [0], [0]>} : vector<4x24x8xbf16>, vector<4x24x8xbf16>, vector<4x24x24xf32> -> vector<4x24x24xf32>
    "tpu.trace_stop"() : () -> ()
    %44 = tpu.iota {dimensions = array<i32: 1>} : vector<24x24xi32>
    %c17_i32 = arith.constant 17 : i32
    %45 = vector.broadcast %c17_i32 : i32 to vector<24x24xi32>
    %46 = arith.cmpi slt, %44, %45 : vector<24x24xi32>
    %47 = vector.shape_cast %46 : vector<24x24xi1> to vector<1x24x24xi1>
    %cst_18 = arith.constant -3.40282347E+38 : f32
    %48 = vector.shape_cast %47 : vector<1x24x24xi1> to vector<1x24x24xi1>
    %49 = vector.broadcast %48 : vector<1x24x24xi1> to vector<4x24x24xi1>
    %50 = vector.broadcast %cst_18 : f32 to vector<4x24x24xf32>
    %51 = arith.select %49, %43, %50 : vector<4x24x24xi1>, vector<4x24x24xf32>
    %cst_19 = arith.constant dense<0xFF800000> : vector<4x24xf32>
    %52 = vector.multi_reduction <maximumf>, %51, %cst_19 [2] : vector<4x24x24xf32> to vector<4x24xf32>
    %53 = vector.shape_cast %52 : vector<4x24xf32> to vector<4x24x1xf32>
    %54 = vector.broadcast %53 : vector<4x24x1xf32> to vector<4x24x24xf32>
    %55 = arith.subf %51, %54 : vector<4x24x24xf32>
    %56 = math.exp %55 : vector<4x24x24xf32>
    %cst_20 = arith.constant dense<0.000000e+00> : vector<4x24xf32>
    %57 = vector.multi_reduction <add>, %56, %cst_20 [2] : vector<4x24x24xf32> to vector<4x24xf32>
    %58 = vector.shape_cast %57 : vector<4x24xf32> to vector<4x24x1xf32>
    %59 = tpu.reciprocal %58 {approx = true} : vector<4x24x1xf32> -> vector<4x24x1xf32>
    %60 = vector.broadcast %59 : vector<4x24x1xf32> to vector<4x24x24xf32>
    %61 = arith.mulf %56, %60 : vector<4x24x24xf32>
    %62 = arith.truncf %61 : vector<4x24x24xf32> to vector<4x24x24xbf16>
    "tpu.trace_start"() <{level = 10 : i32, message = "hnm,hme->hne"}> : () -> ()
    %cst_21 = arith.constant dense<0.000000e+00> : vector<4x24x8xf32>
    %63 = tpu.matmul %62, %42, %cst_21 {dimension_numbers = #tpu.dot_dimension_numbers<[2], [1], [1], [2], [0, 0, 0, 1, 1, 2], [0], [0]>} : vector<4x24x24xbf16>, vector<4x24x8xbf16>, vector<4x24x8xf32> -> vector<4x24x8xf32>
    "tpu.trace_stop"() : () -> ()
    %64 = arith.truncf %63 : vector<4x24x8xf32> to vector<4x24x8xbf16>
    %c0_22 = arith.constant 0 : index
    %c0_23 = arith.constant 0 : index
    %c0_24 = arith.constant 0 : index
    %c0_25 = arith.constant 0 : index
    %65 = vector.load %arg8[%c0_22, %c0_23, %c0_24, %c0_25] : memref<1x4x8x32xbf16, #tpu.memory_space<vmem>>, vector<1x4x8x32xbf16>
    %66 = vector.shape_cast %65 : vector<1x4x8x32xbf16> to vector<4x8x32xbf16>
    "tpu.trace_start"() <{level = 10 : i32, message = "hne,hed->hnd"}> : () -> ()
    %cst_26 = arith.constant dense<0.000000e+00> : vector<4x24x32xf32>
    %67 = tpu.matmul %64, %66, %cst_26 {dimension_numbers = #tpu.dot_dimension_numbers<[2], [1], [1], [2], [0, 0, 0, 1, 1, 2], [0], [0]>} : vector<4x24x8xbf16>, vector<4x8x32xbf16>, vector<4x24x32xf32> -> vector<4x24x32xf32>
    "tpu.trace_stop"() : () -> ()
    %cst_27 = arith.constant dense<0.000000e+00> : vector<24x32xf32>
    %68 = vector.multi_reduction <add>, %67, %cst_27 [0] : vector<4x24x32xf32> to vector<24x32xf32>
    %69 = arith.addf %3, %68 : vector<24x32xf32>
    %c0_28 = arith.constant 0 : index
    %c0_29 = arith.constant 0 : index
    %c0_30 = arith.constant 0 : index
    %70 = vector.load %arg9[%c0_28, %c0_29, %c0_30] : memref<1x1x32xf32, #tpu.memory_space<vmem>>, vector<1x1x32xf32>
    %71 = vector.shape_cast %70 : vector<1x1x32xf32> to vector<1x32xf32>
    %72 = vector.broadcast %71 : vector<1x32xf32> to vector<24x32xf32>
    %73 = arith.addf %69, %72 : vector<24x32xf32>
    %c0_31 = arith.constant 0 : index
    %c0_32 = arith.constant 0 : index
    %c0_33 = arith.constant 0 : index
    %74 = vector.load %arg10[%c0_31, %c0_32, %c0_33] : memref<1x1x32xf32, #tpu.memory_space<vmem>>, vector<1x1x32xf32>
    %75 = vector.shape_cast %74 : vector<1x1x32xf32> to vector<1x32xf32>
    %c0_34 = arith.constant 0 : index
    %c0_35 = arith.constant 0 : index
    %c0_36 = arith.constant 0 : index
    %76 = vector.load %arg11[%c0_34, %c0_35, %c0_36] : memref<1x1x32xf32, #tpu.memory_space<vmem>>, vector<1x1x32xf32>
    %77 = vector.shape_cast %76 : vector<1x1x32xf32> to vector<1x32xf32>
    %cst_37 = arith.constant dense<0.000000e+00> : vector<24xf32>
    %78 = vector.multi_reduction <add>, %73, %cst_37 [1] : vector<24x32xf32> to vector<24xf32>
    %79 = vector.shape_cast %78 : vector<24xf32> to vector<24x1xf32>
    %cst_38 = arith.constant 3.200000e+01 : f32
    %80 = vector.broadcast %cst_38 : f32 to vector<24x1xf32>
    %81 = arith.divf %79, %80 : vector<24x1xf32>
    %82 = vector.broadcast %81 : vector<24x1xf32> to vector<24x32xf32>
    %83 = arith.subf %73, %82 : vector<24x32xf32>
    %84 = arith.mulf %83, %83 : vector<24x32xf32>
    %cst_39 = arith.constant dense<0.000000e+00> : vector<24xf32>
    %85 = vector.multi_reduction <add>, %84, %cst_39 [1] : vector<24x32xf32> to vector<24xf32>
    %86 = vector.shape_cast %85 : vector<24xf32> to vector<24x1xf32>
    %cst_40 = arith.constant 3.200000e+01 : f32
    %87 = vector.broadcast %cst_40 : f32 to vector<24x1xf32>
    %88 = arith.divf %86, %87 : vector<24x1xf32>
    %89 = vector.broadcast %81 : vector<24x1xf32> to vector<24x32xf32>
    %90 = arith.subf %73, %89 : vector<24x32xf32>
    %cst_41 = arith.constant 9.99999974E-6 : f32
    %91 = vector.broadcast %cst_41 : f32 to vector<24x1xf32>
    %92 = arith.addf %88, %91 : vector<24x1xf32>
    %93 = math.rsqrt %92 : vector<24x1xf32>
    %94 = vector.broadcast %93 : vector<24x1xf32> to vector<24x32xf32>
    %95 = arith.mulf %90, %94 : vector<24x32xf32>
    %96 = vector.broadcast %75 : vector<1x32xf32> to vector<24x32xf32>
    %97 = arith.mulf %95, %96 : vector<24x32xf32>
    %98 = vector.broadcast %77 : vector<1x32xf32> to vector<24x32xf32>
    %99 = arith.addf %97, %98 : vector<24x32xf32>
    %100 = arith.truncf %99 : vector<24x32xf32> to vector<24x32xbf16>
    %c0_42 = arith.constant 0 : index
    %c0_43 = arith.constant 0 : index
    %c0_44 = arith.constant 0 : index
    %101 = vector.load %arg12[%c0_42, %c0_43, %c0_44] : memref<1x32x64xbf16, #tpu.memory_space<vmem>>, vector<1x32x64xbf16>
    %102 = vector.shape_cast %101 : vector<1x32x64xbf16> to vector<32x64xbf16>
    %cst_45 = arith.constant dense<0.000000e+00> : vector<24x64xf32>
    %103 = tpu.matmul %100, %102, %cst_45 {dimension_numbers = #tpu.dot_dimension_numbers<[1], [0], [0], [1], [0, 0, 1, 1], [], []>} : vector<24x32xbf16>, vector<32x64xbf16>, vector<24x64xf32> -> vector<24x64xf32>
    %c0_46 = arith.constant 0 : index
    %c0_47 = arith.constant 0 : index
    %c0_48 = arith.constant 0 : index
    %104 = vector.load %arg13[%c0_46, %c0_47, %c0_48] : memref<1x1x64xf32, #tpu.memory_space<vmem>>, vector<1x1x64xf32>
    %105 = vector.shape_cast %104 : vector<1x1x64xf32> to vector<1x64xf32>
    %106 = vector.broadcast %105 : vector<1x64xf32> to vector<24x64xf32>
    %107 = arith.addf %103, %106 : vector<24x64xf32>
    %cst_49 = arith.constant 5.000000e-01 : f32
    %108 = vector.broadcast %cst_49 : f32 to vector<24x64xf32>
    %109 = arith.mulf %108, %107 : vector<24x64xf32>
    %cst_50 = arith.constant 4.471500e-02 : f32
    %110 = vector.broadcast %cst_50 : f32 to vector<24x64xf32>
    %111 = arith.mulf %110, %107 : vector<24x64xf32>
    %112 = arith.mulf %111, %107 : vector<24x64xf32>
    %113 = arith.mulf %112, %107 : vector<24x64xf32>
    %114 = arith.addf %107, %113 : vector<24x64xf32>
    %cst_51 = arith.constant 0.797884583 : f32
    %115 = vector.broadcast %cst_51 : f32 to vector<24x64xf32>
    %116 = arith.mulf %115, %114 : vector<24x64xf32>
    %117 = math.tanh %116 : vector<24x64xf32>
    %cst_52 = arith.constant 1.000000e+00 : f32
    %118 = vector.broadcast %cst_52 : f32 to vector<24x64xf32>
    %119 = arith.addf %118, %117 : vector<24x64xf32>
    %120 = arith.mulf %109, %119 : vector<24x64xf32>
    %121 = arith.truncf %120 : vector<24x64xf32> to vector<24x64xbf16>
    %c0_53 = arith.constant 0 : index
    %c0_54 = arith.constant 0 : index
    %c0_55 = arith.constant 0 : index
    %122 = vector.load %arg14[%c0_53, %c0_54, %c0_55] : memref<1x64x32xbf16, #tpu.memory_space<vmem>>, vector<1x64x32xbf16>
    %123 = vector.shape_cast %122 : vector<1x64x32xbf16> to vector<64x32xbf16>
    %cst_56 = arith.constant dense<0.000000e+00> : vector<24x32xf32>
    %124 = tpu.matmul %121, %123, %cst_56 {dimension_numbers = #tpu.dot_dimension_numbers<[1], [0], [0], [1], [0, 0, 1, 1], [], []>} : vector<24x64xbf16>, vector<64x32xbf16>, vector<24x32xf32> -> vector<24x32xf32>
    %c0_57 = arith.constant 0 : index
    %c0_58 = arith.constant 0 : index
    %c0_59 = arith.constant 0 : index
    %125 = vector.load %arg15[%c0_57, %c0_58, %c0_59] : memref<1x1x32xf32, #tpu.memory_space<vmem>>, vector<1x1x32xf32>
    %126 = vector.shape_cast %125 : vector<1x1x32xf32> to vector<1x32xf32>
    %127 = vector.broadcast %126 : vector<1x32xf32> to vector<24x32xf32>
    %128 = arith.addf %124, %127 : vector<24x32xf32>
    %129 = arith.addf %73, %128 : vector<24x32xf32>
    %c0_60 = arith.constant 0 : index
    %c0_61 = arith.constant 0 : index
    %130 = vector.load %arg21[%c0_60, %c0_61] : memref<24x32xf32, #tpu.memory_space<vmem>>, vector<24x32xf32>
    tpu.vector_store %arg21[%c0_60, %c0_61], %129 {strides = array<i32>} : memref<24x32xf32, #tpu.memory_space<vmem>>, vector<24x32xf32>,
    %c1_i32 = arith.constant 1 : i32
    %131 = arith.cmpi eq, %arg1, %c1_i32 : i32
    %132 = arith.extui %131 : i1 to i32
    %c0_i32_62 = arith.constant 0 : i32
    %133 = arith.cmpi ne, %132, %c0_i32_62 : i32
    scf.if %133 {
      %134 = vector.extract_strided_slice %129 {offsets = [0, 0], sizes = [1, 32], strides = [1, 1]} : vector<24x32xf32> to vector<1x32xf32>
      %c0_63 = arith.constant 0 : index
      %c0_64 = arith.constant 0 : index
      %135 = vector.load %arg16[%c0_63, %c0_64] : memref<1x32xf32, #tpu.memory_space<vmem>>, vector<1x32xf32>
      %c0_65 = arith.constant 0 : index
      %c0_66 = arith.constant 0 : index
      %136 = vector.load %arg17[%c0_65, %c0_66] : memref<1x32xf32, #tpu.memory_space<vmem>>, vector<1x32xf32>
      %cst_67 = arith.constant dense<0.000000e+00> : vector<1xf32>
      %137 = vector.multi_reduction <add>, %134, %cst_67 [1] : vector<1x32xf32> to vector<1xf32>
      %138 = vector.shape_cast %137 : vector<1xf32> to vector<1x1xf32>
      %cst_68 = arith.constant 3.200000e+01 : f32
      %139 = vector.broadcast %cst_68 : f32 to vector<1x1xf32>
      %140 = arith.divf %138, %139 : vector<1x1xf32>
      %141 = vector.broadcast %140 : vector<1x1xf32> to vector<1x32xf32>
      %142 = arith.subf %134, %141 : vector<1x32xf32>
      %143 = arith.mulf %142, %142 : vector<1x32xf32>
      %cst_69 = arith.constant dense<0.000000e+00> : vector<1xf32>
      %144 = vector.multi_reduction <add>, %143, %cst_69 [1] : vector<1x32xf32> to vector<1xf32>
      %145 = vector.shape_cast %144 : vector<1xf32> to vector<1x1xf32>
      %cst_70 = arith.constant 3.200000e+01 : f32
      %146 = vector.broadcast %cst_70 : f32 to vector<1x1xf32>
      %147 = arith.divf %145, %146 : vector<1x1xf32>
      %148 = vector.broadcast %140 : vector<1x1xf32> to vector<1x32xf32>
      %149 = arith.subf %134, %148 : vector<1x32xf32>
      %cst_71 = arith.constant 9.99999974E-6 : f32
      %150 = vector.broadcast %cst_71 : f32 to vector<1x1xf32>
      %151 = arith.addf %147, %150 : vector<1x1xf32>
      %152 = math.rsqrt %151 : vector<1x1xf32>
      %153 = vector.broadcast %152 : vector<1x1xf32> to vector<1x32xf32>
      %154 = arith.mulf %149, %153 : vector<1x32xf32>
      %155 = arith.mulf %154, %135 : vector<1x32xf32>
      %156 = arith.addf %155, %136 : vector<1x32xf32>
      %157 = arith.truncf %156 : vector<1x32xf32> to vector<1x32xbf16>
      %c0_72 = arith.constant 0 : index
      %c0_73 = arith.constant 0 : index
      %158 = vector.load %arg18[%c0_72, %c0_73] : memref<32x128xbf16, #tpu.memory_space<vmem>>, vector<32x128xbf16>
      %cst_74 = arith.constant dense<0.000000e+00> : vector<1x128xf32>
      %159 = tpu.matmul %157, %158, %cst_74 {dimension_numbers = #tpu.dot_dimension_numbers<[1], [0], [0], [1], [0, 0, 1, 1], [], []>} : vector<1x32xbf16>, vector<32x128xbf16>, vector<1x128xf32> -> vector<1x128xf32>
      %c0_75 = arith.constant 0 : index
      %c0_76 = arith.constant 0 : index
      %160 = vector.load %arg19[%c0_75, %c0_76] : memref<1x128xf32, #tpu.memory_space<vmem>>, vector<1x128xf32>
      %161 = arith.addf %159, %160 : vector<1x128xf32>
      %162 = vector.shape_cast %161 : vector<1x128xf32> to vector<1x1x128xf32>
      %c0_77 = arith.constant 0 : index
      %c0_78 = arith.constant 0 : index
      %c0_79 = arith.constant 0 : index
      %163 = vector.load %arg20[%c0_77, %c0_78, %c0_79] : memref<1x1x128xf32, #tpu.memory_space<vmem>>, vector<1x1x128xf32>
      tpu.vector_store %arg20[%c0_77, %c0_78, %c0_79], %162 {strides = array<i32>} : memref<1x1x128xf32, #tpu.memory_space<vmem>>, vector<1x1x128xf32>,
    } else {
    }
    return
  }
  func.func @transform_0(%arg0: i32, %arg1: i32) -> (i32, i32, i32) {
    %c0_i32 = arith.constant 0 : i32
    %c0_i32_0 = arith.constant 0 : i32
    %c0_i32_1 = arith.constant 0 : i32
    return %arg0, %c0_i32, %c0_i32_0 : i32, i32, i32
  }
  func.func @transform_1(%arg0: i32, %arg1: i32) -> (i32, i32) {
    %c0_i32 = arith.constant 0 : i32
    %c0_i32_0 = arith.constant 0 : i32
    %c0_i32_1 = arith.constant 0 : i32
    return %c0_i32, %c0_i32_0 : i32, i32
  }
  func.func @transform_2(%arg0: i32, %arg1: i32) -> (i32, i32) {
    %c0_i32 = arith.constant 0 : i32
    %c0_i32_0 = arith.constant 0 : i32
    %c0_i32_1 = arith.constant 0 : i32
    return %c0_i32, %c0_i32_0 : i32, i32
  }
  func.func @transform_3(%arg0: i32, %arg1: i32) -> (i32, i32, i32) {
    %c0_i32 = arith.constant 0 : i32
    %c0_i32_0 = arith.constant 0 : i32
    %c0_i32_1 = arith.constant 0 : i32
    return %arg1, %c0_i32, %c0_i32_0 : i32, i32, i32
  }
  func.func @transform_4(%arg0: i32, %arg1: i32) -> (i32, i32, i32) {
    %c0_i32 = arith.constant 0 : i32
    %c0_i32_0 = arith.constant 0 : i32
    %c0_i32_1 = arith.constant 0 : i32
    return %arg1, %c0_i32, %c0_i32_0 : i32, i32, i32
  }
  func.func @transform_5(%arg0: i32, %arg1: i32) -> (i32, i32, i32, i32) {
    %c0_i32 = arith.constant 0 : i32
    %c0_i32_0 = arith.constant 0 : i32
    %c0_i32_1 = arith.constant 0 : i32
    %c0_i32_2 = arith.constant 0 : i32
    return %arg1, %c0_i32, %c0_i32_0, %c0_i32_1 : i32, i32, i32, i32
  }
  func.func @transform_6(%arg0: i32, %arg1: i32) -> (i32, i32, i32, i32) {
    %c0_i32 = arith.constant 0 : i32
    %c0_i32_0 = arith.constant 0 : i32
    %c0_i32_1 = arith.constant 0 : i32
    %c0_i32_2 = arith.constant 0 : i32
    return %arg1, %c0_i32, %c0_i32_0, %c0_i32_1 : i32, i32, i32, i32
  }
  func.func @transform_7(%arg0: i32, %arg1: i32) -> (i32, i32, i32) {
    %c0_i32 = arith.constant 0 : i32
    %c0_i32_0 = arith.constant 0 : i32
    %c0_i32_1 = arith.constant 0 : i32
    return %arg1, %c0_i32, %c0_i32_0 : i32, i32, i32
  }
  func.func @transform_8(%arg0: i32, %arg1: i32) -> (i32, i32, i32) {
    %c0_i32 = arith.constant 0 : i32
    %c0_i32_0 = arith.constant 0 : i32
    %c0_i32_1 = arith.constant 0 : i32
    return %arg1, %c0_i32, %c0_i32_0 : i32, i32, i32
  }
  func.func @transform_9(%arg0: i32, %arg1: i32) -> (i32, i32, i32) {
    %c0_i32 = arith.constant 0 : i32
    %c0_i32_0 = arith.constant 0 : i32
    %c0_i32_1 = arith.constant 0 : i32
    return %arg1, %c0_i32, %c0_i32_0 : i32, i32, i32
  }
  func.func @transform_10(%arg0: i32, %arg1: i32) -> (i32, i32, i32) {
    %c0_i32 = arith.constant 0 : i32
    %c0_i32_0 = arith.constant 0 : i32
    %c0_i32_1 = arith.constant 0 : i32
    return %arg1, %c0_i32, %c0_i32_0 : i32, i32, i32
  }
  func.func @transform_11(%arg0: i32, %arg1: i32) -> (i32, i32, i32) {
    %c0_i32 = arith.constant 0 : i32
    %c0_i32_0 = arith.constant 0 : i32
    %c0_i32_1 = arith.constant 0 : i32
    return %arg1, %c0_i32, %c0_i32_0 : i32, i32, i32
  }
  func.func @transform_12(%arg0: i32, %arg1: i32) -> (i32, i32, i32) {
    %c0_i32 = arith.constant 0 : i32
    %c0_i32_0 = arith.constant 0 : i32
    %c0_i32_1 = arith.constant 0 : i32
    return %arg1, %c0_i32, %c0_i32_0 : i32, i32, i32
  }
  func.func @transform_13(%arg0: i32, %arg1: i32) -> (i32, i32, i32) {
    %c0_i32 = arith.constant 0 : i32
    %c0_i32_0 = arith.constant 0 : i32
    %c0_i32_1 = arith.constant 0 : i32
    return %arg1, %c0_i32, %c0_i32_0 : i32, i32, i32
  }
  func.func @transform_14(%arg0: i32, %arg1: i32) -> (i32, i32) {
    %c0_i32 = arith.constant 0 : i32
    %c0_i32_0 = arith.constant 0 : i32
    %c0_i32_1 = arith.constant 0 : i32
    return %c0_i32, %c0_i32_0 : i32, i32
  }
  func.func @transform_15(%arg0: i32, %arg1: i32) -> (i32, i32) {
    %c0_i32 = arith.constant 0 : i32
    %c0_i32_0 = arith.constant 0 : i32
    %c0_i32_1 = arith.constant 0 : i32
    return %c0_i32, %c0_i32_0 : i32, i32
  }
  func.func @transform_16(%arg0: i32, %arg1: i32) -> (i32, i32) {
    %c0_i32 = arith.constant 0 : i32
    %c0_i32_0 = arith.constant 0 : i32
    %c0_i32_1 = arith.constant 0 : i32
    return %c0_i32, %c0_i32_0 : i32, i32
  }
  func.func @transform_17(%arg0: i32, %arg1: i32) -> (i32, i32) {
    %c0_i32 = arith.constant 0 : i32
    %c0_i32_0 = arith.constant 0 : i32
    %c0_i32_1 = arith.constant 0 : i32
    return %c0_i32, %c0_i32_0 : i32, i32
  }
  func.func @transform_18(%arg0: i32, %arg1: i32) -> (i32, i32, i32) {
    %c0_i32 = arith.constant 0 : i32
    %c0_i32_0 = arith.constant 0 : i32
    %c0_i32_1 = arith.constant 0 : i32
    return %arg0, %c0_i32, %c0_i32_0 : i32, i32, i32
  }
}

</mosaic_0001>

<llo_original>
// kernel: vit_forward.1
$region0: #{vit_forward.1}
  #allocation0 [shape = 'u32[]', space=smem, size = 0x4, offset = 0x4, fixed_abs, tag = 'smem constant byte address 0x4 - core index']
  #allocation1 [shape = 'u32[144,128]{1,0:T(1,128)}', space=vmem, size = 0x12000, scoped, tag = 'internal scratch']
  #allocation2 [shape = 'f32[24,32]{1,0:T(8,128)}', space=vmem, size = 0x3000, scoped, tag = 'scratch operand']
  %s0 = inlined_call_operand.vmem [shape: bf16[2,24,64], index: 0, kind: input, shape index: {}]
  %s1 = inlined_call_operand.vmem [shape: bf16[64,32], index: 1, kind: input, shape index: {}]
  %s2 = inlined_call_operand.vmem [shape: f32[24,32], index: 2, kind: input, shape index: {}]
  %s3 = inlined_call_operand.vmem [shape: f32[2,1,32], index: 3, kind: input, shape index: {}]
  %s4 = inlined_call_operand.vmem [shape: f32[2,1,32], index: 4, kind: input, shape index: {}]
  %s5 = inlined_call_operand.vmem [shape: bf16[2,12,32,8], index: 5, kind: input, shape index: {}]
  %s6 = inlined_call_operand.vmem [shape: bf16[2,4,8,32], index: 6, kind: input, shape index: {}]
  %s7 = inlined_call_operand.vmem [shape: f32[2,1,32], index: 7, kind: input, shape index: {}]
  %s8 = inlined_call_operand.vmem [shape: f32[2,1,32], index: 8, kind: input, shape index: {}]
  %s9 = inlined_call_operand.vmem [shape: f32[2,1,32], index: 9, kind: input, shape index: {}]
  %s10 = inlined_call_operand.vmem [shape: bf16[2,32,64], index: 10, kind: input, shape index: {}]
  %s11 = inlined_call_operand.vmem [shape: f32[2,1,64], index: 11, kind: input, shape index: {}]
  %s12 = inlined_call_operand.vmem [shape: bf16[2,64,32], index: 12, kind: input, shape index: {}]
  %s13 = inlined_call_operand.vmem [shape: f32[2,1,32], index: 13, kind: input, shape index: {}]
  %s14 = inlined_call_operand.vmem [shape: f32[1,32], index: 14, kind: input, shape index: {}]
  %s15 = inlined_call_operand.vmem [shape: f32[1,32], index: 15, kind: input, shape index: {}]
  %s16 = inlined_call_operand.vmem [shape: bf16[32,128], index: 16, kind: input, shape index: {}]
  %s17 = inlined_call_operand.vmem [shape: f32[1,128], index: 17, kind: input, shape index: {}]
  %s18 = inlined_call_operand.hbm [shape: f32[2,1,128], index: 18, kind: output, shape index: {}]
  %s19 = sld [smem:[#allocation0]]
  $region113: #{vit_forward.1} parent=0
    _
  %s21 = ssub.s32 1, %s19
  %s22 = scalar_select 0, %s21, %s19
  $region1: #{vit_forward.1} parent=0
    #allocation3 [shape = 'u8[1024]{0}', space=vmem, size = 0x400, scoped, tag = 'output window, operand 0']
    #allocation4 [shape = 's32[2]{0}', space=sflag, size = 0x8, scoped, tag = 'scoped memory for vit_forward.1']
    %23 = vsyncpa [#allocation4], 0
    %s24 = scalar_lea.sflag [#allocation4], 1
    %25 = vsyncpa %s24, 0
    loop: start=0, step=1, limit=6
    $region2: #{vit_forward.1} parent=1 // loop_pre_header
      _
    $region3: #{vit_forward.1} parent=1 // loop_header
      %s27 = sphi 0, %s31
      %p28 = scmp.ge.s32.totalorder %s27, 6
      %s34 = sphi 0, %s46
      %s35 = sphi 0, %s42
      %s36 = sphi 0, %s34
      %s37 = sphi 0, %s35
      %s38 = sphi 0, %s36
      %s39 = sphi 0, %s37
      %s49 = sphi 0, %s51
      %s52 = sphi 0, %s49
      %s53 = sphi 0, %s52
      %s69 = sphi 0, %s53
      %s73 = sphi 0, %s73
      %s75 = sphi 0, %s73
      %s76 = sphi 0, %s75
      %s90 = sphi 0, %s76
      %s94 = sphi 0, %s94
      %s96 = sphi 0, %s94
      %s97 = sphi 0, %s96
      %s111 = sphi 0, %s97
      %s117 = sphi 0, %s119
      %s120 = sphi 0, %s117
      %s121 = sphi 0, %s120
      %s137 = sphi 0, %s121
      %s143 = sphi 0, %s145
      %s146 = sphi 0, %s143
      %s147 = sphi 0, %s146
      %s163 = sphi 0, %s147
      %s169 = sphi 0, %s171
      %s172 = sphi 0, %s169
      %s173 = sphi 0, %s172
      %s189 = sphi 0, %s173
      %s195 = sphi 0, %s197
      %s198 = sphi 0, %s195
      %s199 = sphi 0, %s198
      %s215 = sphi 0, %s199
      %s221 = sphi 0, %s223
      %s224 = sphi 0, %s221
      %s225 = sphi 0, %s224
      %s241 = sphi 0, %s225
      %s247 = sphi 0, %s249
      %s250 = sphi 0, %s247
      %s251 = sphi 0, %s250
      %s267 = sphi 0, %s251
      %s273 = sphi 0, %s275
      %s276 = sphi 0, %s273
      %s277 = sphi 0, %s276
      %s293 = sphi 0, %s277
      %s299 = sphi 0, %s301
      %s302 = sphi 0, %s299
      %s303 = sphi 0, %s302
      %s319 = sphi 0, %s303
      %s325 = sphi 0, %s327
      %s328 = sphi 0, %s325
      %s329 = sphi 0, %s328
      %s345 = sphi 0, %s329
      %s351 = sphi 0, %s353
      %s354 = sphi 0, %s351
      %s355 = sphi 0, %s354
      %s371 = sphi 0, %s355
      %s377 = sphi 0, %s379
      %s380 = sphi 0, %s377
      %s381 = sphi 0, %s380
      %s397 = sphi 0, %s381
      %s401 = sphi 0, %s401
      %s403 = sphi 0, %s401
      %s404 = sphi 0, %s403
      %s418 = sphi 0, %s404
      %s422 = sphi 0, %s422
      %s424 = sphi 0, %s422
      %s425 = sphi 0, %s424
      %s439 = sphi 0, %s425
      %s443 = sphi 0, %s443
      %s445 = sphi 0, %s443
      %s446 = sphi 0, %s445
      %s460 = sphi 0, %s446
      %s464 = sphi 0, %s464
      %s466 = sphi 0, %s464
      %s467 = sphi 0, %s466
      %s481 = sphi 0, %s467
      %s487 = sphi 0, %s489
      %s490 = sphi 0, %s487
      %s491 = sphi 0, %s490
      %s507 = sphi 0, %s491
    $region4: #{vit_forward.1} parent=1 // loop_header_branch
      %30 = sbr.rel (%p28) target = $region8
    $region5: #{vit_forward.1} parent=1 // loop_body
      %s32 = ssub.s32 %s27, 1
      %s33 = ssub.s32 %s27, 2
      %s40 = sadd.s32 1, %s35
      %p41 = scmp.ge.s32.totalorder %s40, 2
      %s42 = scalar_select %p41, 0, %s40
      %s43 = sadd.s32 1, %s34
      %s44 = scalar_select %p41, %s43, %s34
      %p45 = scmp.ge.s32.totalorder %s44, 2
      %s46 = scalar_select %p45, 0, %s44
      %s47 = ssub.s32 %s34, %s46
      %p48 = scmp.eq.s32.totalorder %s47, 0
      %s50 = sadd.s32 %s49, 1
      %s51 = scalar_select %p48, %s49, %s50
      %p54 = pneg %p48
      %p55 = scmp.eq.s32.totalorder %s27, 3
      %p56 = por %p54, %p55
      %p57 = scmp.ne.s32.totalorder %s49, %s52
      %p58 = scmp.eq.s32.totalorder %s27, 0
      %p59 = por %p57, %p58
      %p60 = scmp.ne.s32.totalorder %s49, %s52
      %p61 = scmp.eq.s32.totalorder %s32, 3
      %p62 = por %p60, %p61
      %p63 = scmp.ne.s32.totalorder %s52, %s53
      %p64 = scmp.eq.s32.totalorder %s32, 0
      %p65 = por %p63, %p64
      %p66 = scmp.ne.s32.totalorder %s52, %s53
      %p67 = scmp.eq.s32.totalorder %s33, 3
      %p68 = por %p66, %p67
      %p70 = scmp.ne.s32.totalorder %s53, %s69
      %p71 = scmp.eq.s32.totalorder %s33, 0
      %p72 = por %p70, %p71
      %s74 = sadd.s32 %s73, 1
      %p77 = scmp.eq.s32.totalorder %s27, 3
      %p78 = scmp.ne.s32.totalorder %s73, %s75
      %p79 = scmp.eq.s32.totalorder %s27, 0
      %p80 = por %p78, %p79
      %p81 = scmp.ne.s32.totalorder %s73, %s75
      %p82 = scmp.eq.s32.totalorder %s32, 3
      %p83 = por %p81, %p82
      %p84 = scmp.ne.s32.totalorder %s75, %s76
      %p85 = scmp.eq.s32.totalorder %s32, 0
      %p86 = por %p84, %p85
      %p87 = scmp.ne.s32.totalorder %s75, %s76
      %p88 = scmp.eq.s32.totalorder %s33, 3
      %p89 = por %p87, %p88
      %p91 = scmp.ne.s32.totalorder %s76, %s90
      %p92 = scmp.eq.s32.totalorder %s33, 0
      %p93 = por %p91, %p92
      %s95 = sadd.s32 %s94, 1
      %p98 = scmp.eq.s32.totalorder %s27, 3
      %p99 = scmp.ne.s32.totalorder %s94, %s96
      %p100 = scmp.eq.s32.totalorder %s27, 0
      %p101 = por %p99, %p100
      %p102 = scmp.ne.s32.totalorder %s94, %s96
      %p103 = scmp.eq.s32.totalorder %s32, 3
      %p104 = por %p102, %p103
      %p105 = scmp.ne.s32.totalorder %s96, %s97
      %p106 = scmp.eq.s32.totalorder %s32, 0
      %p107 = por %p105, %p106
      %p108 = scmp.ne.s32.totalorder %s96, %s97
      %p109 = scmp.eq.s32.totalorder %s33, 3
      %p110 = por %p108, %p109
      %p112 = scmp.ne.s32.totalorder %s97, %s111
      %p113 = scmp.eq.s32.totalorder %s33, 0
      %p114 = por %p112, %p113
      %s115 = ssub.s32 %s35, %s42
      %p116 = scmp.eq.s32.totalorder %s115, 0
      %s118 = sadd.s32 %s117, 1
      %s119 = scalar_select %p116, %s117, %s118
      %p122 = pneg %p116
      %p123 = scmp.eq.s32.totalorder %s27, 3
      %p124 = por %p122, %p123
      %p125 = scmp.ne.s32.totalorder %s117, %s120
      %p126 = scmp.eq.s32.totalorder %s27, 0
      %p127 = por %p125, %p126
      %p128 = scmp.ne.s32.totalorder %s117, %s120
      %p129 = scmp.eq.s32.totalorder %s32, 3
      %p130 = por %p128, %p129
      %p131 = scmp.ne.s32.totalorder %s120, %s121
      %p132 = scmp.eq.s32.totalorder %s32, 0
      %p133 = por %p131, %p132
      %p134 = scmp.ne.s32.totalorder %s120, %s121
      %p135 = scmp.eq.s32.totalorder %s33, 3
      %p136 = por %p134, %p135
      %p138 = scmp.ne.s32.totalorder %s121, %s137
      %p139 = scmp.eq.s32.totalorder %s33, 0
      %p140 = por %p138, %p139
      %s141 = ssub.s32 %s35, %s42
      %p142 = scmp.eq.s32.totalorder %s141, 0
      %s144 = sadd.s32 %s143, 1
      %s145 = scalar_select %p142, %s143, %s144
      %p148 = pneg %p142
      %p149 = scmp.eq.s32.totalorder %s27, 3
      %p150 = por %p148, %p149
      %p151 = scmp.ne.s32.totalorder %s143, %s146
      %p152 = scmp.eq.s32.totalorder %s27, 0
      %p153 = por %p151, %p152
      %p154 = scmp.ne.s32.totalorder %s143, %s146
      %p155 = scmp.eq.s32.totalorder %s32, 3
      %p156 = por %p154, %p155
      %p157 = scmp.ne.s32.totalorder %s146, %s147
      %p158 = scmp.eq.s32.totalorder %s32, 0
      %p159 = por %p157, %p158
      %p160 = scmp.ne.s32.totalorder %s146, %s147
      %p161 = scmp.eq.s32.totalorder %s33, 3
      %p162 = por %p160, %p161
      %p164 = scmp.ne.s32.totalorder %s147, %s163
      %p165 = scmp.eq.s32.totalorder %s33, 0
      %p166 = por %p164, %p165
      %s167 = ssub.s32 %s35, %s42
      %p168 = scmp.eq.s32.totalorder %s167, 0
      %s170 = sadd.s32 %s169, 1
      %s171 = scalar_select %p168, %s169, %s170
      %p174 = pneg %p168
      %p175 = scmp.eq.s32.totalorder %s27, 3
      %p176 = por %p174, %p175
      %p177 = scmp.ne.s32.totalorder %s169, %s172
      %p178 = scmp.eq.s32.totalorder %s27, 0
      %p179 = por %p177, %p178
      %p180 = scmp.ne.s32.totalorder %s169, %s172
      %p181 = scmp.eq.s32.totalorder %s32, 3
      %p182 = por %p180, %p181
      %p183 = scmp.ne.s32.totalorder %s172, %s173
      %p184 = scmp.eq.s32.totalorder %s32, 0
      %p185 = por %p183, %p184
      %p186 = scmp.ne.s32.totalorder %s172, %s173
      %p187 = scmp.eq.s32.totalorder %s33, 3
      %p188 = por %p186, %p187
      %p190 = scmp.ne.s32.totalorder %s173, %s189
      %p191 = scmp.eq.s32.totalorder %s33, 0
      %p192 = por %p190, %p191
      %s193 = ssub.s32 %s35, %s42
      %p194 = scmp.eq.s32.totalorder %s193, 0
      %s196 = sadd.s32 %s195, 1
      %s197 = scalar_select %p194, %s195, %s196
      %p200 = pneg %p194
      %p201 = scmp.eq.s32.totalorder %s27, 3
      %p202 = por %p200, %p201
      %p203 = scmp.ne.s32.totalorder %s195, %s198
      %p204 = scmp.eq.s32.totalorder %s27, 0
      %p205 = por %p203, %p204
      %p206 = scmp.ne.s32.totalorder %s195, %s198
      %p207 = scmp.eq.s32.totalorder %s32, 3
      %p208 = por %p206, %p207
      %p209 = scmp.ne.s32.totalorder %s198, %s199
      %p210 = scmp.eq.s32.totalorder %s32, 0
      %p211 = por %p209, %p210
      %p212 = scmp.ne.s32.totalorder %s198, %s199
      %p213 = scmp.eq.s32.totalorder %s33, 3
      %p214 = por %p212, %p213
      %p216 = scmp.ne.s32.totalorder %s199, %s215
      %p217 = scmp.eq.s32.totalorder %s33, 0
      %p218 = por %p216, %p217
      %s219 = ssub.s32 %s35, %s42
      %p220 = scmp.eq.s32.totalorder %s219, 0
      %s222 = sadd.s32 %s221, 1
      %s223 = scalar_select %p220, %s221, %s222
      %p226 = pneg %p220
      %p227 = scmp.eq.s32.totalorder %s27, 3
      %p228 = por %p226, %p227
      %p229 = scmp.ne.s32.totalorder %s221, %s224
      %p230 = scmp.eq.s32.totalorder %s27, 0
      %p231 = por %p229, %p230
      %p232 = scmp.ne.s32.totalorder %s221, %s224
      %p233 = scmp.eq.s32.totalorder %s32, 3
      %p234 = por %p232, %p233
      %p235 = scmp.ne.s32.totalorder %s224, %s225
      %p236 = scmp.eq.s32.totalorder %s32, 0
      %p237 = por %p235, %p236
      %p238 = scmp.ne.s32.totalorder %s224, %s225
      %p239 = scmp.eq.s32.totalorder %s33, 3
      %p240 = por %p238, %p239
      %p242 = scmp.ne.s32.totalorder %s225, %s241
      %p243 = scmp.eq.s32.totalorder %s33, 0
      %p244 = por %p242, %p243
      %s245 = ssub.s32 %s35, %s42
      %p246 = scmp.eq.s32.totalorder %s245, 0
      %s248 = sadd.s32 %s247, 1
      %s249 = scalar_select %p246, %s247, %s248
      %p252 = pneg %p246
      %p253 = scmp.eq.s32.totalorder %s27, 3
      %p254 = por %p252, %p253
      %p255 = scmp.ne.s32.totalorder %s247, %s250
      %p256 = scmp.eq.s32.totalorder %s27, 0
      %p257 = por %p255, %p256
      %p258 = scmp.ne.s32.totalorder %s247, %s250
      %p259 = scmp.eq.s32.totalorder %s32, 3
      %p260 = por %p258, %p259
      %p261 = scmp.ne.s32.totalorder %s250, %s251
      %p262 = scmp.eq.s32.totalorder %s32, 0
      %p263 = por %p261, %p262
      %p264 = scmp.ne.s32.totalorder %s250, %s251
      %p265 = scmp.eq.s32.totalorder %s33, 3
      %p266 = por %p264, %p265
      %p268 = scmp.ne.s32.totalorder %s251, %s267
      %p269 = scmp.eq.s32.totalorder %s33, 0
      %p270 = por %p268, %p269
      %s271 = ssub.s32 %s35, %s42
      %p272 = scmp.eq.s32.totalorder %s271, 0
      %s274 = sadd.s32 %s273, 1
      %s275 = scalar_select %p272, %s273, %s274
      %p278 = pneg %p272
      %p279 = scmp.eq.s32.totalorder %s27, 3
      %p280 = por %p278, %p279
      %p281 = scmp.ne.s32.totalorder %s273, %s276
      %p282 = scmp.eq.s32.totalorder %s27, 0
      %p283 = por %p281, %p282
      %p284 = scmp.ne.s32.totalorder %s273, %s276
      %p285 = scmp.eq.s32.totalorder %s32, 3
      %p286 = por %p284, %p285
      %p287 = scmp.ne.s32.totalorder %s276, %s277
      %p288 = scmp.eq.s32.totalorder %s32, 0
      %p289 = por %p287, %p288
      %p290 = scmp.ne.s32.totalorder %s276, %s277
      %p291 = scmp.eq.s32.totalorder %s33, 3
      %p292 = por %p290, %p291
      %p294 = scmp.ne.s32.totalorder %s277, %s293
      %p295 = scmp.eq.s32.totalorder %s33, 0
      %p296 = por %p294, %p295
      %s297 = ssub.s32 %s35, %s42
      %p298 = scmp.eq.s32.totalorder %s297, 0
      %s300 = sadd.s32 %s299, 1
      %s301 = scalar_select %p298, %s299, %s300
      %p304 = pneg %p298
      %p305 = scmp.eq.s32.totalorder %s27, 3
      %p306 = por %p304, %p305
      %p307 = scmp.ne.s32.totalorder %s299, %s302
      %p308 = scmp.eq.s32.totalorder %s27, 0
      %p309 = por %p307, %p308
      %p310 = scmp.ne.s32.totalorder %s299, %s302
      %p311 = scmp.eq.s32.totalorder %s32, 3
      %p312 = por %p310, %p311
      %p313 = scmp.ne.s32.totalorder %s302, %s303
      %p314 = scmp.eq.s32.totalorder %s32, 0
      %p315 = por %p313, %p314
      %p316 = scmp.ne.s32.totalorder %s302, %s303
      %p317 = scmp.eq.s32.totalorder %s33, 3
      %p318 = por %p316, %p317
      %p320 = scmp.ne.s32.totalorder %s303, %s319
      %p321 = scmp.eq.s32.totalorder %s33, 0
      %p322 = por %p320, %p321
      %s323 = ssub.s32 %s35, %s42
      %p324 = scmp.eq.s32.totalorder %s323, 0
      %s326 = sadd.s32 %s325, 1
      %s327 = scalar_select %p324, %s325, %s326
      %p330 = pneg %p324
      %p331 = scmp.eq.s32.totalorder %s27, 3
      %p332 = por %p330, %p331
      %p333 = scmp.ne.s32.totalorder %s325, %s328
      %p334 = scmp.eq.s32.totalorder %s27, 0
      %p335 = por %p333, %p334
      %p336 = scmp.ne.s32.totalorder %s325, %s328
      %p337 = scmp.eq.s32.totalorder %s32, 3
      %p338 = por %p336, %p337
      %p339 = scmp.ne.s32.totalorder %s328, %s329
      %p340 = scmp.eq.s32.totalorder %s32, 0
      %p341 = por %p339, %p340
      %p342 = scmp.ne.s32.totalorder %s328, %s329
      %p343 = scmp.eq.s32.totalorder %s33, 3
      %p344 = por %p342, %p343
      %p346 = scmp.ne.s32.totalorder %s329, %s345
      %p347 = scmp.eq.s32.totalorder %s33, 0
      %p348 = por %p346, %p347
      %s349 = ssub.s32 %s35, %s42
      %p350 = scmp.eq.s32.totalorder %s349, 0
      %s352 = sadd.s32 %s351, 1
      %s353 = scalar_select %p350, %s351, %s352
      %p356 = pneg %p350
      %p357 = scmp.eq.s32.totalorder %s27, 3
      %p358 = por %p356, %p357
      %p359 = scmp.ne.s32.totalorder %s351, %s354
      %p360 = scmp.eq.s32.totalorder %s27, 0
      %p361 = por %p359, %p360
      %p362 = scmp.ne.s32.totalorder %s351, %s354
      %p363 = scmp.eq.s32.totalorder %s32, 3
      %p364 = por %p362, %p363
      %p365 = scmp.ne.s32.totalorder %s354, %s355
      %p366 = scmp.eq.s32.totalorder %s32, 0
      %p367 = por %p365, %p366
      %p368 = scmp.ne.s32.totalorder %s354, %s355
      %p369 = scmp.eq.s32.totalorder %s33, 3
      %p370 = por %p368, %p369
      %p372 = scmp.ne.s32.totalorder %s355, %s371
      %p373 = scmp.eq.s32.totalorder %s33, 0
      %p374 = por %p372, %p373
      %s375 = ssub.s32 %s35, %s42
      %p376 = scmp.eq.s32.totalorder %s375, 0
      %s378 = sadd.s32 %s377, 1
      %s379 = scalar_select %p376, %s377, %s378
      %p382 = pneg %p376
      %p383 = scmp.eq.s32.totalorder %s27, 3
      %p384 = por %p382, %p383
      %p385 = scmp.ne.s32.totalorder %s377, %s380
      %p386 = scmp.eq.s32.totalorder %s27, 0
      %p387 = por %p385, %p386
      %p388 = scmp.ne.s32.totalorder %s377, %s380
      %p389 = scmp.eq.s32.totalorder %s32, 3
      %p390 = por %p388, %p389
      %p391 = scmp.ne.s32.totalorder %s380, %s381
      %p392 = scmp.eq.s32.totalorder %s32, 0
      %p393 = por %p391, %p392
      %p394 = scmp.ne.s32.totalorder %s380, %s381
      %p395 = scmp.eq.s32.totalorder %s33, 3
      %p396 = por %p394, %p395
      %p398 = scmp.ne.s32.totalorder %s381, %s397
      %p399 = scmp.eq.s32.totalorder %s33, 0
      %p400 = por %p398, %p399
      %s402 = sadd.s32 %s401, 1
      %p405 = scmp.eq.s32.totalorder %s27, 3
      %p406 = scmp.ne.s32.totalorder %s401, %s403
      %p407 = scmp.eq.s32.totalorder %s27, 0
      %p408 = por %p406, %p407
      %p409 = scmp.ne.s32.totalorder %s401, %s403
      %p410 = scmp.eq.s32.totalorder %s32, 3
      %p411 = por %p409, %p410
      %p412 = scmp.ne.s32.totalorder %s403, %s404
      %p413 = scmp.eq.s32.totalorder %s32, 0
      %p414 = por %p412, %p413
      %p415 = scmp.ne.s32.totalorder %s403, %s404
      %p416 = scmp.eq.s32.totalorder %s33, 3
      %p417 = por %p415, %p416
      %p419 = scmp.ne.s32.totalorder %s404, %s418
      %p420 = scmp.eq.s32.totalorder %s33, 0
      %p421 = por %p419, %p420
      %s423 = sadd.s32 %s422, 1
      %p426 = scmp.eq.s32.totalorder %s27, 3
      %p427 = scmp.ne.s32.totalorder %s422, %s424
      %p428 = scmp.eq.s32.totalorder %s27, 0
      %p429 = por %p427, %p428
      %p430 = scmp.ne.s32.totalorder %s422, %s424
      %p431 = scmp.eq.s32.totalorder %s32, 3
      %p432 = por %p430, %p431
      %p433 = scmp.ne.s32.totalorder %s424, %s425
      %p434 = scmp.eq.s32.totalorder %s32, 0
      %p435 = por %p433, %p434
      %p436 = scmp.ne.s32.totalorder %s424, %s425
      %p437 = scmp.eq.s32.totalorder %s33, 3
      %p438 = por %p436, %p437
      %p440 = scmp.ne.s32.totalorder %s425, %s439
      %p441 = scmp.eq.s32.totalorder %s33, 0
      %p442 = por %p440, %p441
      %s444 = sadd.s32 %s443, 1
      %p447 = scmp.eq.s32.totalorder %s27, 3
      %p448 = scmp.ne.s32.totalorder %s443, %s445
      %p449 = scmp.eq.s32.totalorder %s27, 0
      %p450 = por %p448, %p449
      %p451 = scmp.ne.s32.totalorder %s443, %s445
      %p452 = scmp.eq.s32.totalorder %s32, 3
      %p453 = por %p451, %p452
      %p454 = scmp.ne.s32.totalorder %s445, %s446
      %p455 = scmp.eq.s32.totalorder %s32, 0
      %p456 = por %p454, %p455
      %p457 = scmp.ne.s32.totalorder %s445, %s446
      %p458 = scmp.eq.s32.totalorder %s33, 3
      %p459 = por %p457, %p458
      %p461 = scmp.ne.s32.totalorder %s446, %s460
      %p462 = scmp.eq.s32.totalorder %s33, 0
      %p463 = por %p461, %p462
      %s465 = sadd.s32 %s464, 1
      %p468 = scmp.eq.s32.totalorder %s27, 3
      %p469 = scmp.ne.s32.totalorder %s464, %s466
      %p470 = scmp.eq.s32.totalorder %s27, 0
      %p471 = por %p469, %p470
      %p472 = scmp.ne.s32.totalorder %s464, %s466
      %p473 = scmp.eq.s32.totalorder %s32, 3
      %p474 = por %p472, %p473
      %p475 = scmp.ne.s32.totalorder %s466, %s467
      %p476 = scmp.eq.s32.totalorder %s32, 0
      %p477 = por %p475, %p476
      %p478 = scmp.ne.s32.totalorder %s466, %s467
      %p479 = scmp.eq.s32.totalorder %s33, 3
      %p480 = por %p478, %p479
      %p482 = scmp.ne.s32.totalorder %s467, %s481
      %p483 = scmp.eq.s32.totalorder %s33, 0
      %p484 = por %p482, %p483
      %s485 = ssub.s32 %s34, %s46
      %p486 = scmp.eq.s32.totalorder %s485, 0
      %s488 = sadd.s32 %s487, 1
      %s489 = scalar_select %p486, %s487, %s488
      %p492 = pneg %p486
      %p493 = scmp.eq.s32.totalorder %s27, 3
      %p494 = por %p492, %p493
      %p495 = scmp.ne.s32.totalorder %s487, %s490
      %p496 = scmp.eq.s32.totalorder %s27, 0
      %p497 = por %p495, %p496
      %p498 = scmp.ne.s32.totalorder %s487, %s490
      %p499 = scmp.eq.s32.totalorder %s32, 3
      %p500 = por %p498, %p499
      %p501 = scmp.ne.s32.totalorder %s490, %s491
      %p502 = scmp.eq.s32.totalorder %s32, 0
      %p503 = por %p501, %p502
      %p504 = scmp.ne.s32.totalorder %s490, %s491
      %p505 = scmp.eq.s32.totalorder %s33, 3
      %p506 = por %p504, %p505
      %p508 = scmp.ne.s32.totalorder %s491, %s507
      %p509 = scmp.eq.s32.totalorder %s33, 0
      %p510 = por %p508, %p509
      %p511 = scmp.le.s32.totalorder 1, %s27
      %p512 = scmp.lt.s32.totalorder %s27, 5
      %p513 = pnand %p511, %p512
      %p514 = pneg %p513
      // Predicated region
      $region9: #{vit_forward.1} parent=5 // pred_check
        _
      $region10: #{vit_forward.1} parent=5 // pred_check_branch
        %516 = sbr.rel (%p513) target = $region12
      $region11: #{vit_forward.1} parent=5 // pred_region
        %s517 = ssub.s32 %s27, 1
        // Predicated region
        $region13: #{vit_forward.1} parent=11 // pred_check
          %p518 = pneg %p86
        $region14: #{vit_forward.1} parent=11 // pred_check_branch
          %520 = sbr.rel (%p518) target = $region16
        $region15: #{vit_forward.1} parent=11 // pred_region
          _
        $region16: #{vit_forward.1} parent=11 // pred_fallthru
          _
        // Predicated region
        $region17: #{vit_forward.1} parent=11 // pred_check
          %p521 = pneg %p107
        $region18: #{vit_forward.1} parent=11 // pred_check_branch
          %523 = sbr.rel (%p521) target = $region20
        $region19: #{vit_forward.1} parent=11 // pred_region
          _
        $region20: #{vit_forward.1} parent=11 // pred_fallthru
          _
        // Predicated region
        $region21: #{vit_forward.1} parent=11 // pred_check
          %p524 = pneg %p414
        $region22: #{vit_forward.1} parent=11 // pred_check_branch
          %526 = sbr.rel (%p524) target = $region24
        $region23: #{vit_forward.1} parent=11 // pred_region
          _
        $region24: #{vit_forward.1} parent=11 // pred_fallthru
          _
        // Predicated region
        $region25: #{vit_forward.1} parent=11 // pred_check
          %p527 = pneg %p435
        $region26: #{vit_forward.1} parent=11 // pred_check_branch
          %529 = sbr.rel (%p527) target = $region28
        $region27: #{vit_forward.1} parent=11 // pred_region
          _
        $region28: #{vit_forward.1} parent=11 // pred_fallthru
          _
        // Predicated region
        $region29: #{vit_forward.1} parent=11 // pred_check
          %p530 = pneg %p456
        $region30: #{vit_forward.1} parent=11 // pred_check_branch
          %532 = sbr.rel (%p530) target = $region32
        $region31: #{vit_forward.1} parent=11 // pred_region
          _
        $region32: #{vit_forward.1} parent=11 // pred_fallthru
          _
        // Predicated region
        $region33: #{vit_forward.1} parent=11 // pred_check
          %p533 = pneg %p477
        $region34: #{vit_forward.1} parent=11 // pred_check_branch
          %535 = sbr.rel (%p533) target = $region36
        $region35: #{vit_forward.1} parent=11 // pred_region
          _
        $region36: #{vit_forward.1} parent=11 // pred_fallthru
          _
      $region12: #{vit_forward.1} parent=5 // pred_fallthru
        _
      %p536 = scmp.lt.s32.totalorder %s27, 4
      // Predicated region
      $region37: #{vit_forward.1} parent=5 // pred_check
        %p537 = pneg %p536
      $region38: #{vit_forward.1} parent=5 // pred_check_branch
        %539 = sbr.rel (%p537) target = $region40
      $region39: #{vit_forward.1} parent=5 // pred_region
        // Predicated region
        $region41: #{vit_forward.1} parent=39 // pred_check
          %p540 = pneg %p59
        $region42: #{vit_forward.1} parent=39 // pred_check_branch
          %542 = sbr.rel (%p540) target = $region44
        $region43: #{vit_forward.1} parent=39 // pred_region
          %p543 = scmp.lt.s32.totalorder %s34, 1
          %s544 = scalar_select %p543, %s34, 1
          %s545 = smul.addr %s544, 3
          %s546 = smul.addr %s545, 4
          %s547 = scalar_lea.vmem %s0, %s546
        $region44: #{vit_forward.1} parent=39 // pred_fallthru
          _
        // Predicated region
        $region45: #{vit_forward.1} parent=39 // pred_check
          %p548 = pneg %p127
        $region46: #{vit_forward.1} parent=39 // pred_check_branch
          %550 = sbr.rel (%p548) target = $region48
        $region47: #{vit_forward.1} parent=39 // pred_region
          %p551 = scmp.lt.s32.totalorder %s35, 1
          %s552 = scalar_select %p551, %s35, 1
          %s553 = scalar_lea.vmem %s3, %s552
        $region48: #{vit_forward.1} parent=39 // pred_fallthru
          _
        // Predicated region
        $region49: #{vit_forward.1} parent=39 // pred_check
          %p554 = pneg %p153
        $region50: #{vit_forward.1} parent=39 // pred_check_branch
          %556 = sbr.rel (%p554) target = $region52
        $region51: #{vit_forward.1} parent=39 // pred_region
          %p557 = scmp.lt.s32.totalorder %s35, 1
          %s558 = scalar_select %p557, %s35, 1
          %s559 = scalar_lea.vmem %s4, %s558
        $region52: #{vit_forward.1} parent=39 // pred_fallthru
          _
        // Predicated region
        $region53: #{vit_forward.1} parent=39 // pred_check
          %p560 = pneg %p179
        $region54: #{vit_forward.1} parent=39 // pred_check_branch
          %562 = sbr.rel (%p560) target = $region56
        $region55: #{vit_forward.1} parent=39 // pred_region
          %p563 = scmp.lt.s32.totalorder %s35, 1
          %s564 = scalar_select %p563, %s35, 1
          %s565 = smul.addr %s564, 48
          %s566 = smul.addr %s565, 4
          %s567 = scalar_lea.vmem %s5, %s566
        $region56: #{vit_forward.1} parent=39 // pred_fallthru
          _
        // Predicated region
        $region57: #{vit_forward.1} parent=39 // pred_check
          %p568 = pneg %p205
        $region58: #{vit_forward.1} parent=39 // pred_check_branch
          %570 = sbr.rel (%p568) target = $region60
        $region59: #{vit_forward.1} parent=39 // pred_region
          %p571 = scmp.lt.s32.totalorder %s35, 1
          %s572 = scalar_select %p571, %s35, 1
          %s573 = smul.addr %s572, 4
          %s574 = smul.addr %s573, 4
          %s575 = scalar_lea.vmem %s6, %s574
        $region60: #{vit_forward.1} parent=39 // pred_fallthru
          _
        // Predicated region
        $region61: #{vit_forward.1} parent=39 // pred_check
          %p576 = pneg %p231
        $region62: #{vit_forward.1} parent=39 // pred_check_branch
          %578 = sbr.rel (%p576) target = $region64
        $region63: #{vit_forward.1} parent=39 // pred_region
          %p579 = scmp.lt.s32.totalorder %s35, 1
          %s580 = scalar_select %p579, %s35, 1
          %s581 = scalar_lea.vmem %s7, %s580
        $region64: #{vit_forward.1} parent=39 // pred_fallthru
          _
        // Predicated region
        $region65: #{vit_forward.1} parent=39 // pred_check
          %p582 = pneg %p257
        $region66: #{vit_forward.1} parent=39 // pred_check_branch
          %584 = sbr.rel (%p582) target = $region68
        $region67: #{vit_forward.1} parent=39 // pred_region
          %p585 = scmp.lt.s32.totalorder %s35, 1
          %s586 = scalar_select %p585, %s35, 1
          %s587 = scalar_lea.vmem %s8, %s586
        $region68: #{vit_forward.1} parent=39 // pred_fallthru
          _
        // Predicated region
        $region69: #{vit_forward.1} parent=39 // pred_check
          %p588 = pneg %p283
        $region70: #{vit_forward.1} parent=39 // pred_check_branch
          %590 = sbr.rel (%p588) target = $region72
        $region71: #{vit_forward.1} parent=39 // pred_region
          %p591 = scmp.lt.s32.totalorder %s35, 1
          %s592 = scalar_select %p591, %s35, 1
          %s593 = scalar_lea.vmem %s9, %s592
        $region72: #{vit_forward.1} parent=39 // pred_fallthru
          _
        // Predicated region
        $region73: #{vit_forward.1} parent=39 // pred_check
          %p594 = pneg %p309
        $region74: #{vit_forward.1} parent=39 // pred_check_branch
          %596 = sbr.rel (%p594) target = $region76
        $region75: #{vit_forward.1} parent=39 // pred_region
          %p597 = scmp.lt.s32.totalorder %s35, 1
          %s598 = scalar_select %p597, %s35, 1
          %s599 = smul.addr %s598, 4
          %s600 = smul.addr %s599, 4
          %s601 = scalar_lea.vmem %s10, %s600
        $region76: #{vit_forward.1} parent=39 // pred_fallthru
          _
        // Predicated region
        $region77: #{vit_forward.1} parent=39 // pred_check
          %p602 = pneg %p335
        $region78: #{vit_forward.1} parent=39 // pred_check_branch
          %604 = sbr.rel (%p602) target = $region80
        $region79: #{vit_forward.1} parent=39 // pred_region
          %p605 = scmp.lt.s32.totalorder %s35, 1
          %s606 = scalar_select %p605, %s35, 1
          %s607 = scalar_lea.vmem %s11, %s606
        $region80: #{vit_forward.1} parent=39 // pred_fallthru
          _
        // Predicated region
        $region81: #{vit_forward.1} parent=39 // pred_check
          %p608 = pneg %p361
        $region82: #{vit_forward.1} parent=39 // pred_check_branch
          %610 = sbr.rel (%p608) target = $region84
        $region83: #{vit_forward.1} parent=39 // pred_region
          %p611 = scmp.lt.s32.totalorder %s35, 1
          %s612 = scalar_select %p611, %s35, 1
          %s613 = smul.addr %s612, 8
          %s614 = smul.addr %s613, 4
          %s615 = scalar_lea.vmem %s12, %s614
        $region84: #{vit_forward.1} parent=39 // pred_fallthru
          _
        // Predicated region
        $region85: #{vit_forward.1} parent=39 // pred_check
          %p616 = pneg %p387
        $region86: #{vit_forward.1} parent=39 // pred_check_branch
          %618 = sbr.rel (%p616) target = $region88
        $region87: #{vit_forward.1} parent=39 // pred_region
          %p619 = scmp.lt.s32.totalorder %s35, 1
          %s620 = scalar_select %p619, %s35, 1
          %s621 = scalar_lea.vmem %s13, %s620
        $region88: #{vit_forward.1} parent=39 // pred_fallthru
          _
      $region40: #{vit_forward.1} parent=5 // pred_fallthru
        _
      %p622 = scmp.le.s32.totalorder 1, %s27
      %p623 = scmp.lt.s32.totalorder %s27, 5
      %p624 = pnand %p622, %p623
      %p625 = pneg %p624
      // Predicated region
      $region89: #{vit_forward.1} parent=5 // pred_check
        _
      $region90: #{vit_forward.1} parent=5 // pred_check_branch
        %627 = sbr.rel (%p624) target = $region92
      $region91: #{vit_forward.1} parent=5 // pred_region
        %s628 = ssub.s32 %s27, 1
        %p629 = scmp.lt.s32.totalorder %s36, 1
        %s630 = scalar_select %p629, %s36, 1
        %s631 = smul.addr %s630, 3
        %s632 = smul.addr %s631, 4
        %s633 = scalar_lea.vmem %s0, %s632
        %p634 = pneg %p65
        %p635 = pneg %p62
        %p636 = pneg %p86
        %p637 = pneg %p83
        %p638 = pneg %p107
        %p639 = pneg %p104
        %p640 = scmp.lt.s32.totalorder %s37, 1
        %s641 = scalar_select %p640, %s37, 1
        %s642 = scalar_lea.vmem %s3, %s641
        %p643 = pneg %p133
        %p644 = pneg %p130
        %p645 = scmp.lt.s32.totalorder %s37, 1
        %s646 = scalar_select %p645, %s37, 1
        %s647 = scalar_lea.vmem %s4, %s646
        %p648 = pneg %p159
        %p649 = pneg %p156
        %p650 = scmp.lt.s32.totalorder %s37, 1
        %s651 = scalar_select %p650, %s37, 1
        %s652 = smul.addr %s651, 48
        %s653 = smul.addr %s652, 4
        %s654 = scalar_lea.vmem %s5, %s653
        %p655 = pneg %p185
        %p656 = pneg %p182
        %p657 = scmp.lt.s32.totalorder %s37, 1
        %s658 = scalar_select %p657, %s37, 1
        %s659 = smul.addr %s658, 4
        %s660 = smul.addr %s659, 4
        %s661 = scalar_lea.vmem %s6, %s660
        %p662 = pneg %p211
        %p663 = pneg %p208
        %p664 = scmp.lt.s32.totalorder %s37, 1
        %s665 = scalar_select %p664, %s37, 1
        %s666 = scalar_lea.vmem %s7, %s665
        %p667 = pneg %p237
        %p668 = pneg %p234
        %p669 = scmp.lt.s32.totalorder %s37, 1
        %s670 = scalar_select %p669, %s37, 1
        %s671 = scalar_lea.vmem %s8, %s670
        %p672 = pneg %p263
        %p673 = pneg %p260
        %p674 = scmp.lt.s32.totalorder %s37, 1
        %s675 = scalar_select %p674, %s37, 1
        %s676 = scalar_lea.vmem %s9, %s675
        %p677 = pneg %p289
        %p678 = pneg %p286
        %p679 = scmp.lt.s32.totalorder %s37, 1
        %s680 = scalar_select %p679, %s37, 1
        %s681 = smul.addr %s680, 4
        %s682 = smul.addr %s681, 4
        %s683 = scalar_lea.vmem %s10, %s682
        %p684 = pneg %p315
        %p685 = pneg %p312
        %p686 = scmp.lt.s32.totalorder %s37, 1
        %s687 = scalar_select %p686, %s37, 1
        %s688 = scalar_lea.vmem %s11, %s687
        %p689 = pneg %p341
        %p690 = pneg %p338
        %p691 = scmp.lt.s32.totalorder %s37, 1
        %s692 = scalar_select %p691, %s37, 1
        %s693 = smul.addr %s692, 8
        %s694 = smul.addr %s693, 4
        %s695 = scalar_lea.vmem %s12, %s694
        %p696 = pneg %p367
        %p697 = pneg %p364
        %p698 = scmp.lt.s32.totalorder %s37, 1
        %s699 = scalar_select %p698, %s37, 1
        %s700 = scalar_lea.vmem %s13, %s699
        %p701 = pneg %p393
        %p702 = pneg %p390
        %p703 = pneg %p414
        %p704 = pneg %p411
        %p705 = pneg %p435
        %p706 = pneg %p432
        %p707 = pneg %p456
        %p708 = pneg %p453
        %p709 = pneg %p477
        %p710 = pneg %p474
        %p711 = pneg %p503
        %p712 = pneg %p500
        %s713 = sand.u32 %s490, 1
        %s714 = scalar_lea.sflag [#allocation4], %s713
        %s715 = sand.u32 %s490, 1
        %s716 = scalar_lea.vmem [#allocation3], %s715
        %p717 = scmp.lt.s32.totalorder %s36, 1
        %s718 = scalar_select %p717, %s36, 1
        %s719 = smul.addr %s718, 3
        %s720 = smul.addr %s719, 4
        %s721 = scalar_lea.vmem %s0, %s720
        %p722 = scmp.lt.s32.totalorder %s37, 1
        %s723 = scalar_select %p722, %s37, 1
        %s724 = scalar_lea.vmem %s3, %s723
        %p725 = scmp.lt.s32.totalorder %s37, 1
        %s726 = scalar_select %p725, %s37, 1
        %s727 = scalar_lea.vmem %s4, %s726
        %p728 = scmp.lt.s32.totalorder %s37, 1
        %s729 = scalar_select %p728, %s37, 1
        %s730 = smul.addr %s729, 48
        %s731 = smul.addr %s730, 4
        %s732 = scalar_lea.vmem %s5, %s731
        %p733 = scmp.lt.s32.totalorder %s37, 1
        %s734 = scalar_select %p733, %s37, 1
        %s735 = smul.addr %s734, 4
        %s736 = smul.addr %s735, 4
        %s737 = scalar_lea.vmem %s6, %s736
        %p738 = scmp.lt.s32.totalorder %s37, 1
        %s739 = scalar_select %p738, %s37, 1
        %s740 = scalar_lea.vmem %s7, %s739
        %p741 = scmp.lt.s32.totalorder %s37, 1
        %s742 = scalar_select %p741, %s37, 1
        %s743 = scalar_lea.vmem %s8, %s742
        %p744 = scmp.lt.s32.totalorder %s37, 1
        %s745 = scalar_select %p744, %s37, 1
        %s746 = scalar_lea.vmem %s9, %s745
        %p747 = scmp.lt.s32.totalorder %s37, 1
        %s748 = scalar_select %p747, %s37, 1
        %s749 = smul.addr %s748, 4
        %s750 = smul.addr %s749, 4
        %s751 = scalar_lea.vmem %s10, %s750
        %p752 = scmp.lt.s32.totalorder %s37, 1
        %s753 = scalar_select %p752, %s37, 1
        %s754 = scalar_lea.vmem %s11, %s753
        %p755 = scmp.lt.s32.totalorder %s37, 1
        %s756 = scalar_select %p755, %s37, 1
        %s757 = smul.addr %s756, 8
        %s758 = smul.addr %s757, 4
        %s759 = scalar_lea.vmem %s12, %s758
        %p760 = scmp.lt.s32.totalorder %s37, 1
        %s761 = scalar_select %p760, %s37, 1
        %s762 = scalar_lea.vmem %s13, %s761
        %p764 = scmp.eq.s32.totalorder %s37, 0
        // Predicated region
        $region93: #{vit_forward.1} parent=91 // pred_check
          %p765 = pneg %p764
        $region94: #{vit_forward.1} parent=91 // pred_check_branch
          %767 = sbr.rel (%p765) target = $region96
        $region95: #{vit_forward.1} parent=91 // pred_region
          %v768 = vld [vmem:[%s721] sm:$0xf]
          %v769 = vld [vmem:[%s721 + $0x4] sm:$0xf]
          %v770 = vld [vmem:[%s721 + $0x8] sm:$0xf]
          %v771 = vld [vmem:[%s1] sm:$0xf]
          %v772 = vld [vmem:[%s1 + $0x4] sm:$0xf]
          %v773 = vld [vmem:[%s1 + $0x8] sm:$0xf]
          %v774 = vld [vmem:[%s1 + $0xc] sm:$0xf]
          %v775 = vld [vmem:[%s1 + $0x10] sm:$0xf]
          %v776 = vld [vmem:[%s1 + $0x14] sm:$0xf]
          %v777 = vld [vmem:[%s1 + $0x18] sm:$0xf]
          %v778 = vld [vmem:[%s1 + $0x1c] sm:$0xf]
          %v779 = vld [vmem:[%s2] sm:$0xff]
          %v780 = vld [vmem:[%s2 + $0x8] sm:$0xff]
          %v781 = vld [vmem:[%s2 + $0x10] sm:$0xff]
          %v785 = vunpack.c.l.b16 %v768
          %v786 = vunpack.c.l.b16 %v769
          %v787 = vunpack.c.l.b16 %v770
          %v788 = vpack.c.b16 %v786, %v785
          %v789 = vpack.c.b16 %v787, %v787
          %v798 = vunpack.c.l.b16 %v771
          %v799 = vunpack.c.l.b16 %v772
          %v800 = vunpack.c.l.b16 %v773
          %v801 = vunpack.c.l.b16 %v774
          %v802 = vunpack.c.l.b16 %v775
          %v803 = vunpack.c.l.b16 %v776
          %v804 = vunpack.c.l.b16 %v777
          %v805 = vunpack.c.l.b16 %v778
          %v806 = vpack.c.b16 %v799, %v798
          %v807 = vpack.c.b16 %v801, %v800
          %v808 = vpack.c.b16 %v803, %v802
          %v809 = vpack.c.b16 %v805, %v804
          %vm814 = vcmask 523264
          %v816 = vsel %vm814, %v788, 0
          %v819 = vsel %vm814, %v789, 0
          %821 = vmatprep.subr.bf16.mxu0 0
          %822 = vmatpush1.bf16.msra.mxu0 %v806
          %823 = vmatprep.subr.bf16.mxu0 0
          %824 = vmatpush1.bf16.msra.mxu0 %v807
          %825 = vmatprep.subr.bf16.mxu0 0
          %826 = vmatpush1.bf16.msra.mxu0 %v808
          %827 = vmatprep.subr.bf16.mxu0 0
          %828 = vmatpush1.bf16.msra.mxu0 %v809
          %829 = vmatprep.subr.bf16.mxu0 0
          %830 = vmatpush1.bf16.msra.mxu0 0
          %831 = vmatprep.subr.bf16.mxu0 0
          %832 = vmatpush1.bf16.msra.mxu0 0
          %833 = vmatprep.subr.bf16.mxu0 0
          %834 = vmatpush1.bf16.msra.mxu0 0
          %835 = vmatprep.subr.bf16.mxu0 0
          %836 = vmatpush1.bf16.msra.mxu0 0
          %837 = vmatprep.subr.bf16.mxu0 0
          %838 = vmatpush1.bf16.msra.mxu0 0
          %839 = vmatprep.subr.bf16.mxu0 0
          %840 = vmatpush1.bf16.msra.mxu0 0
          %841 = vmatprep.subr.bf16.mxu0 0
          %842 = vmatpush1.bf16.msra.mxu0 0
          %843 = vmatprep.subr.bf16.mxu0 0
          %844 = vmatpush1.bf16.msra.mxu0 0
          %845 = vmatprep.subr.bf16.mxu0 0
          %846 = vmatpush1.bf16.msra.mxu0 0
          %847 = vmatprep.subr.bf16.mxu0 0
          %848 = vmatpush1.bf16.msra.mxu0 0
          %849 = vmatprep.subr.bf16.mxu0 0
          %850 = vmatpush1.bf16.msra.mxu0 0
          %851 = vmatprep.subr.bf16.mxu0 0
          %852 = vmatpush1.bf16.msra.mxu0 0
          %853 = vmatprep.mubr.bf16.mxu0 0
          %854 = vmatmul.mubr.bf16.gmra.mrb[0].mxu0 %v816
          %v855 = vpop.f32.mrb[0].mxu0
          %v856 = vadd.f32 %v779, %v855
          %v857 = vpop.f32.mrb[0].mxu0
          %v858 = vpop.f32.mrb[0].mxu0
          %v859 = vadd.f32 %v780, %v858
          %v860 = vpop.f32.mrb[0].mxu0
          %861 = vmatprep.mubr.bf16.mxu0 0
          %862 = vmatmul.mubr.bf16.gmra.mrb[0].mxu0 %v819
          %v863 = vpop.f32.mrb[0].mxu0
          %v864 = vadd.f32 %v781, %v863
          %v865 = vpop.f32.mrb[0].mxu0
          %v866 = vpop.f32.mrb[0].mxu0
          %v867 = vpop.f32.mrb[0].mxu0
          %868 = vdwg.mxu0
          %vm869 = vcmask 261120
          %870 = vst.msk [vmem:[#allocation2] sm:$0xff] %vm869, %v856
          %871 = vst.msk [vmem:[#allocation2 + $0x8] sm:$0xff] %vm869, %v859
          %872 = vst.msk [vmem:[#allocation2 + $0x10] sm:$0xff] %vm869, %v864
        $region96: #{vit_forward.1} parent=91 // pred_fallthru
          _
        %v873 = vld [vmem:[#allocation2] sm:$0xff]
        %v874 = vld [vmem:[#allocation2 + $0x8] sm:$0xff]
        %v875 = vld [vmem:[#allocation2 + $0x10] sm:$0xff]
        %v876 = vld [vmem:[%s724] sm:$0x1]
        %v877 = vld [vmem:[%s727] sm:$0x1]
        %vm878 = vcmask 261120
        %v879 = vsel %vm878, %v873, 0.0
        %880 = vadd.xlane.f32.xlu0 %v879
        %v881 = vpop.xlane.xlu0 %880
        %v882 = vsel %vm878, %v874, 0.0
        %883 = vadd.xlane.f32.xlu0 %v882
        %v884 = vpop.xlane.xlu0 %883
        %v885 = vsel %vm878, %v875, 0.0
        %886 = vadd.xlane.f32.xlu0 %v885
        %v887 = vpop.xlane.xlu0 %886
        %v888 = vrcp.pop 32.0
        %v889 = vmul.f32 %v881, %v888
        %v890 = vmul.f32 %v884, %v888
        %v891 = vmul.f32 %v887, %v888
        %v892 = vsub.f32 %v873, %v889
        %v893 = vsub.f32 %v874, %v890
        %v894 = vsub.f32 %v875, %v891
        %v895 = vmul.f32 %v892, %v892
        %v896 = vmul.f32 %v893, %v893
        %v897 = vmul.f32 %v894, %v894
        %v898 = vsel %vm878, %v895, 0.0
        %899 = vadd.xlane.f32.xlu0 %v898
        %v900 = vpop.xlane.xlu0 %899
        %v901 = vsel %vm878, %v896, 0.0
        %902 = vadd.xlane.f32.xlu0 %v901
        %v903 = vpop.xlane.xlu0 %902
        %v904 = vsel %vm878, %v897, 0.0
        %905 = vadd.xlane.f32.xlu0 %v904
        %v906 = vpop.xlane.xlu0 %905
        %v907 = vmul.f32 %v900, %v888
        %v908 = vmul.f32 %v903, %v888
        %v909 = vmul.f32 %v906, %v888
        %v910 = vadd.f32 %v907, 1e-05
        %v911 = vadd.f32 %v908, 1e-05
        %v912 = vadd.f32 %v909, 1e-05
        %v913 = vrsqrt.pop %v910
        %v914 = vrsqrt.pop %v911
        %v915 = vrsqrt.pop %v912
        %v916 = vmul.f32 %v892, %v913
        %v917 = vmul.f32 %v893, %v914
        %v918 = vmul.f32 %v894, %v915
        %v920 = vlaneseq
        %v921 = vshrl.u32 %v920, 7
        %v922 = vsub.s32 0, %v921
        %v923 = vrot.slane %v876, %v922
        %v925 = vmul.f32 %v916, %v923
        %v926 = vmul.f32 %v917, %v923
        %v927 = vmul.f32 %v918, %v923
        %v929 = vlaneseq
        %v930 = vshrl.u32 %v929, 7
        %v931 = vsub.s32 0, %v930
        %v932 = vrot.slane %v877, %v931
        %v934 = vadd.f32 %v925, %v932
        %v935 = vadd.f32 %v926, %v932
        %v936 = vadd.f32 %v927, %v932
        %v937 = vpack.c.bf16 %v935, %v934
        %v938 = vpack.c.bf16 %v936, %v936
        %v939 = vld [vmem:[%s732] sm:$0xf]
        %v940 = vld [vmem:[%s732 + $0x4] sm:$0xf]
        %v941 = vld [vmem:[%s732 + $0x8] sm:$0xf]
        %v942 = vld [vmem:[%s732 + $0xc] sm:$0xf]
        %v943 = vld [vmem:[%s732 + $0x10] sm:$0xf]
        %v944 = vld [vmem:[%s732 + $0x14] sm:$0xf]
        %v945 = vld [vmem:[%s732 + $0x18] sm:$0xf]
        %v946 = vld [vmem:[%s732 + $0x1c] sm:$0xf]
        %v947 = vld [vmem:[%s732 + $0x20] sm:$0xf]
        %v948 = vld [vmem:[%s732 + $0x24] sm:$0xf]
        %v949 = vld [vmem:[%s732 + $0x28] sm:$0xf]
        %v950 = vld [vmem:[%s732 + $0x2c] sm:$0xf]
        %v951 = vld [vmem:[%s732 + $0x30] sm:$0xf]
        %v952 = vld [vmem:[%s732 + $0x34] sm:$0xf]
        %v953 = vld [vmem:[%s732 + $0x38] sm:$0xf]
        %v954 = vld [vmem:[%s732 + $0x3c] sm:$0xf]
        %v955 = vld [vmem:[%s732 + $0x40] sm:$0xf]
        %v956 = vld [vmem:[%s732 + $0x44] sm:$0xf]
        %v957 = vld [vmem:[%s732 + $0x48] sm:$0xf]
        %v958 = vld [vmem:[%s732 + $0x4c] sm:$0xf]
        %v959 = vld [vmem:[%s732 + $0x50] sm:$0xf]
        %v960 = vld [vmem:[%s732 + $0x54] sm:$0xf]
        %v961 = vld [vmem:[%s732 + $0x58] sm:$0xf]
        %v962 = vld [vmem:[%s732 + $0x5c] sm:$0xf]
        %v963 = vld [vmem:[%s732 + $0x60] sm:$0xf]
        %v964 = vld [vmem:[%s732 + $0x64] sm:$0xf]
        %v965 = vld [vmem:[%s732 + $0x68] sm:$0xf]
        %v966 = vld [vmem:[%s732 + $0x6c] sm:$0xf]
        %v967 = vld [vmem:[%s732 + $0x70] sm:$0xf]
        %v968 = vld [vmem:[%s732 + $0x74] sm:$0xf]
        %v969 = vld [vmem:[%s732 + $0x78] sm:$0xf]
        %v970 = vld [vmem:[%s732 + $0x7c] sm:$0xf]
        %v971 = vld [vmem:[%s732 + $0x80] sm:$0xf]
        %v972 = vld [vmem:[%s732 + $0x84] sm:$0xf]
        %v973 = vld [vmem:[%s732 + $0x88] sm:$0xf]
        %v974 = vld [vmem:[%s732 + $0x8c] sm:$0xf]
        %v975 = vld [vmem:[%s732 + $0x90] sm:$0xf]
        %v976 = vld [vmem:[%s732 + $0x94] sm:$0xf]
        %v977 = vld [vmem:[%s732 + $0x98] sm:$0xf]
        %v978 = vld [vmem:[%s732 + $0x9c] sm:$0xf]
        %v979 = vld [vmem:[%s732 + $0xa0] sm:$0xf]
        %v980 = vld [vmem:[%s732 + $0xa4] sm:$0xf]
        %v981 = vld [vmem:[%s732 + $0xa8] sm:$0xf]
        %v982 = vld [vmem:[%s732 + $0xac] sm:$0xf]
        %v983 = vld [vmem:[%s732 + $0xb0] sm:$0xf]
        %v984 = vld [vmem:[%s732 + $0xb4] sm:$0xf]
        %v985 = vld [vmem:[%s732 + $0xb8] sm:$0xf]
        %v986 = vld [vmem:[%s732 + $0xbc] sm:$0xf]
        %v991 = vunpack.c.l.b16 %v939
        %v992 = vunpack.c.l.b16 %v940
        %v993 = vunpack.c.l.b16 %v941
        %v994 = vunpack.c.l.b16 %v942
        %v995 = vpack.c.b16 %v992, %v991
        %v996 = vpack.c.b16 %v994, %v993
        %v1000 = vsel %vm878, %v937, 0
        %v1003 = vsel %vm878, %v938, 0
        %1005 = vmatprep.subr.bf16.mxu0 0
        %1006 = vmatpush1.bf16.msra.mxu0 %v995
        %1007 = vmatprep.subr.bf16.mxu0 0
        %1008 = vmatpush1.bf16.msra.mxu0 %v996
        %1009 = vmatprep.subr.bf16.mxu0 0
        %1010 = vmatpush1.bf16.msra.mxu0 0
        %1011 = vmatprep.subr.bf16.mxu0 0
        %1012 = vmatpush1.bf16.msra.mxu0 0
        %1013 = vmatprep.subr.bf16.mxu0 0
        %1014 = vmatpush1.bf16.msra.mxu0 0
        %1015 = vmatprep.subr.bf16.mxu0 0
        %1016 = vmatpush1.bf16.msra.mxu0 0
        %1017 = vmatprep.subr.bf16.mxu0 0
        %1018 = vmatpush1.bf16.msra.mxu0 0
        %1019 = vmatprep.subr.bf16.mxu0 0
        %1020 = vmatpush1.bf16.msra.mxu0 0
        %1021 = vmatprep.subr.bf16.mxu0 0
        %1022 = vmatpush1.bf16.msra.mxu0 0
        %1023 = vmatprep.subr.bf16.mxu0 0
        %1024 = vmatpush1.bf16.msra.mxu0 0
        %1025 = vmatprep.subr.bf16.mxu0 0
        %1026 = vmatpush1.bf16.msra.mxu0 0
        %1027 = vmatprep.subr.bf16.mxu0 0
        %1028 = vmatpush1.bf16.msra.mxu0 0
        %1029 = vmatprep.subr.bf16.mxu0 0
        %1030 = vmatpush1.bf16.msra.mxu0 0
        %1031 = vmatprep.subr.bf16.mxu0 0
        %1032 = vmatpush1.bf16.msra.mxu0 0
        %1033 = vmatprep.subr.bf16.mxu0 0
        %1034 = vmatpush1.bf16.msra.mxu0 0
        %1035 = vmatprep.subr.bf16.mxu0 0
        %1036 = vmatpush1.bf16.msra.mxu0 0
        %1037 = vmatprep.mubr.bf16.mxu0 0
        %1038 = vmatmul.mubr.bf16.gmra.mrb[0].mxu0 %v1000
        %v1039 = vpop.f32.mrb[0].mxu0
        %v1040 = vadd.f32 0.0, %v1039
        %v1041 = vpop.f32.mrb[0].mxu0
        %v1042 = vpop.f32.mrb[0].mxu0
        %v1043 = vadd.f32 0.0, %v1042
        %v1044 = vpop.f32.mrb[0].mxu0
        %1045 = vmatprep.mubr.bf16.mxu0 0
        %1046 = vmatmul.mubr.bf16.gmra.mrb[0].mxu0 %v1003
        %v1047 = vpop.f32.mrb[0].mxu0
        %v1048 = vadd.f32 0.0, %v1047
        %v1049 = vpop.f32.mrb[0].mxu0
        %v1050 = vpop.f32.mrb[0].mxu0
        %v1051 = vpop.f32.mrb[0].mxu0
        %1052 = vdwg.mxu0
        %v1057 = vunpack.c.l.b16 %v943
        %v1058 = vunpack.c.l.b16 %v944
        %v1059 = vunpack.c.l.b16 %v945
        %v1060 = vunpack.c.l.b16 %v946
        %v1061 = vpack.c.b16 %v1058, %v1057
        %v1062 = vpack.c.b16 %v1060, %v1059
        %1065 = vmatprep.subr.bf16.mxu0 0
        %1066 = vmatpush1.bf16.msra.mxu0 %v1061
        %1067 = vmatprep.subr.bf16.mxu0 0
        %1068 = vmatpush1.bf16.msra.mxu0 %v1062
        %1069 = vmatprep.subr.bf16.mxu0 0
        %1070 = vmatpush1.bf16.msra.mxu0 0
        %1071 = vmatprep.subr.bf16.mxu0 0
        %1072 = vmatpush1.bf16.msra.mxu0 0
        %1073 = vmatprep.subr.bf16.mxu0 0
        %1074 = vmatpush1.bf16.msra.mxu0 0
        %1075 = vmatprep.subr.bf16.mxu0 0
        %1076 = vmatpush1.bf16.msra.mxu0 0
        %1077 = vmatprep.subr.bf16.mxu0 0
        %1078 = vmatpush1.bf16.msra.mxu0 0
        %1079 = vmatprep.subr.bf16.mxu0 0
        %1080 = vmatpush1.bf16.msra.mxu0 0
        %1081 = vmatprep.subr.bf16.mxu0 0
        %1082 = vmatpush1.bf16.msra.mxu0 0
        %1083 = vmatprep.subr.bf16.mxu0 0
        %1084 = vmatpush1.bf16.msra.mxu0 0
        %1085 = vmatprep.subr.bf16.mxu0 0
        %1086 = vmatpush1.bf16.msra.mxu0 0
        %1087 = vmatprep.subr.bf16.mxu0 0
        %1088 = vmatpush1.bf16.msra.mxu0 0
        %1089 = vmatprep.subr.bf16.mxu0 0
        %1090 = vmatpush1.bf16.msra.mxu0 0
        %1091 = vmatprep.subr.bf16.mxu0 0
        %1092 = vmatpush1.bf16.msra.mxu0 0
        %1093 = vmatprep.subr.bf16.mxu0 0
        %1094 = vmatpush1.bf16.msra.mxu0 0
        %1095 = vmatprep.subr.bf16.mxu0 0
        %1096 = vmatpush1.bf16.msra.mxu0 0
        %1097 = vmatprep.mubr.bf16.mxu0 0
        %1098 = vmatmul.mubr.bf16.gmra.mrb[0].mxu0 %v1000
        %v1099 = vpop.f32.mrb[0].mxu0
        %v1100 = vadd.f32 0.0, %v1099
        %v1101 = vpop.f32.mrb[0].mxu0
        %v1102 = vpop.f32.mrb[0].mxu0
        %v1103 = vadd.f32 0.0, %v1102
        %v1104 = vpop.f32.mrb[0].mxu0
        %1105 = vmatprep.mubr.bf16.mxu0 0
        %1106 = vmatmul.mubr.bf16.gmra.mrb[0].mxu0 %v1003
        %v1107 = vpop.f32.mrb[0].mxu0
        %v1108 = vadd.f32 0.0, %v1107
        %v1109 = vpop.f32.mrb[0].mxu0
        %v1110 = vpop.f32.mrb[0].mxu0
        %v1111 = vpop.f32.mrb[0].mxu0
        %1112 = vdwg.mxu0
        %v1117 = vunpack.c.l.b16 %v947
        %v1118 = vunpack.c.l.b16 %v948
        %v1119 = vunpack.c.l.b16 %v949
        %v1120 = vunpack.c.l.b16 %v950
        %v1121 = vpack.c.b16 %v1118, %v1117
        %v1122 = vpack.c.b16 %v1120, %v1119
        %1125 = vmatprep.subr.bf16.mxu0 0
        %1126 = vmatpush1.bf16.msra.mxu0 %v1121
        %1127 = vmatprep.subr.bf16.mxu0 0
        %1128 = vmatpush1.bf16.msra.mxu0 %v1122
        %1129 = vmatprep.subr.bf16.mxu0 0
        %1130 = vmatpush1.bf16.msra.mxu0 0
        %1131 = vmatprep.subr.bf16.mxu0 0
        %1132 = vmatpush1.bf16.msra.mxu0 0
        %1133 = vmatprep.subr.bf16.mxu0 0
        %1134 = vmatpush1.bf16.msra.mxu0 0
        %1135 = vmatprep.subr.bf16.mxu0 0
        %1136 = vmatpush1.bf16.msra.mxu0 0
        %1137 = vmatprep.subr.bf16.mxu0 0
        %1138 = vmatpush1.bf16.msra.mxu0 0
        %1139 = vmatprep.subr.bf16.mxu0 0
        %1140 = vmatpush1.bf16.msra.mxu0 0
        %1141 = vmatprep.subr.bf16.mxu0 0
        %1142 = vmatpush1.bf16.msra.mxu0 0
        %1143 = vmatprep.subr.bf16.mxu0 0
        %1144 = vmatpush1.bf16.msra.mxu0 0
        %1145 = vmatprep.subr.bf16.mxu0 0
        %1146 = vmatpush1.bf16.msra.mxu0 0
        %1147 = vmatprep.subr.bf16.mxu0 0
        %1148 = vmatpush1.bf16.msra.mxu0 0
        %1149 = vmatprep.subr.bf16.mxu0 0
        %1150 = vmatpush1.bf16.msra.mxu0 0
        %1151 = vmatprep.subr.bf16.mxu0 0
        %1152 = vmatpush1.bf16.msra.mxu0 0
        %1153 = vmatprep.subr.bf16.mxu0 0
        %1154 = vmatpush1.bf16.msra.mxu0 0
        %1155 = vmatprep.subr.bf16.mxu0 0
        %1156 = vmatpush1.bf16.msra.mxu0 0
        %1157 = vmatprep.mubr.bf16.mxu0 0
        %1158 = vmatmul.mubr.bf16.gmra.mrb[0].mxu0 %v1000
        %v1159 = vpop.f32.mrb[0].mxu0
        %v1160 = vadd.f32 0.0, %v1159
        %v1161 = vpop.f32.mrb[0].mxu0
        %v1162 = vpop.f32.mrb[0].mxu0
        %v1163 = vadd.f32 0.0, %v1162
        %v1164 = vpop.f32.mrb[0].mxu0
        %1165 = vmatprep.mubr.bf16.mxu0 0
        %1166 = vmatmul.mubr.bf16.gmra.mrb[0].mxu0 %v1003
        %v1167 = vpop.f32.mrb[0].mxu0
        %v1168 = vadd.f32 0.0, %v1167
        %v1169 = vpop.f32.mrb[0].mxu0
        %v1170 = vpop.f32.mrb[0].mxu0
        %v1171 = vpop.f32.mrb[0].mxu0
        %1172 = vdwg.mxu0
        %v1177 = vunpack.c.l.b16 %v951
        %v1178 = vunpack.c.l.b16 %v952
        %v1179 = vunpack.c.l.b16 %v953
        %v1180 = vunpack.c.l.b16 %v954
        %v1181 = vpack.c.b16 %v1178, %v1177
        %v1182 = vpack.c.b16 %v1180, %v1179
        %1185 = vmatprep.subr.bf16.mxu0 0
        %1186 = vmatpush1.bf16.msra.mxu0 %v1181
        %1187 = vmatprep.subr.bf16.mxu0 0
        %1188 = vmatpush1.bf16.msra.mxu0 %v1182
        %1189 = vmatprep.subr.bf16.mxu0 0
        %1190 = vmatpush1.bf16.msra.mxu0 0
        %1191 = vmatprep.subr.bf16.mxu0 0
        %1192 = vmatpush1.bf16.msra.mxu0 0
        %1193 = vmatprep.subr.bf16.mxu0 0
        %1194 = vmatpush1.bf16.msra.mxu0 0
        %1195 = vmatprep.subr.bf16.mxu0 0
        %1196 = vmatpush1.bf16.msra.mxu0 0
        %1197 = vmatprep.subr.bf16.mxu0 0
        %1198 = vmatpush1.bf16.msra.mxu0 0
        %1199 = vmatprep.subr.bf16.mxu0 0
        %1200 = vmatpush1.bf16.msra.mxu0 0
        %1201 = vmatprep.subr.bf16.mxu0 0
        %1202 = vmatpush1.bf16.msra.mxu0 0
        %1203 = vmatprep.subr.bf16.mxu0 0
        %1204 = vmatpush1.bf16.msra.mxu0 0
        %1205 = vmatprep.subr.bf16.mxu0 0
        %1206 = vmatpush1.bf16.msra.mxu0 0
        %1207 = vmatprep.subr.bf16.mxu0 0
        %1208 = vmatpush1.bf16.msra.mxu0 0
        %1209 = vmatprep.subr.bf16.mxu0 0
        %1210 = vmatpush1.bf16.msra.mxu0 0
        %1211 = vmatprep.subr.bf16.mxu0 0
        %1212 = vmatpush1.bf16.msra.mxu0 0
        %1213 = vmatprep.subr.bf16.mxu0 0
        %1214 = vmatpush1.bf16.msra.mxu0 0
        %1215 = vmatprep.subr.bf16.mxu0 0
        %1216 = vmatpush1.bf16.msra.mxu0 0
        %1217 = vmatprep.mubr.bf16.mxu0 0
        %1218 = vmatmul.mubr.bf16.gmra.mrb[0].mxu0 %v1000
        %v1219 = vpop.f32.mrb[0].mxu0
        %v1220 = vadd.f32 0.0, %v1219
        %v1221 = vpop.f32.mrb[0].mxu0
        %v1222 = vpop.f32.mrb[0].mxu0
        %v1223 = vadd.f32 0.0, %v1222
        %v1224 = vpop.f32.mrb[0].mxu0
        %1225 = vmatprep.mubr.bf16.mxu0 0
        %1226 = vmatmul.mubr.bf16.gmra.mrb[0].mxu0 %v1003
        %v1227 = vpop.f32.mrb[0].mxu0
        %v1228 = vadd.f32 0.0, %v1227
        %v1229 = vpop.f32.mrb[0].mxu0
        %v1230 = vpop.f32.mrb[0].mxu0
        %v1231 = vpop.f32.mrb[0].mxu0
        %1232 = vdwg.mxu0
        %v1237 = vunpack.c.l.b16 %v955
        %v1238 = vunpack.c.l.b16 %v956
        %v1239 = vunpack.c.l.b16 %v957
        %v1240 = vunpack.c.l.b16 %v958
        %v1241 = vpack.c.b16 %v1238, %v1237
        %v1242 = vpack.c.b16 %v1240, %v1239
        %1245 = vmatprep.subr.bf16.mxu0 0
        %1246 = vmatpush1.bf16.msra.mxu0 %v1241
        %1247 = vmatprep.subr.bf16.mxu0 0
        %1248 = vmatpush1.bf16.msra.mxu0 %v1242
        %1249 = vmatprep.subr.bf16.mxu0 0
        %1250 = vmatpush1.bf16.msra.mxu0 0
        %1251 = vmatprep.subr.bf16.mxu0 0
        %1252 = vmatpush1.bf16.msra.mxu0 0
        %1253 = vmatprep.subr.bf16.mxu0 0
        %1254 = vmatpush1.bf16.msra.mxu0 0
        %1255 = vmatprep.subr.bf16.mxu0 0
        %1256 = vmatpush1.bf16.msra.mxu0 0
        %1257 = vmatprep.subr.bf16.mxu0 0
        %1258 = vmatpush1.bf16.msra.mxu0 0
        %1259 = vmatprep.subr.bf16.mxu0 0
        %1260 = vmatpush1.bf16.msra.mxu0 0
        %1261 = vmatprep.subr.bf16.mxu0 0
        %1262 = vmatpush1.bf16.msra.mxu0 0
        %1263 = vmatprep.subr.bf16.mxu0 0
        %1264 = vmatpush1.bf16.msra.mxu0 0
        %1265 = vmatprep.subr.bf16.mxu0 0
        %1266 = vmatpush1.bf16.msra.mxu0 0
        %1267 = vmatprep.subr.bf16.mxu0 0
        %1268 = vmatpush1.bf16.msra.mxu0 0
        %1269 = vmatprep.subr.bf16.mxu0 0
        %1270 = vmatpush1.bf16.msra.mxu0 0
        %1271 = vmatprep.subr.bf16.mxu0 0
        %1272 = vmatpush1.bf16.msra.mxu0 0
        %1273 = vmatprep.subr.bf16.mxu0 0
        %1274 = vmatpush1.bf16.msra.mxu0 0
        %1275 = vmatprep.subr.bf16.mxu0 0
        %1276 = vmatpush1.bf16.msra.mxu0 0
        %1277 = vmatprep.mubr.bf16.mxu0 0
        %1278 = vmatmul.mubr.bf16.gmra.mrb[0].mxu0 %v1000
        %v1279 = vpop.f32.mrb[0].mxu0
        %v1280 = vadd.f32 0.0, %v1279
        %v1281 = vpop.f32.mrb[0].mxu0
        %v1282 = vpop.f32.mrb[0].mxu0
        %v1283 = vadd.f32 0.0, %v1282
        %v1284 = vpop.f32.mrb[0].mxu0
        %1285 = vmatprep.mubr.bf16.mxu0 0
        %1286 = vmatmul.mubr.bf16.gmra.mrb[0].mxu0 %v1003
        %v1287 = vpop.f32.mrb[0].mxu0
        %v1288 = vadd.f32 0.0, %v1287
        %v1289 = vpop.f32.mrb[0].mxu0
        %v1290 = vpop.f32.mrb[0].mxu0
        %v1291 = vpop.f32.mrb[0].mxu0
        %1292 = vdwg.mxu0
        %v1297 = vunpack.c.l.b16 %v959
        %v1298 = vunpack.c.l.b16 %v960
        %v1299 = vunpack.c.l.b16 %v961
        %v1300 = vunpack.c.l.b16 %v962
        %v1301 = vpack.c.b16 %v1298, %v1297
        %v1302 = vpack.c.b16 %v1300, %v1299
        %1305 = vmatprep.subr.bf16.mxu0 0
        %1306 = vmatpush1.bf16.msra.mxu0 %v1301
        %1307 = vmatprep.subr.bf16.mxu0 0
        %1308 = vmatpush1.bf16.msra.mxu0 %v1302
        %1309 = vmatprep.subr.bf16.mxu0 0
        %1310 = vmatpush1.bf16.msra.mxu0 0
        %1311 = vmatprep.subr.bf16.mxu0 0
        %1312 = vmatpush1.bf16.msra.mxu0 0
        %1313 = vmatprep.subr.bf16.mxu0 0
        %1314 = vmatpush1.bf16.msra.mxu0 0
        %1315 = vmatprep.subr.bf16.mxu0 0
        %1316 = vmatpush1.bf16.msra.mxu0 0
        %1317 = vmatprep.subr.bf16.mxu0 0
        %1318 = vmatpush1.bf16.msra.mxu0 0
        %1319 = vmatprep.subr.bf16.mxu0 0
        %1320 = vmatpush1.bf16.msra.mxu0 0
        %1321 = vmatprep.subr.bf16.mxu0 0
        %1322 = vmatpush1.bf16.msra.mxu0 0
        %1323 = vmatprep.subr.bf16.mxu0 0
        %1324 = vmatpush1.bf16.msra.mxu0 0
        %1325 = vmatprep.subr.bf16.mxu0 0
        %1326 = vmatpush1.bf16.msra.mxu0 0
        %1327 = vmatprep.subr.bf16.mxu0 0
        %1328 = vmatpush1.bf16.msra.mxu0 0
        %1329 = vmatprep.subr.bf16.mxu0 0
        %1330 = vmatpush1.bf16.msra.mxu0 0
        %1331 = vmatprep.subr.bf16.mxu0 0
        %1332 = vmatpush1.bf16.msra.mxu0 0
        %1333 = vmatprep.subr.bf16.mxu0 0
        %1334 = vmatpush1.bf16.msra.mxu0 0
        %1335 = vmatprep.subr.bf16.mxu0 0
        %1336 = vmatpush1.bf16.msra.mxu0 0
        %1337 = vmatprep.mubr.bf16.mxu0 0
        %1338 = vmatmul.mubr.bf16.gmra.mrb[0].mxu0 %v1000
        %v1339 = vpop.f32.mrb[0].mxu0
        %v1340 = vadd.f32 0.0, %v1339
        %v1341 = vpop.f32.mrb[0].mxu0
        %v1342 = vpop.f32.mrb[0].mxu0
        %v1343 = vadd.f32 0.0, %v1342
        %v1344 = vpop.f32.mrb[0].mxu0
        %1345 = vmatprep.mubr.bf16.mxu0 0
        %1346 = vmatmul.mubr.bf16.gmra.mrb[0].mxu0 %v1003
        %v1347 = vpop.f32.mrb[0].mxu0
        %v1348 = vadd.f32 0.0, %v1347
        %v1349 = vpop.f32.mrb[0].mxu0
        %v1350 = vpop.f32.mrb[0].mxu0
        %v1351 = vpop.f32.mrb[0].mxu0
        %1352 = vdwg.mxu0
        %v1357 = vunpack.c.l.b16 %v963
        %v1358 = vunpack.c.l.b16 %v964
        %v1359 = vunpack.c.l.b16 %v965
        %v1360 = vunpack.c.l.b16 %v966
        %v1361 = vpack.c.b16 %v1358, %v1357
        %v1362 = vpack.c.b16 %v1360, %v1359
        %1365 = vmatprep.subr.bf16.mxu0 0
        %1366 = vmatpush1.bf16.msra.mxu0 %v1361
        %1367 = vmatprep.subr.bf16.mxu0 0
        %1368 = vmatpush1.bf16.msra.mxu0 %v1362
        %1369 = vmatprep.subr.bf16.mxu0 0
        %1370 = vmatpush1.bf16.msra.mxu0 0
        %1371 = vmatprep.subr.bf16.mxu0 0
        %1372 = vmatpush1.bf16.msra.mxu0 0
        %1373 = vmatprep.subr.bf16.mxu0 0
        %1374 = vmatpush1.bf16.msra.mxu0 0
        %1375 = vmatprep.subr.bf16.mxu0 0
        %1376 = vmatpush1.bf16.msra.mxu0 0
        %1377 = vmatprep.subr.bf16.mxu0 0
        %1378 = vmatpush1.bf16.msra.mxu0 0
        %1379 = vmatprep.subr.bf16.mxu0 0
        %1380 = vmatpush1.bf16.msra.mxu0 0
        %1381 = vmatprep.subr.bf16.mxu0 0
        %1382 = vmatpush1.bf16.msra.mxu0 0
        %1383 = vmatprep.subr.bf16.mxu0 0
        %1384 = vmatpush1.bf16.msra.mxu0 0
        %1385 = vmatprep.subr.bf16.mxu0 0
        %1386 = vmatpush1.bf16.msra.mxu0 0
        %1387 = vmatprep.subr.bf16.mxu0 0
        %1388 = vmatpush1.bf16.msra.mxu0 0
        %1389 = vmatprep.subr.bf16.mxu0 0
        %1390 = vmatpush1.bf16.msra.mxu0 0
        %1391 = vmatprep.subr.bf16.mxu0 0
        %1392 = vmatpush1.bf16.msra.mxu0 0
        %1393 = vmatprep.subr.bf16.mxu0 0
        %1394 = vmatpush1.bf16.msra.mxu0 0
        %1395 = vmatprep.subr.bf16.mxu0 0
        %1396 = vmatpush1.bf16.msra.mxu0 0
        %1397 = vmatprep.mubr.bf16.mxu0 0
        %1398 = vmatmul.mubr.bf16.gmra.mrb[0].mxu0 %v1000
        %v1399 = vpop.f32.mrb[0].mxu0
        %v1400 = vadd.f32 0.0, %v1399
        %v1401 = vpop.f32.mrb[0].mxu0
        %v1402 = vpop.f32.mrb[0].mxu0
        %v1403 = vadd.f32 0.0, %v1402
        %v1404 = vpop.f32.mrb[0].mxu0
        %1405 = vmatprep.mubr.bf16.mxu0 0
        %1406 = vmatmul.mubr.bf16.gmra.mrb[0].mxu0 %v1003
        %v1407 = vpop.f32.mrb[0].mxu0
        %v1408 = vadd.f32 0.0, %v1407
        %v1409 = vpop.f32.mrb[0].mxu0
        %v1410 = vpop.f32.mrb[0].mxu0
        %v1411 = vpop.f32.mrb[0].mxu0
        %1412 = vdwg.mxu0
        %v1417 = vunpack.c.l.b16 %v967
        %v1418 = vunpack.c.l.b16 %v968
        %v1419 = vunpack.c.l.b16 %v969
        %v1420 = vunpack.c.l.b16 %v970
        %v1421 = vpack.c.b16 %v1418, %v1417
        %v1422 = vpack.c.b16 %v1420, %v1419
        %1425 = vmatprep.subr.bf16.mxu0 0
        %1426 = vmatpush1.bf16.msra.mxu0 %v1421
        %1427 = vmatprep.subr.bf16.mxu0 0
        %1428 = vmatpush1.bf16.msra.mxu0 %v1422
        %1429 = vmatprep.subr.bf16.mxu0 0
        %1430 = vmatpush1.bf16.msra.mxu0 0
        %1431 = vmatprep.subr.bf16.mxu0 0
        %1432 = vmatpush1.bf16.msra.mxu0 0
        %1433 = vmatprep.subr.bf16.mxu0 0
        %1434 = vmatpush1.bf16.msra.mxu0 0
        %1435 = vmatprep.subr.bf16.mxu0 0
        %1436 = vmatpush1.bf16.msra.mxu0 0
        %1437 = vmatprep.subr.bf16.mxu0 0
        %1438 = vmatpush1.bf16.msra.mxu0 0
        %1439 = vmatprep.subr.bf16.mxu0 0
        %1440 = vmatpush1.bf16.msra.mxu0 0
        %1441 = vmatprep.subr.bf16.mxu0 0
        %1442 = vmatpush1.bf16.msra.mxu0 0
        %1443 = vmatprep.subr.bf16.mxu0 0
        %1444 = vmatpush1.bf16.msra.mxu0 0
        %1445 = vmatprep.subr.bf16.mxu0 0
        %1446 = vmatpush1.bf16.msra.mxu0 0
        %1447 = vmatprep.subr.bf16.mxu0 0
        %1448 = vmatpush1.bf16.msra.mxu0 0
        %1449 = vmatprep.subr.bf16.mxu0 0
        %1450 = vmatpush1.bf16.msra.mxu0 0
        %1451 = vmatprep.subr.bf16.mxu0 0
        %1452 = vmatpush1.bf16.msra.mxu0 0
        %1453 = vmatprep.subr.bf16.mxu0 0
        %1454 = vmatpush1.bf16.msra.mxu0 0
        %1455 = vmatprep.subr.bf16.mxu0 0
        %1456 = vmatpush1.bf16.msra.mxu0 0
        %1457 = vmatprep.mubr.bf16.mxu0 0
        %1458 = vmatmul.mubr.bf16.gmra.mrb[0].mxu0 %v1000
        %v1459 = vpop.f32.mrb[0].mxu0
        %v1460 = vadd.f32 0.0, %v1459
        %v1461 = vpop.f32.mrb[0].mxu0
        %v1462 = vpop.f32.mrb[0].mxu0
        %v1463 = vadd.f32 0.0, %v1462
        %v1464 = vpop.f32.mrb[0].mxu0
        %1465 = vmatprep.mubr.bf16.mxu0 0
        %1466 = vmatmul.mubr.bf16.gmra.mrb[0].mxu0 %v1003
        %v1467 = vpop.f32.mrb[0].mxu0
        %v1468 = vadd.f32 0.0, %v1467
        %v1469 = vpop.f32.mrb[0].mxu0
        %v1470 = vpop.f32.mrb[0].mxu0
        %v1471 = vpop.f32.mrb[0].mxu0
        %1472 = vdwg.mxu0
        %v1477 = vunpack.c.l.b16 %v971
        %v1478 = vunpack.c.l.b16 %v972
        %v1479 = vunpack.c.l.b16 %v973
        %v1480 = vunpack.c.l.b16 %v974
        %v1481 = vpack.c.b16 %v1478, %v1477
        %v1482 = vpack.c.b16 %v1480, %v1479
        %1485 = vmatprep.subr.bf16.mxu0 0
        %1486 = vmatpush1.bf16.msra.mxu0 %v1481
        %1487 = vmatprep.subr.bf16.mxu0 0
        %1488 = vmatpush1.bf16.msra.mxu0 %v1482
        %1489 = vmatprep.subr.bf16.mxu0 0
        %1490 = vmatpush1.bf16.msra.mxu0 0
        %1491 = vmatprep.subr.bf16.mxu0 0
        %1492 = vmatpush1.bf16.msra.mxu0 0
        %1493 = vmatprep.subr.bf16.mxu0 0
        %1494 = vmatpush1.bf16.msra.mxu0 0
        %1495 = vmatprep.subr.bf16.mxu0 0
        %1496 = vmatpush1.bf16.msra.mxu0 0
        %1497 = vmatprep.subr.bf16.mxu0 0
        %1498 = vmatpush1.bf16.msra.mxu0 0
        %1499 = vmatprep.subr.bf16.mxu0 0
        %1500 = vmatpush1.bf16.msra.mxu0 0
        %1501 = vmatprep.subr.bf16.mxu0 0
        %1502 = vmatpush1.bf16.msra.mxu0 0
        %1503 = vmatprep.subr.bf16.mxu0 0
        %1504 = vmatpush1.bf16.msra.mxu0 0
        %1505 = vmatprep.subr.bf16.mxu0 0
        %1506 = vmatpush1.bf16.msra.mxu0 0
        %1507 = vmatprep.subr.bf16.mxu0 0
        %1508 = vmatpush1.bf16.msra.mxu0 0
        %1509 = vmatprep.subr.bf16.mxu0 0
        %1510 = vmatpush1.bf16.msra.mxu0 0
        %1511 = vmatprep.subr.bf16.mxu0 0
        %1512 = vmatpush1.bf16.msra.mxu0 0
        %1513 = vmatprep.subr.bf16.mxu0 0
        %1514 = vmatpush1.bf16.msra.mxu0 0
        %1515 = vmatprep.subr.bf16.mxu0 0
        %1516 = vmatpush1.bf16.msra.mxu0 0
        %1517 = vmatprep.mubr.bf16.mxu0 0
        %1518 = vmatmul.mubr.bf16.gmra.mrb[0].mxu0 %v1000
        %v1519 = vpop.f32.mrb[0].mxu0
        %v1520 = vadd.f32 0.0, %v1519
        %v1521 = vpop.f32.mrb[0].mxu0
        %v1522 = vpop.f32.mrb[0].mxu0
        %v1523 = vadd.f32 0.0, %v1522
        %v1524 = vpop.f32.mrb[0].mxu0
        %1525 = vmatprep.mubr.bf16.mxu0 0
        %1526 = vmatmul.mubr.bf16.gmra.mrb[0].mxu0 %v1003
        %v1527 = vpop.f32.mrb[0].mxu0
        %v1528 = vadd.f32 0.0, %v1527
        %v1529 = vpop.f32.mrb[0].mxu0
        %v1530 = vpop.f32.mrb[0].mxu0
        %v1531 = vpop.f32.mrb[0].mxu0
        %1532 = vdwg.mxu0
        %v1537 = vunpack.c.l.b16 %v975
        %v1538 = vunpack.c.l.b16 %v976
        %v1539 = vunpack.c.l.b16 %v977
        %v1540 = vunpack.c.l.b16 %v978
        %v1541 = vpack.c.b16 %v1538, %v1537
        %v1542 = vpack.c.b16 %v1540, %v1539
        %1545 = vmatprep.subr.bf16.mxu0 0
        %1546 = vmatpush1.bf16.msra.mxu0 %v1541
        %1547 = vmatprep.subr.bf16.mxu0 0
        %1548 = vmatpush1.bf16.msra.mxu0 %v1542
        %1549 = vmatprep.subr.bf16.mxu0 0
        %1550 = vmatpush1.bf16.msra.mxu0 0
        %1551 = vmatprep.subr.bf16.mxu0 0
        %1552 = vmatpush1.bf16.msra.mxu0 0
        %1553 = vmatprep.subr.bf16.mxu0 0
        %1554 = vmatpush1.bf16.msra.mxu0 0
        %1555 = vmatprep.subr.bf16.mxu0 0
        %1556 = vmatpush1.bf16.msra.mxu0 0
        %1557 = vmatprep.subr.bf16.mxu0 0
        %1558 = vmatpush1.bf16.msra.mxu0 0
        %1559 = vmatprep.subr.bf16.mxu0 0
        %1560 = vmatpush1.bf16.msra.mxu0 0
        %1561 = vmatprep.subr.bf16.mxu0 0
        %1562 = vmatpush1.bf16.msra.mxu0 0
        %1563 = vmatprep.subr.bf16.mxu0 0
        %1564 = vmatpush1.bf16.msra.mxu0 0
        %1565 = vmatprep.subr.bf16.mxu0 0
        %1566 = vmatpush1.bf16.msra.mxu0 0
        %1567 = vmatprep.subr.bf16.mxu0 0
        %1568 = vmatpush1.bf16.msra.mxu0 0
        %1569 = vmatprep.subr.bf16.mxu0 0
        %1570 = vmatpush1.bf16.msra.mxu0 0
        %1571 = vmatprep.subr.bf16.mxu0 0
        %1572 = vmatpush1.bf16.msra.mxu0 0
        %1573 = vmatprep.subr.bf16.mxu0 0
        %1574 = vmatpush1.bf16.msra.mxu0 0
        %1575 = vmatprep.subr.bf16.mxu0 0
        %1576 = vmatpush1.bf16.msra.mxu0 0
        %1577 = vmatprep.mubr.bf16.mxu0 0
        %1578 = vmatmul.mubr.bf16.gmra.mrb[0].mxu0 %v1000
        %v1579 = vpop.f32.mrb[0].mxu0
        %v1580 = vadd.f32 0.0, %v1579
        %v1581 = vpop.f32.mrb[0].mxu0
        %v1582 = vpop.f32.mrb[0].mxu0
        %v1583 = vadd.f32 0.0, %v1582
        %v1584 = vpop.f32.mrb[0].mxu0
        %1585 = vmatprep.mubr.bf16.mxu0 0
        %1586 = vmatmul.mubr.bf16.gmra.mrb[0].mxu0 %v1003
        %v1587 = vpop.f32.mrb[0].mxu0
        %v1588 = vadd.f32 0.0, %v1587
        %v1589 = vpop.f32.mrb[0].mxu0
        %v1590 = vpop.f32.mrb[0].mxu0
        %v1591 = vpop.f32.mrb[0].mxu0
        %1592 = vdwg.mxu0
        %v1597 = vunpack.c.l.b16 %v979
        %v1598 = vunpack.c.l.b16 %v980
        %v1599 = vunpack.c.l.b16 %v981
        %v1600 = vunpack.c.l.b16 %v982
        %v1601 = vpack.c.b16 %v1598, %v1597
        %v1602 = vpack.c.b16 %v1600, %v1599
        %1605 = vmatprep.subr.bf16.mxu0 0
        %1606 = vmatpush1.bf16.msra.mxu0 %v1601
        %1607 = vmatprep.subr.bf16.mxu0 0
        %1608 = vmatpush1.bf16.msra.mxu0 %v1602
        %1609 = vmatprep.subr.bf16.mxu0 0
        %1610 = vmatpush1.bf16.msra.mxu0 0
        %1611 = vmatprep.subr.bf16.mxu0 0
        %1612 = vmatpush1.bf16.msra.mxu0 0
        %1613 = vmatprep.subr.bf16.mxu0 0
        %1614 = vmatpush1.bf16.msra.mxu0 0
        %1615 = vmatprep.subr.bf16.mxu0 0
        %1616 = vmatpush1.bf16.msra.mxu0 0
        %1617 = vmatprep.subr.bf16.mxu0 0
        %1618 = vmatpush1.bf16.msra.mxu0 0
        %1619 = vmatprep.subr.bf16.mxu0 0
        %1620 = vmatpush1.bf16.msra.mxu0 0
        %1621 = vmatprep.subr.bf16.mxu0 0
        %1622 = vmatpush1.bf16.msra.mxu0 0
        %1623 = vmatprep.subr.bf16.mxu0 0
        %1624 = vmatpush1.bf16.msra.mxu0 0
        %1625 = vmatprep.subr.bf16.mxu0 0
        %1626 = vmatpush1.bf16.msra.mxu0 0
        %1627 = vmatprep.subr.bf16.mxu0 0
        %1628 = vmatpush1.bf16.msra.mxu0 0
        %1629 = vmatprep.subr.bf16.mxu0 0
        %1630 = vmatpush1.bf16.msra.mxu0 0
        %1631 = vmatprep.subr.bf16.mxu0 0
        %1632 = vmatpush1.bf16.msra.mxu0 0
        %1633 = vmatprep.subr.bf16.mxu0 0
        %1634 = vmatpush1.bf16.msra.mxu0 0
        %1635 = vmatprep.subr.bf16.mxu0 0
        %1636 = vmatpush1.bf16.msra.mxu0 0
        %1637 = vmatprep.mubr.bf16.mxu0 0
        %1638 = vmatmul.mubr.bf16.gmra.mrb[0].mxu0 %v1000
        %v1639 = vpop.f32.mrb[0].mxu0
        %v1640 = vadd.f32 0.0, %v1639
        %v1641 = vpop.f32.mrb[0].mxu0
        %v1642 = vpop.f32.mrb[0].mxu0
        %v1643 = vadd.f32 0.0, %v1642
        %v1644 = vpop.f32.mrb[0].mxu0
        %1645 = vmatprep.mubr.bf16.mxu0 0
        %1646 = vmatmul.mubr.bf16.gmra.mrb[0].mxu0 %v1003
        %v1647 = vpop.f32.mrb[0].mxu0
        %v1648 = vadd.f32 0.0, %v1647
        %v1649 = vpop.f32.mrb[0].mxu0
        %v1650 = vpop.f32.mrb[0].mxu0
        %v1651 = vpop.f32.mrb[0].mxu0
        %1652 = vdwg.mxu0
        %v1657 = vunpack.c.l.b16 %v983
        %v1658 = vunpack.c.l.b16 %v984
        %v1659 = vunpack.c.l.b16 %v985
        %v1660 = vunpack.c.l.b16 %v986
        %v1661 = vpack.c.b16 %v1658, %v1657
        %v1662 = vpack.c.b16 %v1660, %v1659
        %1665 = vmatprep.subr.bf16.mxu0 0
        %1666 = vmatpush1.bf16.msra.mxu0 %v1661
        %1667 = vmatprep.subr.bf16.mxu0 0
        %1668 = vmatpush1.bf16.msra.mxu0 %v1662
        %1669 = vmatprep.subr.bf16.mxu0 0
        %1670 = vmatpush1.bf16.msra.mxu0 0
        %1671 = vmatprep.subr.bf16.mxu0 0
        %1672 = vmatpush1.bf16.msra.mxu0 0
        %1673 = vmatprep.subr.bf16.mxu0 0
        %1674 = vmatpush1.bf16.msra.mxu0 0
        %1675 = vmatprep.subr.bf16.mxu0 0
        %1676 = vmatpush1.bf16.msra.mxu0 0
        %1677 = vmatprep.subr.bf16.mxu0 0
        %1678 = vmatpush1.bf16.msra.mxu0 0
        %1679 = vmatprep.subr.bf16.mxu0 0
        %1680 = vmatpush1.bf16.msra.mxu0 0
        %1681 = vmatprep.subr.bf16.mxu0 0
        %1682 = vmatpush1.bf16.msra.mxu0 0
        %1683 = vmatprep.subr.bf16.mxu0 0
        %1684 = vmatpush1.bf16.msra.mxu0 0
        %1685 = vmatprep.subr.bf16.mxu0 0
        %1686 = vmatpush1.bf16.msra.mxu0 0
        %1687 = vmatprep.subr.bf16.mxu0 0
        %1688 = vmatpush1.bf16.msra.mxu0 0
        %1689 = vmatprep.subr.bf16.mxu0 0
        %1690 = vmatpush1.bf16.msra.mxu0 0
        %1691 = vmatprep.subr.bf16.mxu0 0
        %1692 = vmatpush1.bf16.msra.mxu0 0
        %1693 = vmatprep.subr.bf16.mxu0 0
        %1694 = vmatpush1.bf16.msra.mxu0 0
        %1695 = vmatprep.subr.bf16.mxu0 0
        %1696 = vmatpush1.bf16.msra.mxu0 0
        %1697 = vmatprep.mubr.bf16.mxu0 0
        %1698 = vmatmul.mubr.bf16.gmra.mrb[0].mxu0 %v1000
        %v1699 = vpop.f32.mrb[0].mxu0
        %v1700 = vadd.f32 0.0, %v1699
        %v1701 = vpop.f32.mrb[0].mxu0
        %v1702 = vpop.f32.mrb[0].mxu0
        %v1703 = vadd.f32 0.0, %v1702
        %v1704 = vpop.f32.mrb[0].mxu0
        %1705 = vmatprep.mubr.bf16.mxu0 0
        %1706 = vmatmul.mubr.bf16.gmra.mrb[0].mxu0 %v1003
        %v1707 = vpop.f32.mrb[0].mxu0
        %v1708 = vadd.f32 0.0, %v1707
        %v1709 = vpop.f32.mrb[0].mxu0
        %v1710 = vpop.f32.mrb[0].mxu0
        %v1711 = vpop.f32.mrb[0].mxu0
        %1712 = vdwg.mxu0
        %v1713 = vpack.c.bf16 %v1043, %v1040
        %v1714 = vpack.c.bf16 %v1048, %v1048
        %v1715 = vpack.c.bf16 %v1103, %v1100
        %v1716 = vpack.c.bf16 %v1108, %v1108
        %v1717 = vpack.c.bf16 %v1163, %v1160
        %v1718 = vpack.c.bf16 %v1168, %v1168
        %v1719 = vpack.c.bf16 %v1223, %v1220
        %v1720 = vpack.c.bf16 %v1228, %v1228
        %v1721 = vpack.c.bf16 %v1283, %v1280
        %v1722 = vpack.c.bf16 %v1288, %v1288
        %v1723 = vpack.c.bf16 %v1343, %v1340
        %v1724 = vpack.c.bf16 %v1348, %v1348
        %v1725 = vpack.c.bf16 %v1403, %v1400
        %v1726 = vpack.c.bf16 %v1408, %v1408
        %v1727 = vpack.c.bf16 %v1463, %v1460
        %v1728 = vpack.c.bf16 %v1468, %v1468
        %v1729 = vpack.c.bf16 %v1523, %v1520
        %v1730 = vpack.c.bf16 %v1528, %v1528
        %v1731 = vpack.c.bf16 %v1583, %v1580
        %v1732 = vpack.c.bf16 %v1588, %v1588
        %v1733 = vpack.c.bf16 %v1643, %v1640
        %v1734 = vpack.c.bf16 %v1648, %v1648
        %v1735 = vpack.c.bf16 %v1703, %v1700
        %v1736 = vpack.c.bf16 %v1708, %v1708
        %vm1737 = vcmask 64512
        %v1739 = vsel %vm1737, %v1713, 0
        %v1742 = vsel %vm1737, %v1714, 0
        %v1745 = vsel %vm1737, %v1721, 0
        %v1748 = vsel %vm1737, %v1722, 0
        %1750 = vmatprep.subr.bf16.mxu0 0
        %1751 = vmatpush1.bf16.xpose.msra.mxu0 %v1745
        %1752 = vmatprep.subr.bf16.mxu0 0
        %1753 = vmatpush1.bf16.xpose.msra.mxu0 %v1748
        %1754 = vmatprep.subr.bf16.mxu0 0
        %1755 = vmatpush1.bf16.xpose.msra.mxu0 0
        %1756 = vmatprep.subr.bf16.mxu0 0
        %1757 = vmatpush1.bf16.xpose.msra.mxu0 0
        %1758 = vmatprep.subr.bf16.mxu0 0
        %1759 = vmatpush1.bf16.xpose.msra.mxu0 0
        %1760 = vmatprep.subr.bf16.mxu0 0
        %1761 = vmatpush1.bf16.xpose.msra.mxu0 0
        %1762 = vmatprep.subr.bf16.mxu0 0
        %1763 = vmatpush1.bf16.xpose.msra.mxu0 0
        %1764 = vmatprep.subr.bf16.mxu0 0
        %1765 = vmatpush1.bf16.xpose.msra.mxu0 0
        %1766 = vmatprep.subr.bf16.mxu0 0
        %1767 = vmatpush1.bf16.xpose.msra.mxu0 0
        %1768 = vmatprep.subr.bf16.mxu0 0
        %1769 = vmatpush1.bf16.xpose.msra.mxu0 0
        %1770 = vmatprep.subr.bf16.mxu0 0
        %1771 = vmatpush1.bf16.xpose.msra.mxu0 0
        %1772 = vmatprep.subr.bf16.mxu0 0
        %1773 = vmatpush1.bf16.xpose.msra.mxu0 0
        %1774 = vmatprep.subr.bf16.mxu0 0
        %1775 = vmatpush1.bf16.xpose.msra.mxu0 0
        %1776 = vmatprep.subr.bf16.mxu0 0
        %1777 = vmatpush1.bf16.xpose.msra.mxu0 0
        %1778 = vmatprep.subr.bf16.mxu0 0
        %1779 = vmatpush1.bf16.xpose.msra.mxu0 0
        %1780 = vmatprep.subr.bf16.mxu0 0
        %1781 = vmatpush1.bf16.xpose.msra.mxu0 0
        %1782 = vmatprep.mubr.bf16.mxu0 0
        %1783 = vmatmul.mubr.bf16.gmra.mrb[0].mxu0 %v1739
        %v1784 = vpop.f32.mrb[0].mxu0
        %v1785 = vadd.f32 0.0, %v1784
        %v1786 = vpop.f32.mrb[0].mxu0
        %v1787 = vpop.f32.mrb[0].mxu0
        %v1788 = vadd.f32 0.0, %v1787
        %v1789 = vpop.f32.mrb[0].mxu0
        %1790 = vmatprep.mubr.bf16.mxu0 0
        %1791 = vmatmul.mubr.bf16.gmra.mrb[0].mxu0 %v1742
        %v1792 = vpop.f32.mrb[0].mxu0
        %v1793 = vadd.f32 0.0, %v1792
        %v1794 = vpop.f32.mrb[0].mxu0
        %v1795 = vpop.f32.mrb[0].mxu0
        %v1796 = vpop.f32.mrb[0].mxu0
        %1797 = vdwg.mxu0
        %v1799 = vsel %vm1737, %v1715, 0
        %v1802 = vsel %vm1737, %v1716, 0
        %v1805 = vsel %vm1737, %v1723, 0
        %v1808 = vsel %vm1737, %v1724, 0
        %1810 = vmatprep.subr.bf16.mxu0 0
        %1811 = vmatpush1.bf16.xpose.msra.mxu0 %v1805
        %1812 = vmatprep.subr.bf16.mxu0 0
        %1813 = vmatpush1.bf16.xpose.msra.mxu0 %v1808
        %1814 = vmatprep.subr.bf16.mxu0 0
        %1815 = vmatpush1.bf16.xpose.msra.mxu0 0
        %1816 = vmatprep.subr.bf16.mxu0 0
        %1817 = vmatpush1.bf16.xpose.msra.mxu0 0
        %1818 = vmatprep.subr.bf16.mxu0 0
        %1819 = vmatpush1.bf16.xpose.msra.mxu0 0
        %1820 = vmatprep.subr.bf16.mxu0 0
        %1821 = vmatpush1.bf16.xpose.msra.mxu0 0
        %1822 = vmatprep.subr.bf16.mxu0 0
        %1823 = vmatpush1.bf16.xpose.msra.mxu0 0
        %1824 = vmatprep.subr.bf16.mxu0 0
        %1825 = vmatpush1.bf16.xpose.msra.mxu0 0
        %1826 = vmatprep.subr.bf16.mxu0 0
        %1827 = vmatpush1.bf16.xpose.msra.mxu0 0
        %1828 = vmatprep.subr.bf16.mxu0 0
        %1829 = vmatpush1.bf16.xpose.msra.mxu0 0
        %1830 = vmatprep.subr.bf16.mxu0 0
        %1831 = vmatpush1.bf16.xpose.msra.mxu0 0
        %1832 = vmatprep.subr.bf16.mxu0 0
        %1833 = vmatpush1.bf16.xpose.msra.mxu0 0
        %1834 = vmatprep.subr.bf16.mxu0 0
        %1835 = vmatpush1.bf16.xpose.msra.mxu0 0
        %1836 = vmatprep.subr.bf16.mxu0 0
        %1837 = vmatpush1.bf16.xpose.msra.mxu0 0
        %1838 = vmatprep.subr.bf16.mxu0 0
        %1839 = vmatpush1.bf16.xpose.msra.mxu0 0
        %1840 = vmatprep.subr.bf16.mxu0 0
        %1841 = vmatpush1.bf16.xpose.msra.mxu0 0
        %1842 = vmatprep.mubr.bf16.mxu0 0
        %1843 = vmatmul.mubr.bf16.gmra.mrb[0].mxu0 %v1799
        %v1844 = vpop.f32.mrb[0].mxu0
        %v1845 = vadd.f32 0.0, %v1844
        %v1846 = vpop.f32.mrb[0].mxu0
        %v1847 = vpop.f32.mrb[0].mxu0
        %v1848 = vadd.f32 0.0, %v1847
        %v1849 = vpop.f32.mrb[0].mxu0
        %1850 = vmatprep.mubr.bf16.mxu0 0
        %1851 = vmatmul.mubr.bf16.gmra.mrb[0].mxu0 %v1802
        %v1852 = vpop.f32.mrb[0].mxu0
        %v1853 = vadd.f32 0.0, %v1852
        %v1854 = vpop.f32.mrb[0].mxu0
        %v1855 = vpop.f32.mrb[0].mxu0
        %v1856 = vpop.f32.mrb[0].mxu0
        %1857 = vdwg.mxu0
        %v1859 = vsel %vm1737, %v1717, 0
        %v1862 = vsel %vm1737, %v1718, 0
        %v1865 = vsel %vm1737, %v1725, 0
        %v1868 = vsel %vm1737, %v1726, 0
        %1870 = vmatprep.subr.bf16.mxu0 0
        %1871 = vmatpush1.bf16.xpose.msra.mxu0 %v1865
        %1872 = vmatprep.subr.bf16.mxu0 0
        %1873 = vmatpush1.bf16.xpose.msra.mxu0 %v1868
        %1874 = vmatprep.subr.bf16.mxu0 0
        %1875 = vmatpush1.bf16.xpose.msra.mxu0 0
        %1876 = vmatprep.subr.bf16.mxu0 0
        %1877 = vmatpush1.bf16.xpose.msra.mxu0 0
        %1878 = vmatprep.subr.bf16.mxu0 0
        %1879 = vmatpush1.bf16.xpose.msra.mxu0 0
        %1880 = vmatprep.subr.bf16.mxu0 0
        %1881 = vmatpush1.bf16.xpose.msra.mxu0 0
        %1882 = vmatprep.subr.bf16.mxu0 0
        %1883 = vmatpush1.bf16.xpose.msra.mxu0 0
        %1884 = vmatprep.subr.bf16.mxu0 0
        %1885 = vmatpush1.bf16.xpose.msra.mxu0 0
        %1886 = vmatprep.subr.bf16.mxu0 0
        %1887 = vmatpush1.bf16.xpose.msra.mxu0 0
        %1888 = vmatprep.subr.bf16.mxu0 0
        %1889 = vmatpush1.bf16.xpose.msra.mxu0 0
        %1890 = vmatprep.subr.bf16.mxu0 0
        %1891 = vmatpush1.bf16.xpose.msra.mxu0 0
        %1892 = vmatprep.subr.bf16.mxu0 0
        %1893 = vmatpush1.bf16.xpose.msra.mxu0 0
        %1894 = vmatprep.subr.bf16.mxu0 0
        %1895 = vmatpush1.bf16.xpose.msra.mxu0 0
        %1896 = vmatprep.subr.bf16.mxu0 0
        %1897 = vmatpush1.bf16.xpose.msra.mxu0 0
        %1898 = vmatprep.subr.bf16.mxu0 0
        %1899 = vmatpush1.bf16.xpose.msra.mxu0 0
        %1900 = vmatprep.subr.bf16.mxu0 0
        %1901 = vmatpush1.bf16.xpose.msra.mxu0 0
        %1902 = vmatprep.mubr.bf16.mxu0 0
        %1903 = vmatmul.mubr.bf16.gmra.mrb[0].mxu0 %v1859
        %v1904 = vpop.f32.mrb[0].mxu0
        %v1905 = vadd.f32 0.0, %v1904
        %v1906 = vpop.f32.mrb[0].mxu0
        %v1907 = vpop.f32.mrb[0].mxu0
        %v1908 = vadd.f32 0.0, %v1907
        %v1909 = vpop.f32.mrb[0].mxu0
        %1910 = vmatprep.mubr.bf16.mxu0 0
        %1911 = vmatmul.mubr.bf16.gmra.mrb[0].mxu0 %v1862
        %v1912 = vpop.f32.mrb[0].mxu0
        %v1913 = vadd.f32 0.0, %v1912
        %v1914 = vpop.f32.mrb[0].mxu0
        %v1915 = vpop.f32.mrb[0].mxu0
        %v1916 = vpop.f32.mrb[0].mxu0
        %1917 = vdwg.mxu0
        %v1919 = vsel %vm1737, %v1719, 0
        %v1922 = vsel %vm1737, %v1720, 0
        %v1925 = vsel %vm1737, %v1727, 0
        %v1928 = vsel %vm1737, %v1728, 0
        %1930 = vmatprep.subr.bf16.mxu0 0
        %1931 = vmatpush1.bf16.xpose.msra.mxu0 %v1925
        %1932 = vmatprep.subr.bf16.mxu0 0
        %1933 = vmatpush1.bf16.xpose.msra.mxu0 %v1928
        %1934 = vmatprep.subr.bf16.mxu0 0
        %1935 = vmatpush1.bf16.xpose.msra.mxu0 0
        %1936 = vmatprep.subr.bf16.mxu0 0
        %1937 = vmatpush1.bf16.xpose.msra.mxu0 0
        %1938 = vmatprep.subr.bf16.mxu0 0
        %1939 = vmatpush1.bf16.xpose.msra.mxu0 0
        %1940 = vmatprep.subr.bf16.mxu0 0
        %1941 = vmatpush1.bf16.xpose.msra.mxu0 0
        %1942 = vmatprep.subr.bf16.mxu0 0
        %1943 = vmatpush1.bf16.xpose.msra.mxu0 0
        %1944 = vmatprep.subr.bf16.mxu0 0
        %1945 = vmatpush1.bf16.xpose.msra.mxu0 0
        %1946 = vmatprep.subr.bf16.mxu0 0
        %1947 = vmatpush1.bf16.xpose.msra.mxu0 0
        %1948 = vmatprep.subr.bf16.mxu0 0
        %1949 = vmatpush1.bf16.xpose.msra.mxu0 0
        %1950 = vmatprep.subr.bf16.mxu0 0
        %1951 = vmatpush1.bf16.xpose.msra.mxu0 0
        %1952 = vmatprep.subr.bf16.mxu0 0
        %1953 = vmatpush1.bf16.xpose.msra.mxu0 0
        %1954 = vmatprep.subr.bf16.mxu0 0
        %1955 = vmatpush1.bf16.xpose.msra.mxu0 0
        %1956 = vmatprep.subr.bf16.mxu0 0
        %1957 = vmatpush1.bf16.xpose.msra.mxu0 0
        %1958 = vmatprep.subr.bf16.mxu0 0
        %1959 = vmatpush1.bf16.xpose.msra.mxu0 0
        %1960 = vmatprep.subr.bf16.mxu0 0
        %1961 = vmatpush1.bf16.xpose.msra.mxu0 0
        %1962 = vmatprep.mubr.bf16.mxu0 0
        %1963 = vmatmul.mubr.bf16.gmra.mrb[0].mxu0 %v1919
        %v1964 = vpop.f32.mrb[0].mxu0
        %v1965 = vadd.f32 0.0, %v1964
        %v1966 = vpop.f32.mrb[0].mxu0
        %v1967 = vpop.f32.mrb[0].mxu0
        %v1968 = vadd.f32 0.0, %v1967
        %v1969 = vpop.f32.mrb[0].mxu0
        %1970 = vmatprep.mubr.bf16.mxu0 0
        %1971 = vmatmul.mubr.bf16.gmra.mrb[0].mxu0 %v1922
        %v1972 = vpop.f32.mrb[0].mxu0
        %v1973 = vadd.f32 0.0, %v1972
        %v1974 = vpop.f32.mrb[0].mxu0
        %v1975 = vpop.f32.mrb[0].mxu0
        %v1976 = vpop.f32.mrb[0].mxu0
        %1977 = vdwg.mxu0
        %v1978 = vlaneseq
        %v1979 = vand.u32 %v1978, 127
        %vm1980 = vcmp.lt.s32.totalorder %v1979, 17
        %v1981 = vsel %vm1980, 1, 0
        %vm1982 = vcmp.eq.s32.totalorder %v1981, 1
        %v1983 = vsel %vm1982, %v1785, -3.4028235e+38
        %v1984 = vsel %vm1982, %v1788, -3.4028235e+38
        %v1985 = vsel %vm1982, %v1793, -3.4028235e+38
        %v1986 = vsel %vm1982, %v1845, -3.4028235e+38
        %v1987 = vsel %vm1982, %v1848, -3.4028235e+38
        %v1988 = vsel %vm1982, %v1853, -3.4028235e+38
        %v1989 = vsel %vm1982, %v1905, -3.4028235e+38
        %v1990 = vsel %vm1982, %v1908, -3.4028235e+38
        %v1991 = vsel %vm1982, %v1913, -3.4028235e+38
        %v1992 = vsel %vm1982, %v1965, -3.4028235e+38
        %v1993 = vsel %vm1982, %v1968, -3.4028235e+38
        %v1994 = vsel %vm1982, %v1973, -3.4028235e+38
        %vm1995 = vcmask 195584
        %v1996 = vsel %vm1995, %v1983, -inf
        %1997 = vmax.xlane.f32.xlu0 %v1996
        %v1998 = vpop.xlane.xlu0 %1997
        %v1999 = vsel %vm1995, %v1984, -inf
        %2000 = vmax.xlane.f32.xlu0 %v1999
        %v2001 = vpop.xlane.xlu0 %2000
        %v2002 = vsel %vm1995, %v1985, -inf
        %2003 = vmax.xlane.f32.xlu0 %v2002
        %v2004 = vpop.xlane.xlu0 %2003
        %v2005 = vsel %vm1995, %v1986, -inf
        %2006 = vmax.xlane.f32.xlu0 %v2005
        %v2007 = vpop.xlane.xlu0 %2006
        %v2008 = vsel %vm1995, %v1987, -inf
        %2009 = vmax.xlane.f32.xlu0 %v2008
        %v2010 = vpop.xlane.xlu0 %2009
        %v2011 = vsel %vm1995, %v1988, -inf
        %2012 = vmax.xlane.f32.xlu0 %v2011
        %v2013 = vpop.xlane.xlu0 %2012
        %v2014 = vsel %vm1995, %v1989, -inf
        %2015 = vmax.xlane.f32.xlu0 %v2014
        %v2016 = vpop.xlane.xlu0 %2015
        %v2017 = vsel %vm1995, %v1990, -inf
        %2018 = vmax.xlane.f32.xlu0 %v2017
        %v2019 = vpop.xlane.xlu0 %2018
        %v2020 = vsel %vm1995, %v1991, -inf
        %2021 = vmax.xlane.f32.xlu0 %v2020
        %v2022 = vpop.xlane.xlu0 %2021
        %v2023 = vsel %vm1995, %v1992, -inf
        %2024 = vmax.xlane.f32.xlu0 %v2023
        %v2025 = vpop.xlane.xlu0 %2024
        %v2026 = vsel %vm1995, %v1993, -inf
        %2027 = vmax.xlane.f32.xlu0 %v2026
        %v2028 = vpop.xlane.xlu0 %2027
        %v2029 = vsel %vm1995, %v1994, -inf
        %2030 = vmax.xlane.f32.xlu0 %v2029
        %v2031 = vpop.xlane.xlu0 %2030
        %v2032 = vsub.f32 %v1983, %v1998
        %v2033 = vsub.f32 %v1984, %v2001
        %v2034 = vsub.f32 %v1985, %v2004
        %v2035 = vsub.f32 %v1986, %v2007
        %v2036 = vsub.f32 %v1987, %v2010
        %v2037 = vsub.f32 %v1988, %v2013
        %v2038 = vsub.f32 %v1989, %v2016
        %v2039 = vsub.f32 %v1990, %v2019
        %v2040 = vsub.f32 %v1991, %v2022
        %v2041 = vsub.f32 %v1992, %v2025
        %v2042 = vsub.f32 %v1993, %v2028
        %v2043 = vsub.f32 %v1994, %v2031
        %v2044 = vmul.f32 %v2032, 1.442695
        %v2045 = vpow.pop %v2044
        %v2046 = vmul.f32 %v2033, 1.442695
        %v2047 = vpow.pop %v2046
        %v2048 = vmul.f32 %v2034, 1.442695
        %v2049 = vpow.pop %v2048
        %v2050 = vmul.f32 %v2035, 1.442695
        %v2051 = vpow.pop %v2050
        %v2052 = vmul.f32 %v2036, 1.442695
        %v2053 = vpow.pop %v2052
        %v2054 = vmul.f32 %v2037, 1.442695
        %v2055 = vpow.pop %v2054
        %v2056 = vmul.f32 %v2038, 1.442695
        %v2057 = vpow.pop %v2056
        %v2058 = vmul.f32 %v2039, 1.442695
        %v2059 = vpow.pop %v2058
        %v2060 = vmul.f32 %v2040, 1.442695
        %v2061 = vpow.pop %v2060
        %v2062 = vmul.f32 %v2041, 1.442695
        %v2063 = vpow.pop %v2062
        %v2064 = vmul.f32 %v2042, 1.442695
        %v2065 = vpow.pop %v2064
        %v2066 = vmul.f32 %v2043, 1.442695
        %v2067 = vpow.pop %v2066
        %v2068 = vsel %vm1995, %v2045, 0.0
        %2069 = vadd.xlane.f32.xlu0 %v2068
        %v2070 = vpop.xlane.xlu0 %2069
        %v2071 = vsel %vm1995, %v2047, 0.0
        %2072 = vadd.xlane.f32.xlu0 %v2071
        %v2073 = vpop.xlane.xlu0 %2072
        %v2074 = vsel %vm1995, %v2049, 0.0
        %2075 = vadd.xlane.f32.xlu0 %v2074
        %v2076 = vpop.xlane.xlu0 %2075
        %v2077 = vsel %vm1995, %v2051, 0.0
        %2078 = vadd.xlane.f32.xlu0 %v2077
        %v2079 = vpop.xlane.xlu0 %2078
        %v2080 = vsel %vm1995, %v2053, 0.0
        %2081 = vadd.xlane.f32.xlu0 %v2080
        %v2082 = vpop.xlane.xlu0 %2081
        %v2083 = vsel %vm1995, %v2055, 0.0
        %2084 = vadd.xlane.f32.xlu0 %v2083
        %v2085 = vpop.xlane.xlu0 %2084
        %v2086 = vsel %vm1995, %v2057, 0.0
        %2087 = vadd.xlane.f32.xlu0 %v2086
        %v2088 = vpop.xlane.xlu0 %2087
        %v2089 = vsel %vm1995, %v2059, 0.0
        %2090 = vadd.xlane.f32.xlu0 %v2089
        %v2091 = vpop.xlane.xlu0 %2090
        %v2092 = vsel %vm1995, %v2061, 0.0
        %2093 = vadd.xlane.f32.xlu0 %v2092
        %v2094 = vpop.xlane.xlu0 %2093
        %v2095 = vsel %vm1995, %v2063, 0.0
        %2096 = vadd.xlane.f32.xlu0 %v2095
        %v2097 = vpop.xlane.xlu0 %2096
        %v2098 = vsel %vm1995, %v2065, 0.0
        %2099 = vadd.xlane.f32.xlu0 %v2098
        %v2100 = vpop.xlane.xlu0 %2099
        %v2101 = vsel %vm1995, %v2067, 0.0
        %2102 = vadd.xlane.f32.xlu0 %v2101
        %v2103 = vpop.xlane.xlu0 %2102
        %v2104 = vrcp.pop %v2070
        %v2105 = vrcp.pop %v2073
        %v2106 = vrcp.pop %v2076
        %v2107 = vrcp.pop %v2079
        %v2108 = vrcp.pop %v2082
        %v2109 = vrcp.pop %v2085
        %v2110 = vrcp.pop %v2088
        %v2111 = vrcp.pop %v2091
        %v2112 = vrcp.pop %v2094
        %v2113 = vrcp.pop %v2097
        %v2114 = vrcp.pop %v2100
        %v2115 = vrcp.pop %v2103
        %v2116 = vmul.f32 %v2045, %v2104
        %v2117 = vmul.f32 %v2047, %v2105
        %v2118 = vmul.f32 %v2049, %v2106
        %v2119 = vmul.f32 %v2051, %v2107
        %v2120 = vmul.f32 %v2053, %v2108
        %v2121 = vmul.f32 %v2055, %v2109
        %v2122 = vmul.f32 %v2057, %v2110
        %v2123 = vmul.f32 %v2059, %v2111
        %v2124 = vmul.f32 %v2061, %v2112
        %v2125 = vmul.f32 %v2063, %v2113
        %v2126 = vmul.f32 %v2065, %v2114
        %v2127 = vmul.f32 %v2067, %v2115
        %v2128 = vpack.c.bf16 %v2117, %v2116
        %v2129 = vpack.c.bf16 %v2118, %v2118
        %v2130 = vpack.c.bf16 %v2120, %v2119
        %v2131 = vpack.c.bf16 %v2121, %v2121
        %v2132 = vpack.c.bf16 %v2123, %v2122
        %v2133 = vpack.c.bf16 %v2124, %v2124
        %v2134 = vpack.c.bf16 %v2126, %v2125
        %v2135 = vpack.c.bf16 %v2127, %v2127
        %v2137 = vsel %vm1995, %v2128, 0
        %v2140 = vsel %vm1995, %v2129, 0
        %vm2142 = vcmask 1043456
        %v2144 = vsel %vm2142, %v1730, 0
        %2146 = vmatprep.subr.bf16.mxu0 0
        %2147 = vmatpush1.bf16.msra.mxu0 %v1729
        %2148 = vmatprep.subr.bf16.mxu0 0
        %2149 = vmatpush1.bf16.msra.mxu0 %v2144
        %2150 = vmatprep.subr.bf16.mxu0 0
        %2151 = vmatpush1.bf16.msra.mxu0 0
        %2152 = vmatprep.subr.bf16.mxu0 0
        %2153 = vmatpush1.bf16.msra.mxu0 0
        %2154 = vmatprep.subr.bf16.mxu0 0
        %2155 = vmatpush1.bf16.msra.mxu0 0
        %2156 = vmatprep.subr.bf16.mxu0 0
        %2157 = vmatpush1.bf16.msra.mxu0 0
        %2158 = vmatprep.subr.bf16.mxu0 0
        %2159 = vmatpush1.bf16.msra.mxu0 0
        %2160 = vmatprep.subr.bf16.mxu0 0
        %2161 = vmatpush1.bf16.msra.mxu0 0
        %2162 = vmatprep.subr.bf16.mxu0 0
        %2163 = vmatpush1.bf16.msra.mxu0 0
        %2164 = vmatprep.subr.bf16.mxu0 0
        %2165 = vmatpush1.bf16.msra.mxu0 0
        %2166 = vmatprep.subr.bf16.mxu0 0
        %2167 = vmatpush1.bf16.msra.mxu0 0
        %2168 = vmatprep.subr.bf16.mxu0 0
        %2169 = vmatpush1.bf16.msra.mxu0 0
        %2170 = vmatprep.subr.bf16.mxu0 0
        %2171 = vmatpush1.bf16.msra.mxu0 0
        %2172 = vmatprep.subr.bf16.mxu0 0
        %2173 = vmatpush1.bf16.msra.mxu0 0
        %2174 = vmatprep.subr.bf16.mxu0 0
        %2175 = vmatpush1.bf16.msra.mxu0 0
        %2176 = vmatprep.subr.bf16.mxu0 0
        %2177 = vmatpush1.bf16.msra.mxu0 0
        %2178 = vmatprep.mubr.bf16.mxu0 0
        %2179 = vmatmul.mubr.bf16.gmra.mrb[0].mxu0 %v2137
        %v2180 = vpop.f32.mrb[0].mxu0
        %v2181 = vadd.f32 0.0, %v2180
        %v2182 = vpop.f32.mrb[0].mxu0
        %v2183 = vpop.f32.mrb[0].mxu0
        %v2184 = vadd.f32 0.0, %v2183
        %v2185 = vpop.f32.mrb[0].mxu0
        %2186 = vmatprep.mubr.bf16.mxu0 0
        %2187 = vmatmul.mubr.bf16.gmra.mrb[0].mxu0 %v2140
        %v2188 = vpop.f32.mrb[0].mxu0
        %v2189 = vadd.f32 0.0, %v2188
        %v2190 = vpop.f32.mrb[0].mxu0
        %v2191 = vpop.f32.mrb[0].mxu0
        %v2192 = vpop.f32.mrb[0].mxu0
        %2193 = vdwg.mxu0
        %v2195 = vsel %vm1995, %v2130, 0
        %v2198 = vsel %vm1995, %v2131, 0
        %v2201 = vsel %vm2142, %v1732, 0
        %2203 = vmatprep.subr.bf16.mxu0 0
        %2204 = vmatpush1.bf16.msra.mxu0 %v1731
        %2205 = vmatprep.subr.bf16.mxu0 0
        %2206 = vmatpush1.bf16.msra.mxu0 %v2201
        %2207 = vmatprep.subr.bf16.mxu0 0
        %2208 = vmatpush1.bf16.msra.mxu0 0
        %2209 = vmatprep.subr.bf16.mxu0 0
        %2210 = vmatpush1.bf16.msra.mxu0 0
        %2211 = vmatprep.subr.bf16.mxu0 0
        %2212 = vmatpush1.bf16.msra.mxu0 0
        %2213 = vmatprep.subr.bf16.mxu0 0
        %2214 = vmatpush1.bf16.msra.mxu0 0
        %2215 = vmatprep.subr.bf16.mxu0 0
        %2216 = vmatpush1.bf16.msra.mxu0 0
        %2217 = vmatprep.subr.bf16.mxu0 0
        %2218 = vmatpush1.bf16.msra.mxu0 0
        %2219 = vmatprep.subr.bf16.mxu0 0
        %2220 = vmatpush1.bf16.msra.mxu0 0
        %2221 = vmatprep.subr.bf16.mxu0 0
        %2222 = vmatpush1.bf16.msra.mxu0 0
        %2223 = vmatprep.subr.bf16.mxu0 0
        %2224 = vmatpush1.bf16.msra.mxu0 0
        %2225 = vmatprep.subr.bf16.mxu0 0
        %2226 = vmatpush1.bf16.msra.mxu0 0
        %2227 = vmatprep.subr.bf16.mxu0 0
        %2228 = vmatpush1.bf16.msra.mxu0 0
        %2229 = vmatprep.subr.bf16.mxu0 0
        %2230 = vmatpush1.bf16.msra.mxu0 0
        %2231 = vmatprep.subr.bf16.mxu0 0
        %2232 = vmatpush1.bf16.msra.mxu0 0
        %2233 = vmatprep.subr.bf16.mxu0 0
        %2234 = vmatpush1.bf16.msra.mxu0 0
        %2235 = vmatprep.mubr.bf16.mxu0 0
        %2236 = vmatmul.mubr.bf16.gmra.mrb[0].mxu0 %v2195
        %v2237 = vpop.f32.mrb[0].mxu0
        %v2238 = vadd.f32 0.0, %v2237
        %v2239 = vpop.f32.mrb[0].mxu0
        %v2240 = vpop.f32.mrb[0].mxu0
        %v2241 = vadd.f32 0.0, %v2240
        %v2242 = vpop.f32.mrb[0].mxu0
        %2243 = vmatprep.mubr.bf16.mxu0 0
        %2244 = vmatmul.mubr.bf16.gmra.mrb[0].mxu0 %v2198
        %v2245 = vpop.f32.mrb[0].mxu0
        %v2246 = vadd.f32 0.0, %v2245
        %v2247 = vpop.f32.mrb[0].mxu0
        %v2248 = vpop.f32.mrb[0].mxu0
        %v2249 = vpop.f32.mrb[0].mxu0
        %2250 = vdwg.mxu0
        %v2252 = vsel %vm1995, %v2132, 0
        %v2255 = vsel %vm1995, %v2133, 0
        %v2258 = vsel %vm2142, %v1734, 0
        %2260 = vmatprep.subr.bf16.mxu0 0
        %2261 = vmatpush1.bf16.msra.mxu0 %v1733
        %2262 = vmatprep.subr.bf16.mxu0 0
        %2263 = vmatpush1.bf16.msra.mxu0 %v2258
        %2264 = vmatprep.subr.bf16.mxu0 0
        %2265 = vmatpush1.bf16.msra.mxu0 0
        %2266 = vmatprep.subr.bf16.mxu0 0
        %2267 = vmatpush1.bf16.msra.mxu0 0
        %2268 = vmatprep.subr.bf16.mxu0 0
        %2269 = vmatpush1.bf16.msra.mxu0 0
        %2270 = vmatprep.subr.bf16.mxu0 0
        %2271 = vmatpush1.bf16.msra.mxu0 0
        %2272 = vmatprep.subr.bf16.mxu0 0
        %2273 = vmatpush1.bf16.msra.mxu0 0
        %2274 = vmatprep.subr.bf16.mxu0 0
        %2275 = vmatpush1.bf16.msra.mxu0 0
        %2276 = vmatprep.subr.bf16.mxu0 0
        %2277 = vmatpush1.bf16.msra.mxu0 0
        %2278 = vmatprep.subr.bf16.mxu0 0
        %2279 = vmatpush1.bf16.msra.mxu0 0
        %2280 = vmatprep.subr.bf16.mxu0 0
        %2281 = vmatpush1.bf16.msra.mxu0 0
        %2282 = vmatprep.subr.bf16.mxu0 0
        %2283 = vmatpush1.bf16.msra.mxu0 0
        %2284 = vmatprep.subr.bf16.mxu0 0
        %2285 = vmatpush1.bf16.msra.mxu0 0
        %2286 = vmatprep.subr.bf16.mxu0 0
        %2287 = vmatpush1.bf16.msra.mxu0 0
        %2288 = vmatprep.subr.bf16.mxu0 0
        %2289 = vmatpush1.bf16.msra.mxu0 0
        %2290 = vmatprep.subr.bf16.mxu0 0
        %2291 = vmatpush1.bf16.msra.mxu0 0
        %2292 = vmatprep.mubr.bf16.mxu0 0
        %2293 = vmatmul.mubr.bf16.gmra.mrb[0].mxu0 %v2252
        %v2294 = vpop.f32.mrb[0].mxu0
        %v2295 = vadd.f32 0.0, %v2294
        %v2296 = vpop.f32.mrb[0].mxu0
        %v2297 = vpop.f32.mrb[0].mxu0
        %v2298 = vadd.f32 0.0, %v2297
        %v2299 = vpop.f32.mrb[0].mxu0
        %2300 = vmatprep.mubr.bf16.mxu0 0
        %2301 = vmatmul.mubr.bf16.gmra.mrb[0].mxu0 %v2255
        %v2302 = vpop.f32.mrb[0].mxu0
        %v2303 = vadd.f32 0.0, %v2302
        %v2304 = vpop.f32.mrb[0].mxu0
        %v2305 = vpop.f32.mrb[0].mxu0
        %v2306 = vpop.f32.mrb[0].mxu0
        %2307 = vdwg.mxu0
        %v2309 = vsel %vm1995, %v2134, 0
        %v2312 = vsel %vm1995, %v2135, 0
        %v2315 = vsel %vm2142, %v1736, 0
        %2317 = vmatprep.subr.bf16.mxu0 0
        %2318 = vmatpush1.bf16.msra.mxu0 %v1735
        %2319 = vmatprep.subr.bf16.mxu0 0
        %2320 = vmatpush1.bf16.msra.mxu0 %v2315
        %2321 = vmatprep.subr.bf16.mxu0 0
        %2322 = vmatpush1.bf16.msra.mxu0 0
        %2323 = vmatprep.subr.bf16.mxu0 0
        %2324 = vmatpush1.bf16.msra.mxu0 0
        %2325 = vmatprep.subr.bf16.mxu0 0
        %2326 = vmatpush1.bf16.msra.mxu0 0
        %2327 = vmatprep.subr.bf16.mxu0 0
        %2328 = vmatpush1.bf16.msra.mxu0 0
        %2329 = vmatprep.subr.bf16.mxu0 0
        %2330 = vmatpush1.bf16.msra.mxu0 0
        %2331 = vmatprep.subr.bf16.mxu0 0
        %2332 = vmatpush1.bf16.msra.mxu0 0
        %2333 = vmatprep.subr.bf16.mxu0 0
        %2334 = vmatpush1.bf16.msra.mxu0 0
        %2335 = vmatprep.subr.bf16.mxu0 0
        %2336 = vmatpush1.bf16.msra.mxu0 0
        %2337 = vmatprep.subr.bf16.mxu0 0
        %2338 = vmatpush1.bf16.msra.mxu0 0
        %2339 = vmatprep.subr.bf16.mxu0 0
        %2340 = vmatpush1.bf16.msra.mxu0 0
        %2341 = vmatprep.subr.bf16.mxu0 0
        %2342 = vmatpush1.bf16.msra.mxu0 0
        %2343 = vmatprep.subr.bf16.mxu0 0
        %2344 = vmatpush1.bf16.msra.mxu0 0
        %2345 = vmatprep.subr.bf16.mxu0 0
        %2346 = vmatpush1.bf16.msra.mxu0 0
        %2347 = vmatprep.subr.bf16.mxu0 0
        %2348 = vmatpush1.bf16.msra.mxu0 0
        %2349 = vmatprep.mubr.bf16.mxu0 0
        %2350 = vmatmul.mubr.bf16.gmra.mrb[0].mxu0 %v2309
        %v2351 = vpop.f32.mrb[0].mxu0
        %v2352 = vadd.f32 0.0, %v2351
        %v2353 = vpop.f32.mrb[0].mxu0
        %v2354 = vpop.f32.mrb[0].mxu0
        %v2355 = vadd.f32 0.0, %v2354
        %v2356 = vpop.f32.mrb[0].mxu0
        %2357 = vmatprep.mubr.bf16.mxu0 0
        %2358 = vmatmul.mubr.bf16.gmra.mrb[0].mxu0 %v2312
        %v2359 = vpop.f32.mrb[0].mxu0
        %v2360 = vadd.f32 0.0, %v2359
        %v2361 = vpop.f32.mrb[0].mxu0
        %v2362 = vpop.f32.mrb[0].mxu0
        %v2363 = vpop.f32.mrb[0].mxu0
        %2364 = vdwg.mxu0
        %v2365 = vpack.c.bf16 %v2184, %v2181
        %v2366 = vpack.c.bf16 %v2189, %v2189
        %v2367 = vpack.c.bf16 %v2241, %v2238
        %v2368 = vpack.c.bf16 %v2246, %v2246
        %v2369 = vpack.c.bf16 %v2298, %v2295
        %v2370 = vpack.c.bf16 %v2303, %v2303
        %v2371 = vpack.c.bf16 %v2355, %v2352
        %v2372 = vpack.c.bf16 %v2360, %v2360
        %v2373 = vld [vmem:[%s737] sm:$0xf]
        %v2374 = vld [vmem:[%s737 + $0x4] sm:$0xf]
        %v2375 = vld [vmem:[%s737 + $0x8] sm:$0xf]
        %v2376 = vld [vmem:[%s737 + $0xc] sm:$0xf]
        %v2378 = vsel %vm1737, %v2365, 0
        %v2381 = vsel %vm1737, %v2366, 0
        %v2384 = vsel %vm2142, %v2373, 0
        %2386 = vmatprep.subr.bf16.mxu0 0
        %2387 = vmatpush1.bf16.msra.mxu0 %v2384
        %2388 = vmatprep.subr.bf16.mxu0 0
        %2389 = vmatpush1.bf16.msra.mxu0 0
        %2390 = vmatprep.subr.bf16.mxu0 0
        %2391 = vmatpush1.bf16.msra.mxu0 0
        %2392 = vmatprep.subr.bf16.mxu0 0
        %2393 = vmatpush1.bf16.msra.mxu0 0
        %2394 = vmatprep.subr.bf16.mxu0 0
        %2395 = vmatpush1.bf16.msra.mxu0 0
        %2396 = vmatprep.subr.bf16.mxu0 0
        %2397 = vmatpush1.bf16.msra.mxu0 0
        %2398 = vmatprep.subr.bf16.mxu0 0
        %2399 = vmatpush1.bf16.msra.mxu0 0
        %2400 = vmatprep.subr.bf16.mxu0 0
        %2401 = vmatpush1.bf16.msra.mxu0 0
        %2402 = vmatprep.subr.bf16.mxu0 0
        %2403 = vmatpush1.bf16.msra.mxu0 0
        %2404 = vmatprep.subr.bf16.mxu0 0
        %2405 = vmatpush1.bf16.msra.mxu0 0
        %2406 = vmatprep.subr.bf16.mxu0 0
        %2407 = vmatpush1.bf16.msra.mxu0 0
        %2408 = vmatprep.subr.bf16.mxu0 0
        %2409 = vmatpush1.bf16.msra.mxu0 0
        %2410 = vmatprep.subr.bf16.mxu0 0
        %2411 = vmatpush1.bf16.msra.mxu0 0
        %2412 = vmatprep.subr.bf16.mxu0 0
        %2413 = vmatpush1.bf16.msra.mxu0 0
        %2414 = vmatprep.subr.bf16.mxu0 0
        %2415 = vmatpush1.bf16.msra.mxu0 0
        %2416 = vmatprep.subr.bf16.mxu0 0
        %2417 = vmatpush1.bf16.msra.mxu0 0
        %2418 = vmatprep.mubr.bf16.mxu0 0
        %2419 = vmatmul.mubr.bf16.gmra.mrb[0].mxu0 %v2378
        %v2420 = vpop.f32.mrb[0].mxu0
        %v2421 = vadd.f32 0.0, %v2420
        %v2422 = vpop.f32.mrb[0].mxu0
        %v2423 = vpop.f32.mrb[0].mxu0
        %v2424 = vadd.f32 0.0, %v2423
        %v2425 = vpop.f32.mrb[0].mxu0
        %2426 = vmatprep.mubr.bf16.mxu0 0
        %2427 = vmatmul.mubr.bf16.gmra.mrb[0].mxu0 %v2381
        %v2428 = vpop.f32.mrb[0].mxu0
        %v2429 = vadd.f32 0.0, %v2428
        %v2430 = vpop.f32.mrb[0].mxu0
        %v2431 = vpop.f32.mrb[0].mxu0
        %v2432 = vpop.f32.mrb[0].mxu0
        %2433 = vdwg.mxu0
        %v2435 = vsel %vm1737, %v2367, 0
        %v2438 = vsel %vm1737, %v2368, 0
        %v2441 = vsel %vm2142, %v2374, 0
        %2443 = vmatprep.subr.bf16.mxu0 0
        %2444 = vmatpush1.bf16.msra.mxu0 %v2441
        %2445 = vmatprep.subr.bf16.mxu0 0
        %2446 = vmatpush1.bf16.msra.mxu0 0
        %2447 = vmatprep.subr.bf16.mxu0 0
        %2448 = vmatpush1.bf16.msra.mxu0 0
        %2449 = vmatprep.subr.bf16.mxu0 0
        %2450 = vmatpush1.bf16.msra.mxu0 0
        %2451 = vmatprep.subr.bf16.mxu0 0
        %2452 = vmatpush1.bf16.msra.mxu0 0
        %2453 = vmatprep.subr.bf16.mxu0 0
        %2454 = vmatpush1.bf16.msra.mxu0 0
        %2455 = vmatprep.subr.bf16.mxu0 0
        %2456 = vmatpush1.bf16.msra.mxu0 0
        %2457 = vmatprep.subr.bf16.mxu0 0
        %2458 = vmatpush1.bf16.msra.mxu0 0
        %2459 = vmatprep.subr.bf16.mxu0 0
        %2460 = vmatpush1.bf16.msra.mxu0 0
        %2461 = vmatprep.subr.bf16.mxu0 0
        %2462 = vmatpush1.bf16.msra.mxu0 0
        %2463 = vmatprep.subr.bf16.mxu0 0
        %2464 = vmatpush1.bf16.msra.mxu0 0
        %2465 = vmatprep.subr.bf16.mxu0 0
        %2466 = vmatpush1.bf16.msra.mxu0 0
        %2467 = vmatprep.subr.bf16.mxu0 0
        %2468 = vmatpush1.bf16.msra.mxu0 0
        %2469 = vmatprep.subr.bf16.mxu0 0
        %2470 = vmatpush1.bf16.msra.mxu0 0
        %2471 = vmatprep.subr.bf16.mxu0 0
        %2472 = vmatpush1.bf16.msra.mxu0 0
        %2473 = vmatprep.subr.bf16.mxu0 0
        %2474 = vmatpush1.bf16.msra.mxu0 0
        %2475 = vmatprep.mubr.bf16.mxu0 0
        %2476 = vmatmul.mubr.bf16.gmra.mrb[0].mxu0 %v2435
        %v2477 = vpop.f32.mrb[0].mxu0
        %v2478 = vadd.f32 0.0, %v2477
        %v2479 = vpop.f32.mrb[0].mxu0
        %v2480 = vpop.f32.mrb[0].mxu0
        %v2481 = vadd.f32 0.0, %v2480
        %v2482 = vpop.f32.mrb[0].mxu0
        %2483 = vmatprep.mubr.bf16.mxu0 0
        %2484 = vmatmul.mubr.bf16.gmra.mrb[0].mxu0 %v2438
        %v2485 = vpop.f32.mrb[0].mxu0
        %v2486 = vadd.f32 0.0, %v2485
        %v2487 = vpop.f32.mrb[0].mxu0
        %v2488 = vpop.f32.mrb[0].mxu0
        %v2489 = vpop.f32.mrb[0].mxu0
        %2490 = vdwg.mxu0
        %v2492 = vsel %vm1737, %v2369, 0
        %v2495 = vsel %vm1737, %v2370, 0
        %v2498 = vsel %vm2142, %v2375, 0
        %2500 = vmatprep.subr.bf16.mxu0 0
        %2501 = vmatpush1.bf16.msra.mxu0 %v2498
        %2502 = vmatprep.subr.bf16.mxu0 0
        %2503 = vmatpush1.bf16.msra.mxu0 0
        %2504 = vmatprep.subr.bf16.mxu0 0
        %2505 = vmatpush1.bf16.msra.mxu0 0
        %2506 = vmatprep.subr.bf16.mxu0 0
        %2507 = vmatpush1.bf16.msra.mxu0 0
        %2508 = vmatprep.subr.bf16.mxu0 0
        %2509 = vmatpush1.bf16.msra.mxu0 0
        %2510 = vmatprep.subr.bf16.mxu0 0
        %2511 = vmatpush1.bf16.msra.mxu0 0
        %2512 = vmatprep.subr.bf16.mxu0 0
        %2513 = vmatpush1.bf16.msra.mxu0 0
        %2514 = vmatprep.subr.bf16.mxu0 0
        %2515 = vmatpush1.bf16.msra.mxu0 0
        %2516 = vmatprep.subr.bf16.mxu0 0
        %2517 = vmatpush1.bf16.msra.mxu0 0
        %2518 = vmatprep.subr.bf16.mxu0 0
        %2519 = vmatpush1.bf16.msra.mxu0 0
        %2520 = vmatprep.subr.bf16.mxu0 0
        %2521 = vmatpush1.bf16.msra.mxu0 0
        %2522 = vmatprep.subr.bf16.mxu0 0
        %2523 = vmatpush1.bf16.msra.mxu0 0
        %2524 = vmatprep.subr.bf16.mxu0 0
        %2525 = vmatpush1.bf16.msra.mxu0 0
        %2526 = vmatprep.subr.bf16.mxu0 0
        %2527 = vmatpush1.bf16.msra.mxu0 0
        %2528 = vmatprep.subr.bf16.mxu0 0
        %2529 = vmatpush1.bf16.msra.mxu0 0
        %2530 = vmatprep.subr.bf16.mxu0 0
        %2531 = vmatpush1.bf16.msra.mxu0 0
        %2532 = vmatprep.mubr.bf16.mxu0 0
        %2533 = vmatmul.mubr.bf16.gmra.mrb[0].mxu0 %v2492
        %v2534 = vpop.f32.mrb[0].mxu0
        %v2535 = vadd.f32 0.0, %v2534
        %v2536 = vpop.f32.mrb[0].mxu0
        %v2537 = vpop.f32.mrb[0].mxu0
        %v2538 = vadd.f32 0.0, %v2537
        %v2539 = vpop.f32.mrb[0].mxu0
        %2540 = vmatprep.mubr.bf16.mxu0 0
        %2541 = vmatmul.mubr.bf16.gmra.mrb[0].mxu0 %v2495
        %v2542 = vpop.f32.mrb[0].mxu0
        %v2543 = vadd.f32 0.0, %v2542
        %v2544 = vpop.f32.mrb[0].mxu0
        %v2545 = vpop.f32.mrb[0].mxu0
        %v2546 = vpop.f32.mrb[0].mxu0
        %2547 = vdwg.mxu0
        %v2549 = vsel %vm1737, %v2371, 0
        %v2552 = vsel %vm1737, %v2372, 0
        %v2555 = vsel %vm2142, %v2376, 0
        %2557 = vmatprep.subr.bf16.mxu0 0
        %2558 = vmatpush1.bf16.msra.mxu0 %v2555
        %2559 = vmatprep.subr.bf16.mxu0 0
        %2560 = vmatpush1.bf16.msra.mxu0 0
        %2561 = vmatprep.subr.bf16.mxu0 0
        %2562 = vmatpush1.bf16.msra.mxu0 0
        %2563 = vmatprep.subr.bf16.mxu0 0
        %2564 = vmatpush1.bf16.msra.mxu0 0
        %2565 = vmatprep.subr.bf16.mxu0 0
        %2566 = vmatpush1.bf16.msra.mxu0 0
        %2567 = vmatprep.subr.bf16.mxu0 0
        %2568 = vmatpush1.bf16.msra.mxu0 0
        %2569 = vmatprep.subr.bf16.mxu0 0
        %2570 = vmatpush1.bf16.msra.mxu0 0
        %2571 = vmatprep.subr.bf16.mxu0 0
        %2572 = vmatpush1.bf16.msra.mxu0 0
        %2573 = vmatprep.subr.bf16.mxu0 0
        %2574 = vmatpush1.bf16.msra.mxu0 0
        %2575 = vmatprep.subr.bf16.mxu0 0
        %2576 = vmatpush1.bf16.msra.mxu0 0
        %2577 = vmatprep.subr.bf16.mxu0 0
        %2578 = vmatpush1.bf16.msra.mxu0 0
        %2579 = vmatprep.subr.bf16.mxu0 0
        %2580 = vmatpush1.bf16.msra.mxu0 0
        %2581 = vmatprep.subr.bf16.mxu0 0
        %2582 = vmatpush1.bf16.msra.mxu0 0
        %2583 = vmatprep.subr.bf16.mxu0 0
        %2584 = vmatpush1.bf16.msra.mxu0 0
        %2585 = vmatprep.subr.bf16.mxu0 0
        %2586 = vmatpush1.bf16.msra.mxu0 0
        %2587 = vmatprep.subr.bf16.mxu0 0
        %2588 = vmatpush1.bf16.msra.mxu0 0
        %2589 = vmatprep.mubr.bf16.mxu0 0
        %2590 = vmatmul.mubr.bf16.gmra.mrb[0].mxu0 %v2549
        %v2591 = vpop.f32.mrb[0].mxu0
        %v2592 = vadd.f32 0.0, %v2591
        %v2593 = vpop.f32.mrb[0].mxu0
        %v2594 = vpop.f32.mrb[0].mxu0
        %v2595 = vadd.f32 0.0, %v2594
        %v2596 = vpop.f32.mrb[0].mxu0
        %2597 = vmatprep.mubr.bf16.mxu0 0
        %2598 = vmatmul.mubr.bf16.gmra.mrb[0].mxu0 %v2552
        %v2599 = vpop.f32.mrb[0].mxu0
        %v2600 = vadd.f32 0.0, %v2599
        %v2601 = vpop.f32.mrb[0].mxu0
        %v2602 = vpop.f32.mrb[0].mxu0
        %v2603 = vpop.f32.mrb[0].mxu0
        %2604 = vdwg.mxu0
        %v2605 = vsel %vm878, %v2421, 0.0
        %v2606 = vsel %vm878, %v2478, 0.0
        %v2607 = vadd.f32 %v2605, %v2606
        %v2608 = vsel %vm878, %v2535, 0.0
        %v2609 = vadd.f32 %v2607, %v2608
        %v2610 = vsel %vm878, %v2592, 0.0
        %v2611 = vadd.f32 %v2609, %v2610
        %v2612 = vsel %vm878, %v2424, 0.0
        %v2613 = vsel %vm878, %v2481, 0.0
        %v2614 = vadd.f32 %v2612, %v2613
        %v2615 = vsel %vm878, %v2538, 0.0
        %v2616 = vadd.f32 %v2614, %v2615
        %v2617 = vsel %vm878, %v2595, 0.0
        %v2618 = vadd.f32 %v2616, %v2617
        %v2619 = vsel %vm878, %v2429, 0.0
        %v2620 = vsel %vm878, %v2486, 0.0
        %v2621 = vadd.f32 %v2619, %v2620
        %v2622 = vsel %vm878, %v2543, 0.0
        %v2623 = vadd.f32 %v2621, %v2622
        %v2624 = vsel %vm878, %v2600, 0.0
        %v2625 = vadd.f32 %v2623, %v2624
        %v2626 = vadd.f32 %v873, %v2611
        %v2627 = vadd.f32 %v874, %v2618
        %v2628 = vadd.f32 %v875, %v2625
        %v2629 = vld [vmem:[%s740] sm:$0x1]
        %v2631 = vlaneseq
        %v2632 = vshrl.u32 %v2631, 7
        %v2633 = vsub.s32 0, %v2632
        %v2634 = vrot.slane %v2629, %v2633
        %v2636 = vadd.f32 %v2626, %v2634
        %v2637 = vadd.f32 %v2627, %v2634
        %v2638 = vadd.f32 %v2628, %v2634
        %v2639 = vld [vmem:[%s743] sm:$0x1]
        %v2640 = vld [vmem:[%s746] sm:$0x1]
        %v2641 = vsel %vm878, %v2636, 0.0
        %2642 = vadd.xlane.f32.xlu0 %v2641
        %v2643 = vpop.xlane.xlu0 %2642
        %v2644 = vsel %vm878, %v2637, 0.0
        %2645 = vadd.xlane.f32.xlu0 %v2644
        %v2646 = vpop.xlane.xlu0 %2645
        %v2647 = vsel %vm878, %v2638, 0.0
        %2648 = vadd.xlane.f32.xlu0 %v2647
        %v2649 = vpop.xlane.xlu0 %2648
        %v2650 = vmul.f32 %v2643, %v888
        %v2651 = vmul.f32 %v2646, %v888
        %v2652 = vmul.f32 %v2649, %v888
        %v2653 = vsub.f32 %v2636, %v2650
        %v2654 = vsub.f32 %v2637, %v2651
        %v2655 = vsub.f32 %v2638, %v2652
        %v2656 = vmul.f32 %v2653, %v2653
        %v2657 = vmul.f32 %v2654, %v2654
        %v2658 = vmul.f32 %v2655, %v2655
        %v2659 = vsel %vm878, %v2656, 0.0
        %2660 = vadd.xlane.f32.xlu0 %v2659
        %v2661 = vpop.xlane.xlu0 %2660
        %v2662 = vsel %vm878, %v2657, 0.0
        %2663 = vadd.xlane.f32.xlu0 %v2662
        %v2664 = vpop.xlane.xlu0 %2663
        %v2665 = vsel %vm878, %v2658, 0.0
        %2666 = vadd.xlane.f32.xlu0 %v2665
        %v2667 = vpop.xlane.xlu0 %2666
        %v2668 = vmul.f32 %v2661, %v888
        %v2669 = vmul.f32 %v2664, %v888
        %v2670 = vmul.f32 %v2667, %v888
        %v2671 = vadd.f32 %v2668, 1e-05
        %v2672 = vadd.f32 %v2669, 1e-05
        %v2673 = vadd.f32 %v2670, 1e-05
        %v2674 = vrsqrt.pop %v2671
        %v2675 = vrsqrt.pop %v2672
        %v2676 = vrsqrt.pop %v2673
        %v2677 = vmul.f32 %v2653, %v2674
        %v2678 = vmul.f32 %v2654, %v2675
        %v2679 = vmul.f32 %v2655, %v2676
        %v2681 = vlaneseq
        %v2682 = vshrl.u32 %v2681, 7
        %v2683 = vsub.s32 0, %v2682
        %v2684 = vrot.slane %v2639, %v2683
        %v2686 = vmul.f32 %v2677, %v2684
        %v2687 = vmul.f32 %v2678, %v2684
        %v2688 = vmul.f32 %v2679, %v2684
        %v2690 = vlaneseq
        %v2691 = vshrl.u32 %v2690, 7
        %v2692 = vsub.s32 0, %v2691
        %v2693 = vrot.slane %v2640, %v2692
        %v2695 = vadd.f32 %v2686, %v2693
        %v2696 = vadd.f32 %v2687, %v2693
        %v2697 = vadd.f32 %v2688, %v2693
        %v2698 = vpack.c.bf16 %v2696, %v2695
        %v2699 = vpack.c.bf16 %v2697, %v2697
        %v2700 = vld [vmem:[%s751] sm:$0xf]
        %v2701 = vld [vmem:[%s751 + $0x4] sm:$0xf]
        %v2702 = vld [vmem:[%s751 + $0x8] sm:$0xf]
        %v2703 = vld [vmem:[%s751 + $0xc] sm:$0xf]
        %v2704 = vld [vmem:[%s754] sm:$0x1]
        %v2706 = vlaneseq
        %v2707 = vshrl.u32 %v2706, 7
        %v2708 = vsub.s32 0, %v2707
        %v2709 = vrot.slane %v2704, %v2708
        %v2715 = vunpack.c.l.b16 %v2700
        %v2716 = vunpack.c.l.b16 %v2701
        %v2717 = vunpack.c.l.b16 %v2702
        %v2718 = vunpack.c.l.b16 %v2703
        %v2719 = vpack.c.b16 %v2716, %v2715
        %v2720 = vpack.c.b16 %v2718, %v2717
        %v2724 = vsel %vm878, %v2698, 0
        %v2727 = vsel %vm878, %v2699, 0
        %2729 = vmatprep.subr.bf16.mxu0 0
        %2730 = vmatpush1.bf16.msra.mxu0 %v2719
        %2731 = vmatprep.subr.bf16.mxu0 0
        %2732 = vmatpush1.bf16.msra.mxu0 %v2720
        %2733 = vmatprep.subr.bf16.mxu0 0
        %2734 = vmatpush1.bf16.msra.mxu0 0
        %2735 = vmatprep.subr.bf16.mxu0 0
        %2736 = vmatpush1.bf16.msra.mxu0 0
        %2737 = vmatprep.subr.bf16.mxu0 0
        %2738 = vmatpush1.bf16.msra.mxu0 0
        %2739 = vmatprep.subr.bf16.mxu0 0
        %2740 = vmatpush1.bf16.msra.mxu0 0
        %2741 = vmatprep.subr.bf16.mxu0 0
        %2742 = vmatpush1.bf16.msra.mxu0 0
        %2743 = vmatprep.subr.bf16.mxu0 0
        %2744 = vmatpush1.bf16.msra.mxu0 0
        %2745 = vmatprep.subr.bf16.mxu0 0
        %2746 = vmatpush1.bf16.msra.mxu0 0
        %2747 = vmatprep.subr.bf16.mxu0 0
        %2748 = vmatpush1.bf16.msra.mxu0 0
        %2749 = vmatprep.subr.bf16.mxu0 0
        %2750 = vmatpush1.bf16.msra.mxu0 0
        %2751 = vmatprep.subr.bf16.mxu0 0
        %2752 = vmatpush1.bf16.msra.mxu0 0
        %2753 = vmatprep.subr.bf16.mxu0 0
        %2754 = vmatpush1.bf16.msra.mxu0 0
        %2755 = vmatprep.subr.bf16.mxu0 0
        %2756 = vmatpush1.bf16.msra.mxu0 0
        %2757 = vmatprep.subr.bf16.mxu0 0
        %2758 = vmatpush1.bf16.msra.mxu0 0
        %2759 = vmatprep.subr.bf16.mxu0 0
        %2760 = vmatpush1.bf16.msra.mxu0 0
        %2761 = vmatprep.mubr.bf16.mxu0 0
        %2762 = vmatmul.mubr.bf16.gmra.mrb[0].mxu0 %v2724
        %v2763 = vpop.f32.mrb[0].mxu0
        %v2764 = vadd.f32 %v2709, %v2763
        %v2765 = vpop.f32.mrb[0].mxu0
        %v2766 = vpop.f32.mrb[0].mxu0
        %v2767 = vadd.f32 %v2709, %v2766
        %v2768 = vpop.f32.mrb[0].mxu0
        %2769 = vmatprep.mubr.bf16.mxu0 0
        %2770 = vmatmul.mubr.bf16.gmra.mrb[0].mxu0 %v2727
        %v2771 = vpop.f32.mrb[0].mxu0
        %v2772 = vadd.f32 %v2709, %v2771
        %v2773 = vpop.f32.mrb[0].mxu0
        %v2774 = vpop.f32.mrb[0].mxu0
        %v2775 = vpop.f32.mrb[0].mxu0
        %2776 = vdwg.mxu0
        %v2777 = vmul.f32 %v2764, 0.5
        %v2778 = vmul.f32 %v2767, 0.5
        %v2779 = vmul.f32 %v2772, 0.5
        %v2780 = vmul.f32 %v2764, 0.044715
        %v2781 = vmul.f32 %v2767, 0.044715
        %v2782 = vmul.f32 %v2772, 0.044715
        %v2783 = vmul.f32 %v2780, %v2764
        %v2784 = vmul.f32 %v2781, %v2767
        %v2785 = vmul.f32 %v2782, %v2772
        %v2786 = vmul.f32 %v2783, %v2764
        %v2787 = vmul.f32 %v2784, %v2767
        %v2788 = vmul.f32 %v2785, %v2772
        %v2789 = vadd.f32 %v2764, %v2786
        %v2790 = vadd.f32 %v2767, %v2787
        %v2791 = vadd.f32 %v2772, %v2788
        %v2792 = vmul.f32 %v2789, 0.7978846
        %v2793 = vmul.f32 %v2790, 0.7978846
        %v2794 = vmul.f32 %v2791, 0.7978846
        %v2795 = vtanh.pop %v2792
        %v2796 = vtanh.pop %v2793
        %v2797 = vtanh.pop %v2794
        %v2798 = vadd.f32 %v2795, 1.0
        %v2799 = vadd.f32 %v2796, 1.0
        %v2800 = vadd.f32 %v2797, 1.0
        %v2801 = vmul.f32 %v2777, %v2798
        %v2802 = vmul.f32 %v2778, %v2799
        %v2803 = vmul.f32 %v2779, %v2800
        %v2804 = vpack.c.bf16 %v2802, %v2801
        %v2805 = vpack.c.bf16 %v2803, %v2803
        %v2806 = vld [vmem:[%s759] sm:$0xf]
        %v2807 = vld [vmem:[%s759 + $0x4] sm:$0xf]
        %v2808 = vld [vmem:[%s759 + $0x8] sm:$0xf]
        %v2809 = vld [vmem:[%s759 + $0xc] sm:$0xf]
        %v2810 = vld [vmem:[%s759 + $0x10] sm:$0xf]
        %v2811 = vld [vmem:[%s759 + $0x14] sm:$0xf]
        %v2812 = vld [vmem:[%s759 + $0x18] sm:$0xf]
        %v2813 = vld [vmem:[%s759 + $0x1c] sm:$0xf]
        %v2814 = vld [vmem:[%s762] sm:$0x1]
        %v2816 = vlaneseq
        %v2817 = vshrl.u32 %v2816, 7
        %v2818 = vsub.s32 0, %v2817
        %v2819 = vrot.slane %v2814, %v2818
        %v2829 = vunpack.c.l.b16 %v2806
        %v2830 = vunpack.c.l.b16 %v2807
        %v2831 = vunpack.c.l.b16 %v2808
        %v2832 = vunpack.c.l.b16 %v2809
        %v2833 = vunpack.c.l.b16 %v2810
        %v2834 = vunpack.c.l.b16 %v2811
        %v2835 = vunpack.c.l.b16 %v2812
        %v2836 = vunpack.c.l.b16 %v2813
        %v2837 = vpack.c.b16 %v2830, %v2829
        %v2838 = vpack.c.b16 %v2832, %v2831
        %v2839 = vpack.c.b16 %v2834, %v2833
        %v2840 = vpack.c.b16 %v2836, %v2835
        %vm2845 = vcmask 523264
        %v2847 = vsel %vm2845, %v2804, 0
        %v2850 = vsel %vm2845, %v2805, 0
        %2852 = vmatprep.subr.bf16.mxu0 0
        %2853 = vmatpush1.bf16.msra.mxu0 %v2837
        %2854 = vmatprep.subr.bf16.mxu0 0
        %2855 = vmatpush1.bf16.msra.mxu0 %v2838
        %2856 = vmatprep.subr.bf16.mxu0 0
        %2857 = vmatpush1.bf16.msra.mxu0 %v2839
        %2858 = vmatprep.subr.bf16.mxu0 0
        %2859 = vmatpush1.bf16.msra.mxu0 %v2840
        %2860 = vmatprep.subr.bf16.mxu0 0
        %2861 = vmatpush1.bf16.msra.mxu0 0
        %2862 = vmatprep.subr.bf16.mxu0 0
        %2863 = vmatpush1.bf16.msra.mxu0 0
        %2864 = vmatprep.subr.bf16.mxu0 0
        %2865 = vmatpush1.bf16.msra.mxu0 0
        %2866 = vmatprep.subr.bf16.mxu0 0
        %2867 = vmatpush1.bf16.msra.mxu0 0
        %2868 = vmatprep.subr.bf16.mxu0 0
        %2869 = vmatpush1.bf16.msra.mxu0 0
        %2870 = vmatprep.subr.bf16.mxu0 0
        %2871 = vmatpush1.bf16.msra.mxu0 0
        %2872 = vmatprep.subr.bf16.mxu0 0
        %2873 = vmatpush1.bf16.msra.mxu0 0
        %2874 = vmatprep.subr.bf16.mxu0 0
        %2875 = vmatpush1.bf16.msra.mxu0 0
        %2876 = vmatprep.subr.bf16.mxu0 0
        %2877 = vmatpush1.bf16.msra.mxu0 0
        %2878 = vmatprep.subr.bf16.mxu0 0
        %2879 = vmatpush1.bf16.msra.mxu0 0
        %2880 = vmatprep.subr.bf16.mxu0 0
        %2881 = vmatpush1.bf16.msra.mxu0 0
        %2882 = vmatprep.subr.bf16.mxu0 0
        %2883 = vmatpush1.bf16.msra.mxu0 0
        %2884 = vmatprep.mubr.bf16.mxu0 0
        %2885 = vmatmul.mubr.bf16.gmra.mrb[0].mxu0 %v2847
        %v2886 = vpop.f32.mrb[0].mxu0
        %v2887 = vadd.f32 %v2819, %v2886
        %v2888 = vpop.f32.mrb[0].mxu0
        %v2889 = vpop.f32.mrb[0].mxu0
        %v2890 = vadd.f32 %v2819, %v2889
        %v2891 = vpop.f32.mrb[0].mxu0
        %2892 = vmatprep.mubr.bf16.mxu0 0
        %2893 = vmatmul.mubr.bf16.gmra.mrb[0].mxu0 %v2850
        %v2894 = vpop.f32.mrb[0].mxu0
        %v2895 = vadd.f32 %v2819, %v2894
        %v2896 = vpop.f32.mrb[0].mxu0
        %v2897 = vpop.f32.mrb[0].mxu0
        %v2898 = vpop.f32.mrb[0].mxu0
        %2899 = vdwg.mxu0
        %v2900 = vadd.f32 %v2636, %v2887
        %v2901 = vadd.f32 %v2637, %v2890
        %v2902 = vadd.f32 %v2638, %v2895
        %2903 = vst.msk [vmem:[#allocation2] sm:$0xff] %vm878, %v2900
        %2904 = vst.msk [vmem:[#allocation2 + $0x8] sm:$0xff] %vm878, %v2901
        %2905 = vst.msk [vmem:[#allocation2 + $0x10] sm:$0xff] %vm878, %v2902
        %p2906 = scmp.eq.s32.totalorder %s37, 1
        // Predicated region
        $region97: #{vit_forward.1} parent=91 // pred_check
          %p2907 = pneg %p2906
        $region98: #{vit_forward.1} parent=91 // pred_check_branch
          %2909 = sbr.rel (%p2907) target = $region100
        $region99: #{vit_forward.1} parent=91 // pred_region
          %v2910 = vld [vmem:[%s14] sm:$0x1]
          %v2911 = vld [vmem:[%s15] sm:$0x1]
          %vm2912 = vcmask 253952
          %v2913 = vsel %vm2912, %v2900, 0.0
          %2914 = vadd.xlane.f32.xlu0 %v2913
          %v2915 = vpop.xlane.xlu0 %2914
          %v2916 = vmul.f32 %v2915, %v888
          %v2917 = vsub.f32 %v2900, %v2916
          %v2918 = vmul.f32 %v2917, %v2917
          %v2919 = vsel %vm2912, %v2918, 0.0
          %2920 = vadd.xlane.f32.xlu0 %v2919
          %v2921 = vpop.xlane.xlu0 %2920
          %v2922 = vmul.f32 %v2921, %v888
          %v2923 = vadd.f32 %v2922, 1e-05
          %v2924 = vrsqrt.pop %v2923
          %v2925 = vmul.f32 %v2917, %v2924
          %v2926 = vmul.f32 %v2925, %v2910
          %v2927 = vadd.f32 %v2926, %v2911
          %v2928 = vpack.c.bf16 %v2927, %v2927
          %v2929 = vld [vmem:[%s16] sm:$0xf]
          %v2930 = vld [vmem:[%s16 + $0x4] sm:$0xf]
          %v2931 = vld [vmem:[%s16 + $0x8] sm:$0xf]
          %v2932 = vld [vmem:[%s16 + $0xc] sm:$0xf]
          %v2933 = vld [vmem:[%s17] sm:$0x1]
          %v2938 = vunpack.c.l.b16 %v2929
          %v2939 = vunpack.c.l.b16 %v2930
          %v2940 = vunpack.c.l.b16 %v2931
          %v2941 = vunpack.c.l.b16 %v2932
          %v2942 = vpack.c.b16 %v2939, %v2938
          %v2943 = vpack.c.b16 %v2941, %v2940
          %v2947 = vsel %vm878, %v2928, 0
          %2949 = vmatprep.subr.bf16.mxu0 0
          %2950 = vmatpush1.bf16.msra.mxu0 %v2942
          %2951 = vmatprep.subr.bf16.mxu0 0
          %2952 = vmatpush1.bf16.msra.mxu0 %v2943
          %2953 = vmatprep.subr.bf16.mxu0 0
          %2954 = vmatpush1.bf16.msra.mxu0 0
          %2955 = vmatprep.subr.bf16.mxu0 0
          %2956 = vmatpush1.bf16.msra.mxu0 0
          %2957 = vmatprep.subr.bf16.mxu0 0
          %2958 = vmatpush1.bf16.msra.mxu0 0
          %2959 = vmatprep.subr.bf16.mxu0 0
          %2960 = vmatpush1.bf16.msra.mxu0 0
          %2961 = vmatprep.subr.bf16.mxu0 0
          %2962 = vmatpush1.bf16.msra.mxu0 0
          %2963 = vmatprep.subr.bf16.mxu0 0
          %2964 = vmatpush1.bf16.msra.mxu0 0
          %2965 = vmatprep.subr.bf16.mxu0 0
          %2966 = vmatpush1.bf16.msra.mxu0 0
          %2967 = vmatprep.subr.bf16.mxu0 0
          %2968 = vmatpush1.bf16.msra.mxu0 0
          %2969 = vmatprep.subr.bf16.mxu0 0
          %2970 = vmatpush1.bf16.msra.mxu0 0
          %2971 = vmatprep.subr.bf16.mxu0 0
          %2972 = vmatpush1.bf16.msra.mxu0 0
          %2973 = vmatprep.subr.bf16.mxu0 0
          %2974 = vmatpush1.bf16.msra.mxu0 0
          %2975 = vmatprep.subr.bf16.mxu0 0
          %2976 = vmatpush1.bf16.msra.mxu0 0
          %2977 = vmatprep.subr.bf16.mxu0 0
          %2978 = vmatpush1.bf16.msra.mxu0 0
          %2979 = vmatprep.subr.bf16.mxu0 0
          %2980 = vmatpush1.bf16.msra.mxu0 0
          %2981 = vmatprep.mubr.bf16.mxu0 0
          %2982 = vmatmul.mubr.bf16.gmra.mrb[0].mxu0 %v2947
          %v2983 = vpop.f32.mrb[0].mxu0
          %v2984 = vadd.f32 %v2933, %v2983
          %v2985 = vpop.f32.mrb[0].mxu0
          %v2986 = vpop.f32.mrb[0].mxu0
          %v2987 = vpop.f32.mrb[0].mxu0
          %2988 = vdwg.mxu0
          %2989 = vst [vmem:[%s716] sm:$0x1] %v2984
        $region100: #{vit_forward.1} parent=91 // pred_fallthru
          _
        %s2990 = sand.u32 %s490, 1
        %s2991 = scalar_lea.sflag [#allocation4], %s2990
        %s2992 = sand.u32 %s490, 1
        %s2993 = scalar_lea.vmem [#allocation3], %s2992
        // Predicated region
        $region101: #{vit_forward.1} parent=91 // pred_check
          %p2994 = pneg %p500
        $region102: #{vit_forward.1} parent=91 // pred_check_branch
          %2996 = sbr.rel (%p2994) target = $region104
        $region103: #{vit_forward.1} parent=91 // pred_region
          %s2998 = ssub.s32 16, 16
          %2999 = vsyncadd %s2991, %s2998
          %s3000 = smul.addr %s36, 16
          %s3001 = scalar_lea.hbm %s18, %s3000
          %s3003 = sshll.u32 %s2993, 4
          %s3004 = int_to_ptr.vmem [resolvable:$true] %s3003
          %3006 = dma.vmem_to_hbm [thread:$0]  %s3004, 16, %s3001, %s2991
        $region104: #{vit_forward.1} parent=91 // pred_fallthru
          _
      $region92: #{vit_forward.1} parent=5 // pred_fallthru
        _
      %p3007 = scmp.le.s32.totalorder 2, %s27
      // Predicated region
      $region105: #{vit_forward.1} parent=5 // pred_check
        %p3008 = pneg %p3007
      $region106: #{vit_forward.1} parent=5 // pred_check_branch
        %3010 = sbr.rel (%p3008) target = $region108
      $region107: #{vit_forward.1} parent=5 // pred_region
        %s3011 = ssub.s32 %s27, 2
        // Predicated region
        $region109: #{vit_forward.1} parent=107 // pred_check
          %p3012 = pneg %p506
        $region110: #{vit_forward.1} parent=107 // pred_check_branch
          %3014 = sbr.rel (%p3012) target = $region112
        $region111: #{vit_forward.1} parent=107 // pred_region
          %s3015 = sand.u32 %s491, 1
          %s3016 = scalar_lea.sflag [#allocation4], %s3015
          %s3017 = sand.u32 %s491, 1
          %s3018 = scalar_lea.vmem [#allocation3], %s3017
          %3019 = dma.done %s3016, 16
        $region112: #{vit_forward.1} parent=107 // pred_fallthru
          _
      $region108: #{vit_forward.1} parent=5 // pred_fallthru
        _
    $region6: #{vit_forward.1} parent=1 // loop_footer
      %s31 = sadd.s32 1, %s27
    $region7: #{vit_forward.1} parent=1 // loop_footer_branch
      %26 = sbr.rel target = $region3
    $region8: #{vit_forward.1} parent=1 // loop_exit
      _
    %3020 = vsyncpa [#allocation4], 1
    %s3021 = scalar_lea.sflag [#allocation4], 1
    %3022 = vsyncpa %s3021, 1

</llo_original>
